<compile_context>
chip_gen: v7x
topology: tpu7x:2x2x1
jax: 0.10.0
libtpu: 0.0.40
codegen_flags: <defaults>
</compile_context>

<pallas_src>
import jax
import jax.numpy as jnp
from jax import lax
from jax.experimental import pallas as pl
from jax.experimental.pallas import tpu as pltpu


MATMUL_DTYPE = jnp.bfloat16   # MXU operand / gx / intermediate-activation dtype


def _round_up(n, m):
    return (n + m - 1) // m * m


# ---------------------------------------------------------------------------
# Pallas kernel factory: one grid step = one time chunk, both directions fused.
# ---------------------------------------------------------------------------
def _make_recurrence_kernel(Tc, Hp, nd, out_dtype, unroll):
    H3 = 3 * Hp

    def _cell(gx_row, bias_ref, whh_ref, m_row, h, c):
        # gx_row: (Bp,4Hp) bf16; bias: (Bp,4Hp) f32; whh: (Hp,4Hp) bf16;
        # m_row: (Bp,Hp) bf16; h/c: (Bp,Hp) f32.
        gates = gx_row.astype(jnp.float32) + bias_ref[...] + jnp.dot(
            h.astype(whh_ref.dtype), whh_ref[...],
            preferred_element_type=jnp.float32)
        # gate columns were re-packed to (i, f, o, g): one sigmoid + one tanh dispatch
        sig = jax.nn.sigmoid(gates[:, :H3])
        i_g = sig[:, 0 * Hp:1 * Hp]
        f_g = sig[:, 1 * Hp:2 * Hp]
        o_g = sig[:, 2 * Hp:H3]
        g_g = jnp.tanh(gates[:, H3:])
        c_new = f_g * c + i_g * g_g
        h_new = o_g * jnp.tanh(c_new)
        m = m_row.astype(jnp.float32)
        return h_new * m, c_new * m       # reference: h_next*masks[t], c_next*masks[t]

    def kernel(*refs):
        # refs layout: gx[nd], masks[nd], h0, whh[nd], bias[nd], out[nd], h_scr, c_scr
        gx_refs = refs[0:nd]
        m_refs = refs[nd:2 * nd]
        h0_ref = refs[2 * nd]
        whh_refs = refs[2 * nd + 1:3 * nd + 1]
        bias_refs = refs[3 * nd + 1:4 * nd + 1]
        out_refs = refs[4 * nd + 1:5 * nd + 1]
        h_scr, c_scr = refs[5 * nd + 1], refs[5 * nd + 2]

        # hx = (initial, zeros): (re)initialize carried state on the first chunk only.
        @pl.when(pl.program_id(0) == 0)
        def _():
            h0 = h0_ref[...]
            for d in range(nd):
                h_scr[d] = h0
            c_scr[...] = jnp.zeros_like(c_scr)

        def step(i, carry):
            new = []
            for d in range(nd):
                h, c = carry[2 * d], carry[2 * d + 1]
                # fwd walks local rows 0..Tc-1 of chunk c; bwd walks Tc-1..0 of its
                # reverse-indexed chunk, i.e. global time T-1-(c*Tc+i).
                j = i if d == 0 else Tc - 1 - i
                h, c = _cell(gx_refs[d][j], bias_refs[d], whh_refs[d],
                             m_refs[d][j], h, c)
                out_refs[d][j] = h.astype(out_dtype)   # already in original time order
                new += [h, c]
            return tuple(new)

        carry0 = []
        for d in range(nd):
            carry0 += [h_scr[d], c_scr[d]]
        final = lax.fori_loop(0, Tc, step, tuple(carry0), unroll=unroll)
        for d in range(nd):
            h_scr[d] = final[2 * d]
            c_scr[d] = final[2 * d + 1]

    return kernel


# ---------------------------------------------------------------------------
# One layer = one pallas_call streaming time chunks for both directions.
# ---------------------------------------------------------------------------
def _lstm_layer(gx_list, masks_bcast, h0_p, whh_list, bias_list, *,
                time_chunk, out_dtype, vmem_limit):
    nd = len(gx_list)
    Tp, Bp, Hp4 = gx_list[0].shape
    Hp = Hp4 // 4
    Tc = time_chunk
    nc = Tp // Tc

    def fwd_chunk(c):
        return (c, 0, 0)

    def bwd_chunk(c):
        return (nc - 1 - c, 0, 0)

    chunk_map = (fwd_chunk, bwd_chunk)
    const2 = lambda c: (0, 0)

    in_specs, args = [], []
    for d in range(nd):                                   # gx (bf16), streamed chunks
        in_specs.append(pl.BlockSpec((Tc, Bp, 4 * Hp), chunk_map[d]))
        args.append(gx_list[d])
    for d in range(nd):                                   # lane-dense masks, chunked
        in_specs.append(pl.BlockSpec((Tc, Bp, Hp), chunk_map[d]))
        args.append(masks_bcast)
    in_specs.append(pl.BlockSpec((Bp, Hp), const2))       # initial h (shared)
    args.append(h0_p)
    for d in range(nd):                                   # W_hh^T (bf16)
        in_specs.append(pl.BlockSpec((Hp, 4 * Hp), const2))
        args.append(whh_list[d])
    for d in range(nd):                                   # b_ih + b_hh (f32)
        in_specs.append(pl.BlockSpec((Bp, 4 * Hp), const2))
        args.append(bias_list[d])

    out_specs = [pl.BlockSpec((Tc, Bp, Hp), chunk_map[d]) for d in range(nd)]
    out_shape = [jax.ShapeDtypeStruct((Tp, Bp, Hp), out_dtype) for _ in range(nd)]

    unroll = True if Tc <= 8 else 2                       # review: cap unroll at 2
    kernel = _make_recurrence_kernel(Tc, Hp, nd, out_dtype, unroll)

    outs = pl.pallas_call(
        kernel,
        out_shape=tuple(out_shape) if nd == 2 else out_shape[0],
        grid_spec=pltpu.PrefetchScalarGridSpec(
            num_scalar_prefetch=0,
            grid=(nc,),                      # time chunks; h/c carried in scratch
            in_specs=in_specs,
            out_specs=tuple(out_specs) if nd == 2 else out_specs[0],
            scratch_shapes=[pltpu.VMEM((nd, Bp, Hp), jnp.float32),   # h per direction
                            pltpu.VMEM((nd, Bp, Hp), jnp.float32)],  # c per direction
        ),
        compiler_params=pltpu.CompilerParams(
            dimension_semantics=("arbitrary",),   # chunks are serially dependent
            vmem_limit_bytes=vmem_limit,
        ),
    )(*args)
    return list(outs) if nd == 2 else [outs]


# ---------------------------------------------------------------------------
# Parameter packing (PyTorch nn.LSTMCell layout -> padded / reordered / bf16).
# ---------------------------------------------------------------------------
def _pack_gates(w, H, Hp):
    """(4H, ...) -> (4Hp, ...): zero-pad each gate chunk to Hp rows and reorder the
       nn.LSTMCell gate chunks (i, f, g, o) -> (i, f, o, g) so the three sigmoid
       gates are contiguous in the kernel."""
    w4 = w.reshape((4, H) + w.shape[1:])
    pad = [(0, 0), (0, Hp - H)] + [(0, 0)] * (w.ndim - 1)
    w4 = jnp.pad(w4, pad)[jnp.array([0, 1, 3, 2])]
    return w4.reshape((4 * Hp,) + w.shape[1:])


def _prepare_params(params, H, Hp, Bp, nd):
    """Per layer / direction:
         wih : list (one per input source: x, or prev fwd/bwd) of (in_s, 4Hp) bf16
         whh : (Hp, 4Hp) bf16
         bias: (Bp, 4Hp) f32  (b_ih + b_hh, pre-broadcast over sublanes)"""
    prepped = []
    for layer, p in enumerate(params):
        layer_p = {"wih": [], "whh": [], "bias": []}
        for d in range(nd):
            pre = "f" if d == 0 else "b"
            w_ih = _pack_gates(p[pre + "_w_ih"], H, Hp)          # (4Hp, in_total)
            if layer == 0:
                parts = [w_ih.T.astype(MATMUL_DTYPE)]            # (I, 4Hp)
            else:
                parts = []
                for s in range(nd):                              # per prev-layer direction
                    blk = w_ih[:, s * H:(s + 1) * H].T           # (H, 4Hp)
                    blk = jnp.pad(blk, ((0, Hp - H), (0, 0)))    # (Hp, 4Hp)
                    parts.append(blk.astype(MATMUL_DTYPE))
            w_hh = _pack_gates(p[pre + "_w_hh"], H, Hp).T        # (H, 4Hp)
            w_hh = jnp.pad(w_hh, ((0, Hp - H), (0, 0)))          # (Hp, 4Hp)
            b = _pack_gates(p[pre + "_b_ih"] + p[pre + "_b_hh"], H, Hp)  # (4Hp,)
            layer_p["wih"].append(parts)
            layer_p["whh"].append(w_hh.astype(MATMUL_DTYPE))
            layer_p["bias"].append(
                jnp.broadcast_to(b.astype(jnp.float32)[None, :], (Bp, 4 * Hp)))
        prepped.append(layer_p)
    return prepped


# ---------------------------------------------------------------------------
# Tiling / VMEM budget helpers.
# ---------------------------------------------------------------------------
def _pick_time_chunk(T, Bp, Hp, nd, budget_bytes=8 << 20):
    """Largest Tc whose double-buffered streamed blocks (gx bf16 + mask bf16 + out
       <= f32 per direction) fit in ~budget_bytes; safe for v7x's 64 MiB/TC VMEM."""
    per_t = 2 * nd * Bp * (4 * Hp * 2 + Hp * 2 + Hp * 4)
    tc = max(1, int(budget_bytes // per_t))
    tc = min(tc, T)
    if tc >= 8:
        tc -= tc % 8
    return tc


def _vmem_limit_bytes(Tc, Bp, Hp, nd):
    streamed = 2 * nd * Tc * Bp * (4 * Hp * 2 + Hp * 2 + Hp * 4)
    resident = 2 * nd * (Hp * 4 * Hp * 2 + Bp * 4 * Hp * 4) + 2 * Bp * Hp * 4
    scratch = 2 * nd * Bp * Hp * 4
    est = streamed + resident + scratch
    return int(min(64 << 20, max(32 << 20, 2 * est)))


# ---------------------------------------------------------------------------
# Full forward (mirrors MyLSTM.forward, eval / zero-dropout semantics).
# ---------------------------------------------------------------------------
def my_lstm_forward(x, masks, params, *, hidden_size, num_layers, bidirectional,
                    initial=None, time_chunk=None):
    T, B, _ = x.shape
    H = hidden_size
    nd = 2 if bidirectional else 1
    Bp = _round_up(max(B, 1), 8)        # sublane padding
    Hp = _round_up(max(H, 1), 128)      # lane padding -> aligned gate slices

    Tc = _pick_time_chunk(T, Bp, Hp, nd) if time_chunk is None else int(time_chunk)
    Tc = max(1, min(Tc, T))
    if initial is None:
        # zero-padded tail timesteps have gx=0 and mask=0, so they leave the (zero)
        # backward-chain init unchanged and their outputs are discarded.
        Tp = _round_up(T, Tc)
    else:
        while T % Tc:                   # nonzero initial: backward chain must start
            Tc -= 1                     # exactly at t = T-1  ->  Tc must divide T
        Tp = T
    vmem_limit = _vmem_limit_bytes(Tc, Bp, Hp, nd)

    # Padded inputs: time -> Tp, batch -> Bp; masks pre-broadcast lane-dense to Hp.
    x_p = jnp.pad(x.astype(jnp.float32), ((0, Tp - T), (0, Bp - B), (0, 0)))
    m = jnp.broadcast_to(masks.astype(MATMUL_DTYPE), (T, B, H))
    m_p = jnp.pad(m, ((0, Tp - T), (0, Bp - B), (0, Hp - H)))
    h0 = jnp.zeros((B, H), jnp.float32) if initial is None else initial.astype(jnp.float32)
    h0_p = jnp.pad(h0, ((0, Bp - B), (0, Hp - H)))

    prepped = _prepare_params(params, H, Hp, Bp, nd)

    srcs = [x_p.astype(MATMUL_DTYPE)]   # layer-0 source; later layers reuse bf16 outs
    for layer in range(num_layers):
        pw = prepped[layer]
        # Hoisted, T-parallel input projection (one einsum per direction & source),
        # stored in bf16; bias is added in f32 inside the kernel.
        gx_list = []
        for d in range(nd):
            acc = None
            for s, src in enumerate(srcs):
                t = jnp.einsum("tbi,io->tbo", src, pw["wih"][d][s],
                               preferred_element_type=jnp.float32)
                acc = t if acc is None else acc + t
            gx_list.append(acc.astype(MATMUL_DTYPE))
        out_dtype = jnp.float32 if layer == num_layers - 1 else MATMUL_DTYPE
        srcs = _lstm_layer(gx_list, m_p, h0_p, pw["whh"], pw["bias"],
                           time_chunk=Tc, out_dtype=out_dtype, vmem_limit=vmem_limit)

    # Strip padding; single concat only at the very end.
    if nd == 2:
        return jnp.concatenate([srcs[0][:T, :B, :H], srcs[1][:T, :B, :H]], axis=2)
    return srcs[0][:T, :B, :H]


# ---------------------------------------------------------------------------
# Deterministic parameters (nn.LSTMCell default init, uniform +-1/sqrt(H)).
# ---------------------------------------------------------------------------
def init_params(key, input_size, hidden_size, num_layers, bidirectional):
    nd = 2 if bidirectional else 1
    std = 1.0 / float(hidden_size) ** 0.5
    params = []
    for layer in range(num_layers):
        layer_in = input_size if layer == 0 else hidden_size * nd
        p = {}
        for pre in ("f", "b")[:nd]:
            key, k1, k2, k3, k4 = jax.random.split(key, 5)
            p[pre + "_w_ih"] = jax.random.uniform(k1, (4 * hidden_size, layer_in),
                                                  jnp.float32, -std, std)
            p[pre + "_w_hh"] = jax.random.uniform(k2, (4 * hidden_size, hidden_size),
                                                  jnp.float32, -std, std)
            p[pre + "_b_ih"] = jax.random.uniform(k3, (4 * hidden_size,),
                                                  jnp.float32, -std, std)
            p[pre + "_b_hh"] = jax.random.uniform(k4, (4 * hidden_size,),
                                                  jnp.float32, -std, std)
        params.append(p)
    return params


# Pure-JAX f32 re-implementation of MyLSTM.forward, used as a correctness reference.
def _reference_forward(x, masks, params, *, hidden_size, num_layers, bidirectional):
    T, B, _ = x.shape
    H = hidden_size
    nd = 2 if bidirectional else 1
    h_zero = jnp.zeros((B, H), jnp.float32)
    initial = h_zero

    def cell(x_t, h, c, w_ih, w_hh, b_ih, b_hh):
        g = x_t @ w_ih.T + b_ih + h @ w_hh.T + b_hh
        i_g, f_g, g_g, o_g = jnp.split(g, 4, axis=1)
        i_g, f_g, o_g = jax.nn.sigmoid(i_g), jax.nn.sigmoid(f_g), jax.nn.sigmoid(o_g)
        g_g = jnp.tanh(g_g)
        c_new = f_g * c + i_g * g_g
        h_new = o_g * jnp.tanh(c_new)
        return h_new, c_new

    cur = x
    for layer in range(num_layers):
        p = params[layer]
        dir_outs = []
        for d in range(nd):
            pre = "f" if d == 0 else "b"
            h, c = initial, h_zero
            ys = [None] * T
            order = range(T) if d == 0 else range(T - 1, -1, -1)
            for t in order:
                h, c = cell(cur[t], h, c, p[pre + "_w_ih"], p[pre + "_w_hh"],
                            p[pre + "_b_ih"], p[pre + "_b_hh"])
                h = h * masks[t]
                c = c * masks[t]
                ys[t] = h
            dir_outs.append(jnp.stack(ys, 0))
        cur = jnp.concatenate(dir_outs, axis=2) if nd == 2 else dir_outs[0]
    return cur


if __name__ == "__main__":
    T, B, I, H = 8, 2, 16, 32
    NUM_LAYERS, BIDIRECTIONAL = 2, True

    key = jax.random.PRNGKey(0)
    kx, kp = jax.random.split(key)

    x = jax.random.normal(kx, (T, B, I), jnp.float32)
    # per-timestep validity masks (sequence lengths 8 and 5), shape (T, B, 1)
    lengths = jnp.array([8, 5])
    masks = (jnp.arange(T)[:, None] < lengths[None, :]).astype(jnp.float32)[:, :, None]

    params = init_params(kp, I, H, NUM_LAYERS, BIDIRECTIONAL)

    fwd = jax.jit(my_lstm_forward,
                  static_argnames=("hidden_size", "num_layers", "bidirectional",
                                   "time_chunk"))

    # Bidirectional, 2 layers, small time chunk (Tc=2 -> 4 grid chunks) so the
    # chunked streaming / scratch-carry / reversed backward index_map are exercised.
    out = fwd(x, masks, params, hidden_size=H, num_layers=NUM_LAYERS,
              bidirectional=BIDIRECTIONAL, time_chunk=2)
    jax.block_until_ready(out)
    assert out.shape == (T, B, H * 2)

    ref = _reference_forward(x, masks, params, hidden_size=H,
                             num_layers=NUM_LAYERS, bidirectional=BIDIRECTIONAL)
    max_err = float(jnp.max(jnp.abs(out - ref)))
    assert max_err < 0.1, f"max abs error vs reference (bidi): {max_err}"

    # Unidirectional single-layer path with default (auto) chunking.
    params_uni = init_params(kp, I, H, 1, False)
    out_u = fwd(x, masks, params_uni, hidden_size=H, num_layers=1,
                bidirectional=False)
    jax.block_until_ready(out_u)
    assert out_u.shape == (T, B, H)
    ref_u = _reference_forward(x, masks, params_uni, hidden_size=H, num_layers=1,
                               bidirectional=False)
    max_err_u = float(jnp.max(jnp.abs(out_u - ref_u)))
    assert max_err_u < 0.1, f"max abs error vs reference (uni): {max_err_u}"

    print("KERNEL_OK")
</pallas_src>

<mosaic_0001>
module attributes {stable_mosaic.version = 11 : i64} {
  func.func @kernel(%arg0: i32, %arg1: memref<2x8x512xbf16, #tpu.memory_space<vmem>>, %arg2: memref<2x8x512xbf16, #tpu.memory_space<vmem>>, %arg3: memref<2x8x128xbf16, #tpu.memory_space<vmem>>, %arg4: memref<2x8x128xbf16, #tpu.memory_space<vmem>>, %arg5: memref<8x128xf32, #tpu.memory_space<vmem>>, %arg6: memref<128x512xbf16, #tpu.memory_space<vmem>>, %arg7: memref<128x512xbf16, #tpu.memory_space<vmem>>, %arg8: memref<8x512xf32, #tpu.memory_space<vmem>>, %arg9: memref<8x512xf32, #tpu.memory_space<vmem>>, %arg10: memref<2x8x128xbf16, #tpu.memory_space<vmem>>, %arg11: memref<2x8x128xbf16, #tpu.memory_space<vmem>>, %arg12: memref<2x8x128xf32, #tpu.memory_space<vmem>>, %arg13: memref<2x8x128xf32, #tpu.memory_space<vmem>>) attributes {dimension_semantics = [#tpu.dimension_semantics<arbitrary>], iteration_bounds = array<i64: 4>, scalar_prefetch = 0 : i64, scratch_operands = 2 : i64, tpu.core_type = #tpu.core_type<tc>, window_params = [{transform_indices = @transform_0, window_bounds = array<i64: 2, 8, 512>}, {transform_indices = @transform_1, window_bounds = array<i64: 2, 8, 512>}, {transform_indices = @transform_2, window_bounds = array<i64: 2, 8, 128>}, {transform_indices = @transform_3, window_bounds = array<i64: 2, 8, 128>}, {pipeline_mode = #tpu.pipeline_mode<synchronous>, transform_indices = @transform_4, window_bounds = array<i64: 8, 128>}, {pipeline_mode = #tpu.pipeline_mode<synchronous>, transform_indices = @transform_5, window_bounds = array<i64: 128, 512>}, {pipeline_mode = #tpu.pipeline_mode<synchronous>, transform_indices = @transform_6, window_bounds = array<i64: 128, 512>}, {pipeline_mode = #tpu.pipeline_mode<synchronous>, transform_indices = @transform_7, window_bounds = array<i64: 8, 512>}, {pipeline_mode = #tpu.pipeline_mode<synchronous>, transform_indices = @transform_8, window_bounds = array<i64: 8, 512>}, {transform_indices = @transform_9, window_bounds = array<i64: 2, 8, 128>}, {transform_indices = @transform_10, window_bounds = array<i64: 2, 8, 128>}]} {
    %c0_i32 = arith.constant 0 : i32
    %0 = arith.cmpi eq, %arg0, %c0_i32 : i32
    %1 = arith.extui %0 : i1 to i32
    %c0_i32_0 = arith.constant 0 : i32
    %2 = arith.cmpi ne, %1, %c0_i32_0 : i32
    scf.if %2 {
      %c0_73 = arith.constant 0 : index
      %c0_74 = arith.constant 0 : index
      %173 = vector.load %arg5[%c0_73, %c0_74] : memref<8x128xf32, #tpu.memory_space<vmem>>, vector<8x128xf32>
      %c0_75 = arith.constant 0 : index
      %c0_76 = arith.constant 0 : index
      %c0_77 = arith.constant 0 : index
      %174 = vector.load %arg12[%c0_75, %c0_76, %c0_77] : memref<2x8x128xf32, #tpu.memory_space<vmem>>, vector<1x8x128xf32>
      %175 = vector.shape_cast %174 : vector<1x8x128xf32> to vector<8x128xf32>
      %176 = vector.shape_cast %173 : vector<8x128xf32> to vector<1x8x128xf32>
      tpu.vector_store %arg12[%c0_75, %c0_76, %c0_77], %176 {strides = array<i32>} : memref<2x8x128xf32, #tpu.memory_space<vmem>>, vector<1x8x128xf32>,
      %c1_78 = arith.constant 1 : index
      %c0_79 = arith.constant 0 : index
      %c0_80 = arith.constant 0 : index
      %177 = vector.load %arg12[%c1_78, %c0_79, %c0_80] : memref<2x8x128xf32, #tpu.memory_space<vmem>>, vector<1x8x128xf32>
      %178 = vector.shape_cast %177 : vector<1x8x128xf32> to vector<8x128xf32>
      %179 = vector.shape_cast %173 : vector<8x128xf32> to vector<1x8x128xf32>
      tpu.vector_store %arg12[%c1_78, %c0_79, %c0_80], %179 {strides = array<i32>} : memref<2x8x128xf32, #tpu.memory_space<vmem>>, vector<1x8x128xf32>,
      %cst_81 = arith.constant 0.000000e+00 : f32
      %180 = vector.broadcast %cst_81 : f32 to vector<2x8x128xf32>
      %c0_82 = arith.constant 0 : index
      %c0_83 = arith.constant 0 : index
      %c0_84 = arith.constant 0 : index
      %181 = vector.load %arg13[%c0_82, %c0_83, %c0_84] : memref<2x8x128xf32, #tpu.memory_space<vmem>>, vector<2x8x128xf32>
      tpu.vector_store %arg13[%c0_82, %c0_83, %c0_84], %180 {strides = array<i32>} : memref<2x8x128xf32, #tpu.memory_space<vmem>>, vector<2x8x128xf32>,
    } else {
    }
    %c0 = arith.constant 0 : index
    %c0_1 = arith.constant 0 : index
    %c0_2 = arith.constant 0 : index
    %3 = vector.load %arg12[%c0, %c0_1, %c0_2] : memref<2x8x128xf32, #tpu.memory_space<vmem>>, vector<1x8x128xf32>
    %4 = vector.shape_cast %3 : vector<1x8x128xf32> to vector<8x128xf32>
    %c0_3 = arith.constant 0 : index
    %c0_4 = arith.constant 0 : index
    %c0_5 = arith.constant 0 : index
    %5 = vector.load %arg13[%c0_3, %c0_4, %c0_5] : memref<2x8x128xf32, #tpu.memory_space<vmem>>, vector<1x8x128xf32>
    %6 = vector.shape_cast %5 : vector<1x8x128xf32> to vector<8x128xf32>
    %c1 = arith.constant 1 : index
    %c0_6 = arith.constant 0 : index
    %c0_7 = arith.constant 0 : index
    %7 = vector.load %arg12[%c1, %c0_6, %c0_7] : memref<2x8x128xf32, #tpu.memory_space<vmem>>, vector<1x8x128xf32>
    %8 = vector.shape_cast %7 : vector<1x8x128xf32> to vector<8x128xf32>
    %c1_8 = arith.constant 1 : index
    %c0_9 = arith.constant 0 : index
    %c0_10 = arith.constant 0 : index
    %9 = vector.load %arg13[%c1_8, %c0_9, %c0_10] : memref<2x8x128xf32, #tpu.memory_space<vmem>>, vector<1x8x128xf32>
    %10 = vector.shape_cast %9 : vector<1x8x128xf32> to vector<8x128xf32>
    %c0_i32_11 = arith.constant 0 : i32
    %11 = arith.index_cast %c0_i32_11 : i32 to index
    %c0_12 = arith.constant 0 : index
    %c0_13 = arith.constant 0 : index
    %12 = vector.load %arg1[%11, %c0_12, %c0_13] : memref<2x8x512xbf16, #tpu.memory_space<vmem>>, vector<1x8x512xbf16>
    %13 = vector.shape_cast %12 : vector<1x8x512xbf16> to vector<8x512xbf16>
    %14 = arith.index_cast %c0_i32_11 : i32 to index
    %c0_14 = arith.constant 0 : index
    %c0_15 = arith.constant 0 : index
    %15 = vector.load %arg3[%14, %c0_14, %c0_15] : memref<2x8x128xbf16, #tpu.memory_space<vmem>>, vector<1x8x128xbf16>
    %16 = vector.shape_cast %15 : vector<1x8x128xbf16> to vector<8x128xbf16>
    %17 = arith.extf %13 : vector<8x512xbf16> to vector<8x512xf32>
    %c0_16 = arith.constant 0 : index
    %c0_17 = arith.constant 0 : index
    %18 = vector.load %arg8[%c0_16, %c0_17] : memref<8x512xf32, #tpu.memory_space<vmem>>, vector<8x512xf32>
    %19 = arith.addf %17, %18 : vector<8x512xf32>
    %20 = arith.truncf %4 : vector<8x128xf32> to vector<8x128xbf16>
    %c0_18 = arith.constant 0 : index
    %c0_19 = arith.constant 0 : index
    %21 = vector.load %arg6[%c0_18, %c0_19] : memref<128x512xbf16, #tpu.memory_space<vmem>>, vector<128x512xbf16>
    %cst = arith.constant dense<0.000000e+00> : vector<8x512xf32>
    %22 = tpu.matmul %20, %21, %cst {dimension_numbers = #tpu.dot_dimension_numbers<[1], [0], [0], [1], [0, 0, 1, 1], [], []>} : vector<8x128xbf16>, vector<128x512xbf16>, vector<8x512xf32> -> vector<8x512xf32>
    %23 = arith.addf %19, %22 : vector<8x512xf32>
    %24 = vector.extract_strided_slice %23 {offsets = [0, 0], sizes = [8, 384], strides = [1, 1]} : vector<8x512xf32> to vector<8x384xf32>
    %25 = arith.negf %24 : vector<8x384xf32>
    %26 = math.exp %25 : vector<8x384xf32>
    %cst_20 = arith.constant 1.000000e+00 : f32
    %27 = vector.broadcast %cst_20 : f32 to vector<8x384xf32>
    %28 = arith.addf %27, %26 : vector<8x384xf32>
    %29 = arith.divf %27, %28 : vector<8x384xf32>
    %30 = vector.extract_strided_slice %29 {offsets = [0, 0], sizes = [8, 128], strides = [1, 1]} : vector<8x384xf32> to vector<8x128xf32>
    %31 = vector.extract_strided_slice %29 {offsets = [0, 128], sizes = [8, 128], strides = [1, 1]} : vector<8x384xf32> to vector<8x128xf32>
    %32 = vector.extract_strided_slice %29 {offsets = [0, 256], sizes = [8, 128], strides = [1, 1]} : vector<8x384xf32> to vector<8x128xf32>
    %33 = vector.extract_strided_slice %23 {offsets = [0, 384], sizes = [8, 128], strides = [1, 1]} : vector<8x512xf32> to vector<8x128xf32>
    %34 = math.tanh %33 : vector<8x128xf32>
    %35 = arith.mulf %31, %6 : vector<8x128xf32>
    %36 = arith.mulf %30, %34 : vector<8x128xf32>
    %37 = arith.addf %35, %36 : vector<8x128xf32>
    %38 = math.tanh %37 : vector<8x128xf32>
    %39 = arith.mulf %32, %38 : vector<8x128xf32>
    %40 = arith.extf %16 : vector<8x128xbf16> to vector<8x128xf32>
    %41 = arith.mulf %39, %40 : vector<8x128xf32>
    %42 = arith.mulf %37, %40 : vector<8x128xf32>
    %43 = arith.truncf %41 : vector<8x128xf32> to vector<8x128xbf16>
    %44 = arith.index_cast %c0_i32_11 : i32 to index
    %c0_21 = arith.constant 0 : index
    %c0_22 = arith.constant 0 : index
    %45 = vector.load %arg10[%44, %c0_21, %c0_22] : memref<2x8x128xbf16, #tpu.memory_space<vmem>>, vector<1x8x128xbf16>
    %46 = vector.shape_cast %45 : vector<1x8x128xbf16> to vector<8x128xbf16>
    %47 = vector.shape_cast %43 : vector<8x128xbf16> to vector<1x8x128xbf16>
    tpu.vector_store %arg10[%44, %c0_21, %c0_22], %47 {strides = array<i32>} : memref<2x8x128xbf16, #tpu.memory_space<vmem>>, vector<1x8x128xbf16>,
    %c1_i32 = arith.constant 1 : i32
    %48 = arith.subi %c1_i32, %c0_i32_11 : i32
    %49 = arith.index_cast %48 : i32 to index
    %c0_23 = arith.constant 0 : index
    %c0_24 = arith.constant 0 : index
    %50 = vector.load %arg2[%49, %c0_23, %c0_24] : memref<2x8x512xbf16, #tpu.memory_space<vmem>>, vector<1x8x512xbf16>
    %51 = vector.shape_cast %50 : vector<1x8x512xbf16> to vector<8x512xbf16>
    %52 = arith.index_cast %48 : i32 to index
    %c0_25 = arith.constant 0 : index
    %c0_26 = arith.constant 0 : index
    %53 = vector.load %arg4[%52, %c0_25, %c0_26] : memref<2x8x128xbf16, #tpu.memory_space<vmem>>, vector<1x8x128xbf16>
    %54 = vector.shape_cast %53 : vector<1x8x128xbf16> to vector<8x128xbf16>
    %55 = arith.extf %51 : vector<8x512xbf16> to vector<8x512xf32>
    %c0_27 = arith.constant 0 : index
    %c0_28 = arith.constant 0 : index
    %56 = vector.load %arg9[%c0_27, %c0_28] : memref<8x512xf32, #tpu.memory_space<vmem>>, vector<8x512xf32>
    %57 = arith.addf %55, %56 : vector<8x512xf32>
    %58 = arith.truncf %8 : vector<8x128xf32> to vector<8x128xbf16>
    %c0_29 = arith.constant 0 : index
    %c0_30 = arith.constant 0 : index
    %59 = vector.load %arg7[%c0_29, %c0_30] : memref<128x512xbf16, #tpu.memory_space<vmem>>, vector<128x512xbf16>
    %cst_31 = arith.constant dense<0.000000e+00> : vector<8x512xf32>
    %60 = tpu.matmul %58, %59, %cst_31 {dimension_numbers = #tpu.dot_dimension_numbers<[1], [0], [0], [1], [0, 0, 1, 1], [], []>} : vector<8x128xbf16>, vector<128x512xbf16>, vector<8x512xf32> -> vector<8x512xf32>
    %61 = arith.addf %57, %60 : vector<8x512xf32>
    %62 = vector.extract_strided_slice %61 {offsets = [0, 0], sizes = [8, 384], strides = [1, 1]} : vector<8x512xf32> to vector<8x384xf32>
    %63 = arith.negf %62 : vector<8x384xf32>
    %64 = math.exp %63 : vector<8x384xf32>
    %cst_32 = arith.constant 1.000000e+00 : f32
    %65 = vector.broadcast %cst_32 : f32 to vector<8x384xf32>
    %66 = arith.addf %65, %64 : vector<8x384xf32>
    %67 = arith.divf %65, %66 : vector<8x384xf32>
    %68 = vector.extract_strided_slice %67 {offsets = [0, 0], sizes = [8, 128], strides = [1, 1]} : vector<8x384xf32> to vector<8x128xf32>
    %69 = vector.extract_strided_slice %67 {offsets = [0, 128], sizes = [8, 128], strides = [1, 1]} : vector<8x384xf32> to vector<8x128xf32>
    %70 = vector.extract_strided_slice %67 {offsets = [0, 256], sizes = [8, 128], strides = [1, 1]} : vector<8x384xf32> to vector<8x128xf32>
    %71 = vector.extract_strided_slice %61 {offsets = [0, 384], sizes = [8, 128], strides = [1, 1]} : vector<8x512xf32> to vector<8x128xf32>
    %72 = math.tanh %71 : vector<8x128xf32>
    %73 = arith.mulf %69, %10 : vector<8x128xf32>
    %74 = arith.mulf %68, %72 : vector<8x128xf32>
    %75 = arith.addf %73, %74 : vector<8x128xf32>
    %76 = math.tanh %75 : vector<8x128xf32>
    %77 = arith.mulf %70, %76 : vector<8x128xf32>
    %78 = arith.extf %54 : vector<8x128xbf16> to vector<8x128xf32>
    %79 = arith.mulf %77, %78 : vector<8x128xf32>
    %80 = arith.mulf %75, %78 : vector<8x128xf32>
    %81 = arith.truncf %79 : vector<8x128xf32> to vector<8x128xbf16>
    %82 = arith.index_cast %48 : i32 to index
    %c0_33 = arith.constant 0 : index
    %c0_34 = arith.constant 0 : index
    %83 = vector.load %arg11[%82, %c0_33, %c0_34] : memref<2x8x128xbf16, #tpu.memory_space<vmem>>, vector<1x8x128xbf16>
    %84 = vector.shape_cast %83 : vector<1x8x128xbf16> to vector<8x128xbf16>
    %85 = vector.shape_cast %81 : vector<8x128xbf16> to vector<1x8x128xbf16>
    tpu.vector_store %arg11[%82, %c0_33, %c0_34], %85 {strides = array<i32>} : memref<2x8x128xbf16, #tpu.memory_space<vmem>>, vector<1x8x128xbf16>,
    %c1_i32_35 = arith.constant 1 : i32
    %86 = arith.index_cast %c1_i32_35 : i32 to index
    %c0_36 = arith.constant 0 : index
    %c0_37 = arith.constant 0 : index
    %87 = vector.load %arg1[%86, %c0_36, %c0_37] : memref<2x8x512xbf16, #tpu.memory_space<vmem>>, vector<1x8x512xbf16>
    %88 = vector.shape_cast %87 : vector<1x8x512xbf16> to vector<8x512xbf16>
    %89 = arith.index_cast %c1_i32_35 : i32 to index
    %c0_38 = arith.constant 0 : index
    %c0_39 = arith.constant 0 : index
    %90 = vector.load %arg3[%89, %c0_38, %c0_39] : memref<2x8x128xbf16, #tpu.memory_space<vmem>>, vector<1x8x128xbf16>
    %91 = vector.shape_cast %90 : vector<1x8x128xbf16> to vector<8x128xbf16>
    %92 = arith.extf %88 : vector<8x512xbf16> to vector<8x512xf32>
    %c0_40 = arith.constant 0 : index
    %c0_41 = arith.constant 0 : index
    %93 = vector.load %arg8[%c0_40, %c0_41] : memref<8x512xf32, #tpu.memory_space<vmem>>, vector<8x512xf32>
    %94 = arith.addf %92, %93 : vector<8x512xf32>
    %95 = arith.truncf %41 : vector<8x128xf32> to vector<8x128xbf16>
    %c0_42 = arith.constant 0 : index
    %c0_43 = arith.constant 0 : index
    %96 = vector.load %arg6[%c0_42, %c0_43] : memref<128x512xbf16, #tpu.memory_space<vmem>>, vector<128x512xbf16>
    %cst_44 = arith.constant dense<0.000000e+00> : vector<8x512xf32>
    %97 = tpu.matmul %95, %96, %cst_44 {dimension_numbers = #tpu.dot_dimension_numbers<[1], [0], [0], [1], [0, 0, 1, 1], [], []>} : vector<8x128xbf16>, vector<128x512xbf16>, vector<8x512xf32> -> vector<8x512xf32>
    %98 = arith.addf %94, %97 : vector<8x512xf32>
    %99 = vector.extract_strided_slice %98 {offsets = [0, 0], sizes = [8, 384], strides = [1, 1]} : vector<8x512xf32> to vector<8x384xf32>
    %100 = arith.negf %99 : vector<8x384xf32>
    %101 = math.exp %100 : vector<8x384xf32>
    %cst_45 = arith.constant 1.000000e+00 : f32
    %102 = vector.broadcast %cst_45 : f32 to vector<8x384xf32>
    %103 = arith.addf %102, %101 : vector<8x384xf32>
    %104 = arith.divf %102, %103 : vector<8x384xf32>
    %105 = vector.extract_strided_slice %104 {offsets = [0, 0], sizes = [8, 128], strides = [1, 1]} : vector<8x384xf32> to vector<8x128xf32>
    %106 = vector.extract_strided_slice %104 {offsets = [0, 128], sizes = [8, 128], strides = [1, 1]} : vector<8x384xf32> to vector<8x128xf32>
    %107 = vector.extract_strided_slice %104 {offsets = [0, 256], sizes = [8, 128], strides = [1, 1]} : vector<8x384xf32> to vector<8x128xf32>
    %108 = vector.extract_strided_slice %98 {offsets = [0, 384], sizes = [8, 128], strides = [1, 1]} : vector<8x512xf32> to vector<8x128xf32>
    %109 = math.tanh %108 : vector<8x128xf32>
    %110 = arith.mulf %106, %42 : vector<8x128xf32>
    %111 = arith.mulf %105, %109 : vector<8x128xf32>
    %112 = arith.addf %110, %111 : vector<8x128xf32>
    %113 = math.tanh %112 : vector<8x128xf32>
    %114 = arith.mulf %107, %113 : vector<8x128xf32>
    %115 = arith.extf %91 : vector<8x128xbf16> to vector<8x128xf32>
    %116 = arith.mulf %114, %115 : vector<8x128xf32>
    %117 = arith.mulf %112, %115 : vector<8x128xf32>
    %118 = arith.truncf %116 : vector<8x128xf32> to vector<8x128xbf16>
    %119 = arith.index_cast %c1_i32_35 : i32 to index
    %c0_46 = arith.constant 0 : index
    %c0_47 = arith.constant 0 : index
    %120 = vector.load %arg10[%119, %c0_46, %c0_47] : memref<2x8x128xbf16, #tpu.memory_space<vmem>>, vector<1x8x128xbf16>
    %121 = vector.shape_cast %120 : vector<1x8x128xbf16> to vector<8x128xbf16>
    %122 = vector.shape_cast %118 : vector<8x128xbf16> to vector<1x8x128xbf16>
    tpu.vector_store %arg10[%119, %c0_46, %c0_47], %122 {strides = array<i32>} : memref<2x8x128xbf16, #tpu.memory_space<vmem>>, vector<1x8x128xbf16>,
    %c1_i32_48 = arith.constant 1 : i32
    %123 = arith.subi %c1_i32_48, %c1_i32_35 : i32
    %124 = arith.index_cast %123 : i32 to index
    %c0_49 = arith.constant 0 : index
    %c0_50 = arith.constant 0 : index
    %125 = vector.load %arg2[%124, %c0_49, %c0_50] : memref<2x8x512xbf16, #tpu.memory_space<vmem>>, vector<1x8x512xbf16>
    %126 = vector.shape_cast %125 : vector<1x8x512xbf16> to vector<8x512xbf16>
    %127 = arith.index_cast %123 : i32 to index
    %c0_51 = arith.constant 0 : index
    %c0_52 = arith.constant 0 : index
    %128 = vector.load %arg4[%127, %c0_51, %c0_52] : memref<2x8x128xbf16, #tpu.memory_space<vmem>>, vector<1x8x128xbf16>
    %129 = vector.shape_cast %128 : vector<1x8x128xbf16> to vector<8x128xbf16>
    %130 = arith.extf %126 : vector<8x512xbf16> to vector<8x512xf32>
    %c0_53 = arith.constant 0 : index
    %c0_54 = arith.constant 0 : index
    %131 = vector.load %arg9[%c0_53, %c0_54] : memref<8x512xf32, #tpu.memory_space<vmem>>, vector<8x512xf32>
    %132 = arith.addf %130, %131 : vector<8x512xf32>
    %133 = arith.truncf %79 : vector<8x128xf32> to vector<8x128xbf16>
    %c0_55 = arith.constant 0 : index
    %c0_56 = arith.constant 0 : index
    %134 = vector.load %arg7[%c0_55, %c0_56] : memref<128x512xbf16, #tpu.memory_space<vmem>>, vector<128x512xbf16>
    %cst_57 = arith.constant dense<0.000000e+00> : vector<8x512xf32>
    %135 = tpu.matmul %133, %134, %cst_57 {dimension_numbers = #tpu.dot_dimension_numbers<[1], [0], [0], [1], [0, 0, 1, 1], [], []>} : vector<8x128xbf16>, vector<128x512xbf16>, vector<8x512xf32> -> vector<8x512xf32>
    %136 = arith.addf %132, %135 : vector<8x512xf32>
    %137 = vector.extract_strided_slice %136 {offsets = [0, 0], sizes = [8, 384], strides = [1, 1]} : vector<8x512xf32> to vector<8x384xf32>
    %138 = arith.negf %137 : vector<8x384xf32>
    %139 = math.exp %138 : vector<8x384xf32>
    %cst_58 = arith.constant 1.000000e+00 : f32
    %140 = vector.broadcast %cst_58 : f32 to vector<8x384xf32>
    %141 = arith.addf %140, %139 : vector<8x384xf32>
    %142 = arith.divf %140, %141 : vector<8x384xf32>
    %143 = vector.extract_strided_slice %142 {offsets = [0, 0], sizes = [8, 128], strides = [1, 1]} : vector<8x384xf32> to vector<8x128xf32>
    %144 = vector.extract_strided_slice %142 {offsets = [0, 128], sizes = [8, 128], strides = [1, 1]} : vector<8x384xf32> to vector<8x128xf32>
    %145 = vector.extract_strided_slice %142 {offsets = [0, 256], sizes = [8, 128], strides = [1, 1]} : vector<8x384xf32> to vector<8x128xf32>
    %146 = vector.extract_strided_slice %136 {offsets = [0, 384], sizes = [8, 128], strides = [1, 1]} : vector<8x512xf32> to vector<8x128xf32>
    %147 = math.tanh %146 : vector<8x128xf32>
    %148 = arith.mulf %144, %80 : vector<8x128xf32>
    %149 = arith.mulf %143, %147 : vector<8x128xf32>
    %150 = arith.addf %148, %149 : vector<8x128xf32>
    %151 = math.tanh %150 : vector<8x128xf32>
    %152 = arith.mulf %145, %151 : vector<8x128xf32>
    %153 = arith.extf %129 : vector<8x128xbf16> to vector<8x128xf32>
    %154 = arith.mulf %152, %153 : vector<8x128xf32>
    %155 = arith.mulf %150, %153 : vector<8x128xf32>
    %156 = arith.truncf %154 : vector<8x128xf32> to vector<8x128xbf16>
    %157 = arith.index_cast %123 : i32 to index
    %c0_59 = arith.constant 0 : index
    %c0_60 = arith.constant 0 : index
    %158 = vector.load %arg11[%157, %c0_59, %c0_60] : memref<2x8x128xbf16, #tpu.memory_space<vmem>>, vector<1x8x128xbf16>
    %159 = vector.shape_cast %158 : vector<1x8x128xbf16> to vector<8x128xbf16>
    %160 = vector.shape_cast %156 : vector<8x128xbf16> to vector<1x8x128xbf16>
    tpu.vector_store %arg11[%157, %c0_59, %c0_60], %160 {strides = array<i32>} : memref<2x8x128xbf16, #tpu.memory_space<vmem>>, vector<1x8x128xbf16>,
    %c2_i32 = arith.constant 2 : i32
    %c0_61 = arith.constant 0 : index
    %c0_62 = arith.constant 0 : index
    %c0_63 = arith.constant 0 : index
    %161 = vector.load %arg12[%c0_61, %c0_62, %c0_63] : memref<2x8x128xf32, #tpu.memory_space<vmem>>, vector<1x8x128xf32>
    %162 = vector.shape_cast %161 : vector<1x8x128xf32> to vector<8x128xf32>
    %163 = vector.shape_cast %116 : vector<8x128xf32> to vector<1x8x128xf32>
    tpu.vector_store %arg12[%c0_61, %c0_62, %c0_63], %163 {strides = array<i32>} : memref<2x8x128xf32, #tpu.memory_space<vmem>>, vector<1x8x128xf32>,
    %c0_64 = arith.constant 0 : index
    %c0_65 = arith.constant 0 : index
    %c0_66 = arith.constant 0 : index
    %164 = vector.load %arg13[%c0_64, %c0_65, %c0_66] : memref<2x8x128xf32, #tpu.memory_space<vmem>>, vector<1x8x128xf32>
    %165 = vector.shape_cast %164 : vector<1x8x128xf32> to vector<8x128xf32>
    %166 = vector.shape_cast %117 : vector<8x128xf32> to vector<1x8x128xf32>
    tpu.vector_store %arg13[%c0_64, %c0_65, %c0_66], %166 {strides = array<i32>} : memref<2x8x128xf32, #tpu.memory_space<vmem>>, vector<1x8x128xf32>,
    %c1_67 = arith.constant 1 : index
    %c0_68 = arith.constant 0 : index
    %c0_69 = arith.constant 0 : index
    %167 = vector.load %arg12[%c1_67, %c0_68, %c0_69] : memref<2x8x128xf32, #tpu.memory_space<vmem>>, vector<1x8x128xf32>
    %168 = vector.shape_cast %167 : vector<1x8x128xf32> to vector<8x128xf32>
    %169 = vector.shape_cast %154 : vector<8x128xf32> to vector<1x8x128xf32>
    tpu.vector_store %arg12[%c1_67, %c0_68, %c0_69], %169 {strides = array<i32>} : memref<2x8x128xf32, #tpu.memory_space<vmem>>, vector<1x8x128xf32>,
    %c1_70 = arith.constant 1 : index
    %c0_71 = arith.constant 0 : index
    %c0_72 = arith.constant 0 : index
    %170 = vector.load %arg13[%c1_70, %c0_71, %c0_72] : memref<2x8x128xf32, #tpu.memory_space<vmem>>, vector<1x8x128xf32>
    %171 = vector.shape_cast %170 : vector<1x8x128xf32> to vector<8x128xf32>
    %172 = vector.shape_cast %155 : vector<8x128xf32> to vector<1x8x128xf32>
    tpu.vector_store %arg13[%c1_70, %c0_71, %c0_72], %172 {strides = array<i32>} : memref<2x8x128xf32, #tpu.memory_space<vmem>>, vector<1x8x128xf32>,
    return
  }
  func.func @transform_0(%arg0: i32) -> (i32, i32, i32) {
    %c0_i32 = arith.constant 0 : i32
    %c0_i32_0 = arith.constant 0 : i32
    %c0_i32_1 = arith.constant 0 : i32
    return %arg0, %c0_i32, %c0_i32_0 : i32, i32, i32
  }
  func.func @transform_1(%arg0: i32) -> (i32, i32, i32) {
    %c3_i32 = arith.constant 3 : i32
    %0 = arith.subi %c3_i32, %arg0 : i32
    %c0_i32 = arith.constant 0 : i32
    %c0_i32_0 = arith.constant 0 : i32
    %c0_i32_1 = arith.constant 0 : i32
    return %0, %c0_i32, %c0_i32_0 : i32, i32, i32
  }
  func.func @transform_2(%arg0: i32) -> (i32, i32, i32) {
    %c0_i32 = arith.constant 0 : i32
    %c0_i32_0 = arith.constant 0 : i32
    %c0_i32_1 = arith.constant 0 : i32
    return %arg0, %c0_i32, %c0_i32_0 : i32, i32, i32
  }
  func.func @transform_3(%arg0: i32) -> (i32, i32, i32) {
    %c3_i32 = arith.constant 3 : i32
    %0 = arith.subi %c3_i32, %arg0 : i32
    %c0_i32 = arith.constant 0 : i32
    %c0_i32_0 = arith.constant 0 : i32
    %c0_i32_1 = arith.constant 0 : i32
    return %0, %c0_i32, %c0_i32_0 : i32, i32, i32
  }
  func.func @transform_4(%arg0: i32) -> (i32, i32) {
    %c0_i32 = arith.constant 0 : i32
    %c0_i32_0 = arith.constant 0 : i32
    %c0_i32_1 = arith.constant 0 : i32
    return %c0_i32, %c0_i32_0 : i32, i32
  }
  func.func @transform_5(%arg0: i32) -> (i32, i32) {
    %c0_i32 = arith.constant 0 : i32
    %c0_i32_0 = arith.constant 0 : i32
    %c0_i32_1 = arith.constant 0 : i32
    return %c0_i32, %c0_i32_0 : i32, i32
  }
  func.func @transform_6(%arg0: i32) -> (i32, i32) {
    %c0_i32 = arith.constant 0 : i32
    %c0_i32_0 = arith.constant 0 : i32
    %c0_i32_1 = arith.constant 0 : i32
    return %c0_i32, %c0_i32_0 : i32, i32
  }
  func.func @transform_7(%arg0: i32) -> (i32, i32) {
    %c0_i32 = arith.constant 0 : i32
    %c0_i32_0 = arith.constant 0 : i32
    %c0_i32_1 = arith.constant 0 : i32
    return %c0_i32, %c0_i32_0 : i32, i32
  }
  func.func @transform_8(%arg0: i32) -> (i32, i32) {
    %c0_i32 = arith.constant 0 : i32
    %c0_i32_0 = arith.constant 0 : i32
    %c0_i32_1 = arith.constant 0 : i32
    return %c0_i32, %c0_i32_0 : i32, i32
  }
  func.func @transform_9(%arg0: i32) -> (i32, i32, i32) {
    %c0_i32 = arith.constant 0 : i32
    %c0_i32_0 = arith.constant 0 : i32
    %c0_i32_1 = arith.constant 0 : i32
    return %arg0, %c0_i32, %c0_i32_0 : i32, i32, i32
  }
  func.func @transform_10(%arg0: i32) -> (i32, i32, i32) {
    %c3_i32 = arith.constant 3 : i32
    %0 = arith.subi %c3_i32, %arg0 : i32
    %c0_i32 = arith.constant 0 : i32
    %c0_i32_0 = arith.constant 0 : i32
    %c0_i32_1 = arith.constant 0 : i32
    return %0, %c0_i32, %c0_i32_0 : i32, i32, i32
  }
}

module attributes {stable_mosaic.version = 11 : i64} {
  func.func @kernel(%arg0: i32, %arg1: memref<2x8x512xbf16, #tpu.memory_space<vmem>>, %arg2: memref<2x8x512xbf16, #tpu.memory_space<vmem>>, %arg3: memref<2x8x128xbf16, #tpu.memory_space<vmem>>, %arg4: memref<2x8x128xbf16, #tpu.memory_space<vmem>>, %arg5: memref<8x128xf32, #tpu.memory_space<vmem>>, %arg6: memref<128x512xbf16, #tpu.memory_space<vmem>>, %arg7: memref<128x512xbf16, #tpu.memory_space<vmem>>, %arg8: memref<8x512xf32, #tpu.memory_space<vmem>>, %arg9: memref<8x512xf32, #tpu.memory_space<vmem>>, %arg10: memref<2x8x128xf32, #tpu.memory_space<vmem>>, %arg11: memref<2x8x128xf32, #tpu.memory_space<vmem>>, %arg12: memref<2x8x128xf32, #tpu.memory_space<vmem>>, %arg13: memref<2x8x128xf32, #tpu.memory_space<vmem>>) attributes {dimension_semantics = [#tpu.dimension_semantics<arbitrary>], iteration_bounds = array<i64: 4>, scalar_prefetch = 0 : i64, scratch_operands = 2 : i64, tpu.core_type = #tpu.core_type<tc>, window_params = [{transform_indices = @transform_0, window_bounds = array<i64: 2, 8, 512>}, {transform_indices = @transform_1, window_bounds = array<i64: 2, 8, 512>}, {transform_indices = @transform_2, window_bounds = array<i64: 2, 8, 128>}, {transform_indices = @transform_3, window_bounds = array<i64: 2, 8, 128>}, {pipeline_mode = #tpu.pipeline_mode<synchronous>, transform_indices = @transform_4, window_bounds = array<i64: 8, 128>}, {pipeline_mode = #tpu.pipeline_mode<synchronous>, transform_indices = @transform_5, window_bounds = array<i64: 128, 512>}, {pipeline_mode = #tpu.pipeline_mode<synchronous>, transform_indices = @transform_6, window_bounds = array<i64: 128, 512>}, {pipeline_mode = #tpu.pipeline_mode<synchronous>, transform_indices = @transform_7, window_bounds = array<i64: 8, 512>}, {pipeline_mode = #tpu.pipeline_mode<synchronous>, transform_indices = @transform_8, window_bounds = array<i64: 8, 512>}, {transform_indices = @transform_9, window_bounds = array<i64: 2, 8, 128>}, {transform_indices = @transform_10, window_bounds = array<i64: 2, 8, 128>}]} {
    %c0_i32 = arith.constant 0 : i32
    %0 = arith.cmpi eq, %arg0, %c0_i32 : i32
    %1 = arith.extui %0 : i1 to i32
    %c0_i32_0 = arith.constant 0 : i32
    %2 = arith.cmpi ne, %1, %c0_i32_0 : i32
    scf.if %2 {
      %c0_73 = arith.constant 0 : index
      %c0_74 = arith.constant 0 : index
      %169 = vector.load %arg5[%c0_73, %c0_74] : memref<8x128xf32, #tpu.memory_space<vmem>>, vector<8x128xf32>
      %c0_75 = arith.constant 0 : index
      %c0_76 = arith.constant 0 : index
      %c0_77 = arith.constant 0 : index
      %170 = vector.load %arg12[%c0_75, %c0_76, %c0_77] : memref<2x8x128xf32, #tpu.memory_space<vmem>>, vector<1x8x128xf32>
      %171 = vector.shape_cast %170 : vector<1x8x128xf32> to vector<8x128xf32>
      %172 = vector.shape_cast %169 : vector<8x128xf32> to vector<1x8x128xf32>
      tpu.vector_store %arg12[%c0_75, %c0_76, %c0_77], %172 {strides = array<i32>} : memref<2x8x128xf32, #tpu.memory_space<vmem>>, vector<1x8x128xf32>,
      %c1_78 = arith.constant 1 : index
      %c0_79 = arith.constant 0 : index
      %c0_80 = arith.constant 0 : index
      %173 = vector.load %arg12[%c1_78, %c0_79, %c0_80] : memref<2x8x128xf32, #tpu.memory_space<vmem>>, vector<1x8x128xf32>
      %174 = vector.shape_cast %173 : vector<1x8x128xf32> to vector<8x128xf32>
      %175 = vector.shape_cast %169 : vector<8x128xf32> to vector<1x8x128xf32>
      tpu.vector_store %arg12[%c1_78, %c0_79, %c0_80], %175 {strides = array<i32>} : memref<2x8x128xf32, #tpu.memory_space<vmem>>, vector<1x8x128xf32>,
      %cst_81 = arith.constant 0.000000e+00 : f32
      %176 = vector.broadcast %cst_81 : f32 to vector<2x8x128xf32>
      %c0_82 = arith.constant 0 : index
      %c0_83 = arith.constant 0 : index
      %c0_84 = arith.constant 0 : index
      %177 = vector.load %arg13[%c0_82, %c0_83, %c0_84] : memref<2x8x128xf32, #tpu.memory_space<vmem>>, vector<2x8x128xf32>
      tpu.vector_store %arg13[%c0_82, %c0_83, %c0_84], %176 {strides = array<i32>} : memref<2x8x128xf32, #tpu.memory_space<vmem>>, vector<2x8x128xf32>,
    } else {
    }
    %c0 = arith.constant 0 : index
    %c0_1 = arith.constant 0 : index
    %c0_2 = arith.constant 0 : index
    %3 = vector.load %arg12[%c0, %c0_1, %c0_2] : memref<2x8x128xf32, #tpu.memory_space<vmem>>, vector<1x8x128xf32>
    %4 = vector.shape_cast %3 : vector<1x8x128xf32> to vector<8x128xf32>
    %c0_3 = arith.constant 0 : index
    %c0_4 = arith.constant 0 : index
    %c0_5 = arith.constant 0 : index
    %5 = vector.load %arg13[%c0_3, %c0_4, %c0_5] : memref<2x8x128xf32, #tpu.memory_space<vmem>>, vector<1x8x128xf32>
    %6 = vector.shape_cast %5 : vector<1x8x128xf32> to vector<8x128xf32>
    %c1 = arith.constant 1 : index
    %c0_6 = arith.constant 0 : index
    %c0_7 = arith.constant 0 : index
    %7 = vector.load %arg12[%c1, %c0_6, %c0_7] : memref<2x8x128xf32, #tpu.memory_space<vmem>>, vector<1x8x128xf32>
    %8 = vector.shape_cast %7 : vector<1x8x128xf32> to vector<8x128xf32>
    %c1_8 = arith.constant 1 : index
    %c0_9 = arith.constant 0 : index
    %c0_10 = arith.constant 0 : index
    %9 = vector.load %arg13[%c1_8, %c0_9, %c0_10] : memref<2x8x128xf32, #tpu.memory_space<vmem>>, vector<1x8x128xf32>
    %10 = vector.shape_cast %9 : vector<1x8x128xf32> to vector<8x128xf32>
    %c0_i32_11 = arith.constant 0 : i32
    %11 = arith.index_cast %c0_i32_11 : i32 to index
    %c0_12 = arith.constant 0 : index
    %c0_13 = arith.constant 0 : index
    %12 = vector.load %arg1[%11, %c0_12, %c0_13] : memref<2x8x512xbf16, #tpu.memory_space<vmem>>, vector<1x8x512xbf16>
    %13 = vector.shape_cast %12 : vector<1x8x512xbf16> to vector<8x512xbf16>
    %14 = arith.index_cast %c0_i32_11 : i32 to index
    %c0_14 = arith.constant 0 : index
    %c0_15 = arith.constant 0 : index
    %15 = vector.load %arg3[%14, %c0_14, %c0_15] : memref<2x8x128xbf16, #tpu.memory_space<vmem>>, vector<1x8x128xbf16>
    %16 = vector.shape_cast %15 : vector<1x8x128xbf16> to vector<8x128xbf16>
    %17 = arith.extf %13 : vector<8x512xbf16> to vector<8x512xf32>
    %c0_16 = arith.constant 0 : index
    %c0_17 = arith.constant 0 : index
    %18 = vector.load %arg8[%c0_16, %c0_17] : memref<8x512xf32, #tpu.memory_space<vmem>>, vector<8x512xf32>
    %19 = arith.addf %17, %18 : vector<8x512xf32>
    %20 = arith.truncf %4 : vector<8x128xf32> to vector<8x128xbf16>
    %c0_18 = arith.constant 0 : index
    %c0_19 = arith.constant 0 : index
    %21 = vector.load %arg6[%c0_18, %c0_19] : memref<128x512xbf16, #tpu.memory_space<vmem>>, vector<128x512xbf16>
    %cst = arith.constant dense<0.000000e+00> : vector<8x512xf32>
    %22 = tpu.matmul %20, %21, %cst {dimension_numbers = #tpu.dot_dimension_numbers<[1], [0], [0], [1], [0, 0, 1, 1], [], []>} : vector<8x128xbf16>, vector<128x512xbf16>, vector<8x512xf32> -> vector<8x512xf32>
    %23 = arith.addf %19, %22 : vector<8x512xf32>
    %24 = vector.extract_strided_slice %23 {offsets = [0, 0], sizes = [8, 384], strides = [1, 1]} : vector<8x512xf32> to vector<8x384xf32>
    %25 = arith.negf %24 : vector<8x384xf32>
    %26 = math.exp %25 : vector<8x384xf32>
    %cst_20 = arith.constant 1.000000e+00 : f32
    %27 = vector.broadcast %cst_20 : f32 to vector<8x384xf32>
    %28 = arith.addf %27, %26 : vector<8x384xf32>
    %29 = arith.divf %27, %28 : vector<8x384xf32>
    %30 = vector.extract_strided_slice %29 {offsets = [0, 0], sizes = [8, 128], strides = [1, 1]} : vector<8x384xf32> to vector<8x128xf32>
    %31 = vector.extract_strided_slice %29 {offsets = [0, 128], sizes = [8, 128], strides = [1, 1]} : vector<8x384xf32> to vector<8x128xf32>
    %32 = vector.extract_strided_slice %29 {offsets = [0, 256], sizes = [8, 128], strides = [1, 1]} : vector<8x384xf32> to vector<8x128xf32>
    %33 = vector.extract_strided_slice %23 {offsets = [0, 384], sizes = [8, 128], strides = [1, 1]} : vector<8x512xf32> to vector<8x128xf32>
    %34 = math.tanh %33 : vector<8x128xf32>
    %35 = arith.mulf %31, %6 : vector<8x128xf32>
    %36 = arith.mulf %30, %34 : vector<8x128xf32>
    %37 = arith.addf %35, %36 : vector<8x128xf32>
    %38 = math.tanh %37 : vector<8x128xf32>
    %39 = arith.mulf %32, %38 : vector<8x128xf32>
    %40 = arith.extf %16 : vector<8x128xbf16> to vector<8x128xf32>
    %41 = arith.mulf %39, %40 : vector<8x128xf32>
    %42 = arith.mulf %37, %40 : vector<8x128xf32>
    %43 = arith.index_cast %c0_i32_11 : i32 to index
    %c0_21 = arith.constant 0 : index
    %c0_22 = arith.constant 0 : index
    %44 = vector.load %arg10[%43, %c0_21, %c0_22] : memref<2x8x128xf32, #tpu.memory_space<vmem>>, vector<1x8x128xf32>
    %45 = vector.shape_cast %44 : vector<1x8x128xf32> to vector<8x128xf32>
    %46 = vector.shape_cast %41 : vector<8x128xf32> to vector<1x8x128xf32>
    tpu.vector_store %arg10[%43, %c0_21, %c0_22], %46 {strides = array<i32>} : memref<2x8x128xf32, #tpu.memory_space<vmem>>, vector<1x8x128xf32>,
    %c1_i32 = arith.constant 1 : i32
    %47 = arith.subi %c1_i32, %c0_i32_11 : i32
    %48 = arith.index_cast %47 : i32 to index
    %c0_23 = arith.constant 0 : index
    %c0_24 = arith.constant 0 : index
    %49 = vector.load %arg2[%48, %c0_23, %c0_24] : memref<2x8x512xbf16, #tpu.memory_space<vmem>>, vector<1x8x512xbf16>
    %50 = vector.shape_cast %49 : vector<1x8x512xbf16> to vector<8x512xbf16>
    %51 = arith.index_cast %47 : i32 to index
    %c0_25 = arith.constant 0 : index
    %c0_26 = arith.constant 0 : index
    %52 = vector.load %arg4[%51, %c0_25, %c0_26] : memref<2x8x128xbf16, #tpu.memory_space<vmem>>, vector<1x8x128xbf16>
    %53 = vector.shape_cast %52 : vector<1x8x128xbf16> to vector<8x128xbf16>
    %54 = arith.extf %50 : vector<8x512xbf16> to vector<8x512xf32>
    %c0_27 = arith.constant 0 : index
    %c0_28 = arith.constant 0 : index
    %55 = vector.load %arg9[%c0_27, %c0_28] : memref<8x512xf32, #tpu.memory_space<vmem>>, vector<8x512xf32>
    %56 = arith.addf %54, %55 : vector<8x512xf32>
    %57 = arith.truncf %8 : vector<8x128xf32> to vector<8x128xbf16>
    %c0_29 = arith.constant 0 : index
    %c0_30 = arith.constant 0 : index
    %58 = vector.load %arg7[%c0_29, %c0_30] : memref<128x512xbf16, #tpu.memory_space<vmem>>, vector<128x512xbf16>
    %cst_31 = arith.constant dense<0.000000e+00> : vector<8x512xf32>
    %59 = tpu.matmul %57, %58, %cst_31 {dimension_numbers = #tpu.dot_dimension_numbers<[1], [0], [0], [1], [0, 0, 1, 1], [], []>} : vector<8x128xbf16>, vector<128x512xbf16>, vector<8x512xf32> -> vector<8x512xf32>
    %60 = arith.addf %56, %59 : vector<8x512xf32>
    %61 = vector.extract_strided_slice %60 {offsets = [0, 0], sizes = [8, 384], strides = [1, 1]} : vector<8x512xf32> to vector<8x384xf32>
    %62 = arith.negf %61 : vector<8x384xf32>
    %63 = math.exp %62 : vector<8x384xf32>
    %cst_32 = arith.constant 1.000000e+00 : f32
    %64 = vector.broadcast %cst_32 : f32 to vector<8x384xf32>
    %65 = arith.addf %64, %63 : vector<8x384xf32>
    %66 = arith.divf %64, %65 : vector<8x384xf32>
    %67 = vector.extract_strided_slice %66 {offsets = [0, 0], sizes = [8, 128], strides = [1, 1]} : vector<8x384xf32> to vector<8x128xf32>
    %68 = vector.extract_strided_slice %66 {offsets = [0, 128], sizes = [8, 128], strides = [1, 1]} : vector<8x384xf32> to vector<8x128xf32>
    %69 = vector.extract_strided_slice %66 {offsets = [0, 256], sizes = [8, 128], strides = [1, 1]} : vector<8x384xf32> to vector<8x128xf32>
    %70 = vector.extract_strided_slice %60 {offsets = [0, 384], sizes = [8, 128], strides = [1, 1]} : vector<8x512xf32> to vector<8x128xf32>
    %71 = math.tanh %70 : vector<8x128xf32>
    %72 = arith.mulf %68, %10 : vector<8x128xf32>
    %73 = arith.mulf %67, %71 : vector<8x128xf32>
    %74 = arith.addf %72, %73 : vector<8x128xf32>
    %75 = math.tanh %74 : vector<8x128xf32>
    %76 = arith.mulf %69, %75 : vector<8x128xf32>
    %77 = arith.extf %53 : vector<8x128xbf16> to vector<8x128xf32>
    %78 = arith.mulf %76, %77 : vector<8x128xf32>
    %79 = arith.mulf %74, %77 : vector<8x128xf32>
    %80 = arith.index_cast %47 : i32 to index
    %c0_33 = arith.constant 0 : index
    %c0_34 = arith.constant 0 : index
    %81 = vector.load %arg11[%80, %c0_33, %c0_34] : memref<2x8x128xf32, #tpu.memory_space<vmem>>, vector<1x8x128xf32>
    %82 = vector.shape_cast %81 : vector<1x8x128xf32> to vector<8x128xf32>
    %83 = vector.shape_cast %78 : vector<8x128xf32> to vector<1x8x128xf32>
    tpu.vector_store %arg11[%80, %c0_33, %c0_34], %83 {strides = array<i32>} : memref<2x8x128xf32, #tpu.memory_space<vmem>>, vector<1x8x128xf32>,
    %c1_i32_35 = arith.constant 1 : i32
    %84 = arith.index_cast %c1_i32_35 : i32 to index
    %c0_36 = arith.constant 0 : index
    %c0_37 = arith.constant 0 : index
    %85 = vector.load %arg1[%84, %c0_36, %c0_37] : memref<2x8x512xbf16, #tpu.memory_space<vmem>>, vector<1x8x512xbf16>
    %86 = vector.shape_cast %85 : vector<1x8x512xbf16> to vector<8x512xbf16>
    %87 = arith.index_cast %c1_i32_35 : i32 to index
    %c0_38 = arith.constant 0 : index
    %c0_39 = arith.constant 0 : index
    %88 = vector.load %arg3[%87, %c0_38, %c0_39] : memref<2x8x128xbf16, #tpu.memory_space<vmem>>, vector<1x8x128xbf16>
    %89 = vector.shape_cast %88 : vector<1x8x128xbf16> to vector<8x128xbf16>
    %90 = arith.extf %86 : vector<8x512xbf16> to vector<8x512xf32>
    %c0_40 = arith.constant 0 : index
    %c0_41 = arith.constant 0 : index
    %91 = vector.load %arg8[%c0_40, %c0_41] : memref<8x512xf32, #tpu.memory_space<vmem>>, vector<8x512xf32>
    %92 = arith.addf %90, %91 : vector<8x512xf32>
    %93 = arith.truncf %41 : vector<8x128xf32> to vector<8x128xbf16>
    %c0_42 = arith.constant 0 : index
    %c0_43 = arith.constant 0 : index
    %94 = vector.load %arg6[%c0_42, %c0_43] : memref<128x512xbf16, #tpu.memory_space<vmem>>, vector<128x512xbf16>
    %cst_44 = arith.constant dense<0.000000e+00> : vector<8x512xf32>
    %95 = tpu.matmul %93, %94, %cst_44 {dimension_numbers = #tpu.dot_dimension_numbers<[1], [0], [0], [1], [0, 0, 1, 1], [], []>} : vector<8x128xbf16>, vector<128x512xbf16>, vector<8x512xf32> -> vector<8x512xf32>
    %96 = arith.addf %92, %95 : vector<8x512xf32>
    %97 = vector.extract_strided_slice %96 {offsets = [0, 0], sizes = [8, 384], strides = [1, 1]} : vector<8x512xf32> to vector<8x384xf32>
    %98 = arith.negf %97 : vector<8x384xf32>
    %99 = math.exp %98 : vector<8x384xf32>
    %cst_45 = arith.constant 1.000000e+00 : f32
    %100 = vector.broadcast %cst_45 : f32 to vector<8x384xf32>
    %101 = arith.addf %100, %99 : vector<8x384xf32>
    %102 = arith.divf %100, %101 : vector<8x384xf32>
    %103 = vector.extract_strided_slice %102 {offsets = [0, 0], sizes = [8, 128], strides = [1, 1]} : vector<8x384xf32> to vector<8x128xf32>
    %104 = vector.extract_strided_slice %102 {offsets = [0, 128], sizes = [8, 128], strides = [1, 1]} : vector<8x384xf32> to vector<8x128xf32>
    %105 = vector.extract_strided_slice %102 {offsets = [0, 256], sizes = [8, 128], strides = [1, 1]} : vector<8x384xf32> to vector<8x128xf32>
    %106 = vector.extract_strided_slice %96 {offsets = [0, 384], sizes = [8, 128], strides = [1, 1]} : vector<8x512xf32> to vector<8x128xf32>
    %107 = math.tanh %106 : vector<8x128xf32>
    %108 = arith.mulf %104, %42 : vector<8x128xf32>
    %109 = arith.mulf %103, %107 : vector<8x128xf32>
    %110 = arith.addf %108, %109 : vector<8x128xf32>
    %111 = math.tanh %110 : vector<8x128xf32>
    %112 = arith.mulf %105, %111 : vector<8x128xf32>
    %113 = arith.extf %89 : vector<8x128xbf16> to vector<8x128xf32>
    %114 = arith.mulf %112, %113 : vector<8x128xf32>
    %115 = arith.mulf %110, %113 : vector<8x128xf32>
    %116 = arith.index_cast %c1_i32_35 : i32 to index
    %c0_46 = arith.constant 0 : index
    %c0_47 = arith.constant 0 : index
    %117 = vector.load %arg10[%116, %c0_46, %c0_47] : memref<2x8x128xf32, #tpu.memory_space<vmem>>, vector<1x8x128xf32>
    %118 = vector.shape_cast %117 : vector<1x8x128xf32> to vector<8x128xf32>
    %119 = vector.shape_cast %114 : vector<8x128xf32> to vector<1x8x128xf32>
    tpu.vector_store %arg10[%116, %c0_46, %c0_47], %119 {strides = array<i32>} : memref<2x8x128xf32, #tpu.memory_space<vmem>>, vector<1x8x128xf32>,
    %c1_i32_48 = arith.constant 1 : i32
    %120 = arith.subi %c1_i32_48, %c1_i32_35 : i32
    %121 = arith.index_cast %120 : i32 to index
    %c0_49 = arith.constant 0 : index
    %c0_50 = arith.constant 0 : index
    %122 = vector.load %arg2[%121, %c0_49, %c0_50] : memref<2x8x512xbf16, #tpu.memory_space<vmem>>, vector<1x8x512xbf16>
    %123 = vector.shape_cast %122 : vector<1x8x512xbf16> to vector<8x512xbf16>
    %124 = arith.index_cast %120 : i32 to index
    %c0_51 = arith.constant 0 : index
    %c0_52 = arith.constant 0 : index
    %125 = vector.load %arg4[%124, %c0_51, %c0_52] : memref<2x8x128xbf16, #tpu.memory_space<vmem>>, vector<1x8x128xbf16>
    %126 = vector.shape_cast %125 : vector<1x8x128xbf16> to vector<8x128xbf16>
    %127 = arith.extf %123 : vector<8x512xbf16> to vector<8x512xf32>
    %c0_53 = arith.constant 0 : index
    %c0_54 = arith.constant 0 : index
    %128 = vector.load %arg9[%c0_53, %c0_54] : memref<8x512xf32, #tpu.memory_space<vmem>>, vector<8x512xf32>
    %129 = arith.addf %127, %128 : vector<8x512xf32>
    %130 = arith.truncf %78 : vector<8x128xf32> to vector<8x128xbf16>
    %c0_55 = arith.constant 0 : index
    %c0_56 = arith.constant 0 : index
    %131 = vector.load %arg7[%c0_55, %c0_56] : memref<128x512xbf16, #tpu.memory_space<vmem>>, vector<128x512xbf16>
    %cst_57 = arith.constant dense<0.000000e+00> : vector<8x512xf32>
    %132 = tpu.matmul %130, %131, %cst_57 {dimension_numbers = #tpu.dot_dimension_numbers<[1], [0], [0], [1], [0, 0, 1, 1], [], []>} : vector<8x128xbf16>, vector<128x512xbf16>, vector<8x512xf32> -> vector<8x512xf32>
    %133 = arith.addf %129, %132 : vector<8x512xf32>
    %134 = vector.extract_strided_slice %133 {offsets = [0, 0], sizes = [8, 384], strides = [1, 1]} : vector<8x512xf32> to vector<8x384xf32>
    %135 = arith.negf %134 : vector<8x384xf32>
    %136 = math.exp %135 : vector<8x384xf32>
    %cst_58 = arith.constant 1.000000e+00 : f32
    %137 = vector.broadcast %cst_58 : f32 to vector<8x384xf32>
    %138 = arith.addf %137, %136 : vector<8x384xf32>
    %139 = arith.divf %137, %138 : vector<8x384xf32>
    %140 = vector.extract_strided_slice %139 {offsets = [0, 0], sizes = [8, 128], strides = [1, 1]} : vector<8x384xf32> to vector<8x128xf32>
    %141 = vector.extract_strided_slice %139 {offsets = [0, 128], sizes = [8, 128], strides = [1, 1]} : vector<8x384xf32> to vector<8x128xf32>
    %142 = vector.extract_strided_slice %139 {offsets = [0, 256], sizes = [8, 128], strides = [1, 1]} : vector<8x384xf32> to vector<8x128xf32>
    %143 = vector.extract_strided_slice %133 {offsets = [0, 384], sizes = [8, 128], strides = [1, 1]} : vector<8x512xf32> to vector<8x128xf32>
    %144 = math.tanh %143 : vector<8x128xf32>
    %145 = arith.mulf %141, %79 : vector<8x128xf32>
    %146 = arith.mulf %140, %144 : vector<8x128xf32>
    %147 = arith.addf %145, %146 : vector<8x128xf32>
    %148 = math.tanh %147 : vector<8x128xf32>
    %149 = arith.mulf %142, %148 : vector<8x128xf32>
    %150 = arith.extf %126 : vector<8x128xbf16> to vector<8x128xf32>
    %151 = arith.mulf %149, %150 : vector<8x128xf32>
    %152 = arith.mulf %147, %150 : vector<8x128xf32>
    %153 = arith.index_cast %120 : i32 to index
    %c0_59 = arith.constant 0 : index
    %c0_60 = arith.constant 0 : index
    %154 = vector.load %arg11[%153, %c0_59, %c0_60] : memref<2x8x128xf32, #tpu.memory_space<vmem>>, vector<1x8x128xf32>
    %155 = vector.shape_cast %154 : vector<1x8x128xf32> to vector<8x128xf32>
    %156 = vector.shape_cast %151 : vector<8x128xf32> to vector<1x8x128xf32>
    tpu.vector_store %arg11[%153, %c0_59, %c0_60], %156 {strides = array<i32>} : memref<2x8x128xf32, #tpu.memory_space<vmem>>, vector<1x8x128xf32>,
    %c2_i32 = arith.constant 2 : i32
    %c0_61 = arith.constant 0 : index
    %c0_62 = arith.constant 0 : index
    %c0_63 = arith.constant 0 : index
    %157 = vector.load %arg12[%c0_61, %c0_62, %c0_63] : memref<2x8x128xf32, #tpu.memory_space<vmem>>, vector<1x8x128xf32>
    %158 = vector.shape_cast %157 : vector<1x8x128xf32> to vector<8x128xf32>
    %159 = vector.shape_cast %114 : vector<8x128xf32> to vector<1x8x128xf32>
    tpu.vector_store %arg12[%c0_61, %c0_62, %c0_63], %159 {strides = array<i32>} : memref<2x8x128xf32, #tpu.memory_space<vmem>>, vector<1x8x128xf32>,
    %c0_64 = arith.constant 0 : index
    %c0_65 = arith.constant 0 : index
    %c0_66 = arith.constant 0 : index
    %160 = vector.load %arg13[%c0_64, %c0_65, %c0_66] : memref<2x8x128xf32, #tpu.memory_space<vmem>>, vector<1x8x128xf32>
    %161 = vector.shape_cast %160 : vector<1x8x128xf32> to vector<8x128xf32>
    %162 = vector.shape_cast %115 : vector<8x128xf32> to vector<1x8x128xf32>
    tpu.vector_store %arg13[%c0_64, %c0_65, %c0_66], %162 {strides = array<i32>} : memref<2x8x128xf32, #tpu.memory_space<vmem>>, vector<1x8x128xf32>,
    %c1_67 = arith.constant 1 : index
    %c0_68 = arith.constant 0 : index
    %c0_69 = arith.constant 0 : index
    %163 = vector.load %arg12[%c1_67, %c0_68, %c0_69] : memref<2x8x128xf32, #tpu.memory_space<vmem>>, vector<1x8x128xf32>
    %164 = vector.shape_cast %163 : vector<1x8x128xf32> to vector<8x128xf32>
    %165 = vector.shape_cast %151 : vector<8x128xf32> to vector<1x8x128xf32>
    tpu.vector_store %arg12[%c1_67, %c0_68, %c0_69], %165 {strides = array<i32>} : memref<2x8x128xf32, #tpu.memory_space<vmem>>, vector<1x8x128xf32>,
    %c1_70 = arith.constant 1 : index
    %c0_71 = arith.constant 0 : index
    %c0_72 = arith.constant 0 : index
    %166 = vector.load %arg13[%c1_70, %c0_71, %c0_72] : memref<2x8x128xf32, #tpu.memory_space<vmem>>, vector<1x8x128xf32>
    %167 = vector.shape_cast %166 : vector<1x8x128xf32> to vector<8x128xf32>
    %168 = vector.shape_cast %152 : vector<8x128xf32> to vector<1x8x128xf32>
    tpu.vector_store %arg13[%c1_70, %c0_71, %c0_72], %168 {strides = array<i32>} : memref<2x8x128xf32, #tpu.memory_space<vmem>>, vector<1x8x128xf32>,
    return
  }
  func.func @transform_0(%arg0: i32) -> (i32, i32, i32) {
    %c0_i32 = arith.constant 0 : i32
    %c0_i32_0 = arith.constant 0 : i32
    %c0_i32_1 = arith.constant 0 : i32
    return %arg0, %c0_i32, %c0_i32_0 : i32, i32, i32
  }
  func.func @transform_1(%arg0: i32) -> (i32, i32, i32) {
    %c3_i32 = arith.constant 3 : i32
    %0 = arith.subi %c3_i32, %arg0 : i32
    %c0_i32 = arith.constant 0 : i32
    %c0_i32_0 = arith.constant 0 : i32
    %c0_i32_1 = arith.constant 0 : i32
    return %0, %c0_i32, %c0_i32_0 : i32, i32, i32
  }
  func.func @transform_2(%arg0: i32) -> (i32, i32, i32) {
    %c0_i32 = arith.constant 0 : i32
    %c0_i32_0 = arith.constant 0 : i32
    %c0_i32_1 = arith.constant 0 : i32
    return %arg0, %c0_i32, %c0_i32_0 : i32, i32, i32
  }
  func.func @transform_3(%arg0: i32) -> (i32, i32, i32) {
    %c3_i32 = arith.constant 3 : i32
    %0 = arith.subi %c3_i32, %arg0 : i32
    %c0_i32 = arith.constant 0 : i32
    %c0_i32_0 = arith.constant 0 : i32
    %c0_i32_1 = arith.constant 0 : i32
    return %0, %c0_i32, %c0_i32_0 : i32, i32, i32
  }
  func.func @transform_4(%arg0: i32) -> (i32, i32) {
    %c0_i32 = arith.constant 0 : i32
    %c0_i32_0 = arith.constant 0 : i32
    %c0_i32_1 = arith.constant 0 : i32
    return %c0_i32, %c0_i32_0 : i32, i32
  }
  func.func @transform_5(%arg0: i32) -> (i32, i32) {
    %c0_i32 = arith.constant 0 : i32
    %c0_i32_0 = arith.constant 0 : i32
    %c0_i32_1 = arith.constant 0 : i32
    return %c0_i32, %c0_i32_0 : i32, i32
  }
  func.func @transform_6(%arg0: i32) -> (i32, i32) {
    %c0_i32 = arith.constant 0 : i32
    %c0_i32_0 = arith.constant 0 : i32
    %c0_i32_1 = arith.constant 0 : i32
    return %c0_i32, %c0_i32_0 : i32, i32
  }
  func.func @transform_7(%arg0: i32) -> (i32, i32) {
    %c0_i32 = arith.constant 0 : i32
    %c0_i32_0 = arith.constant 0 : i32
    %c0_i32_1 = arith.constant 0 : i32
    return %c0_i32, %c0_i32_0 : i32, i32
  }
  func.func @transform_8(%arg0: i32) -> (i32, i32) {
    %c0_i32 = arith.constant 0 : i32
    %c0_i32_0 = arith.constant 0 : i32
    %c0_i32_1 = arith.constant 0 : i32
    return %c0_i32, %c0_i32_0 : i32, i32
  }
  func.func @transform_9(%arg0: i32) -> (i32, i32, i32) {
    %c0_i32 = arith.constant 0 : i32
    %c0_i32_0 = arith.constant 0 : i32
    %c0_i32_1 = arith.constant 0 : i32
    return %arg0, %c0_i32, %c0_i32_0 : i32, i32, i32
  }
  func.func @transform_10(%arg0: i32) -> (i32, i32, i32) {
    %c3_i32 = arith.constant 3 : i32
    %0 = arith.subi %c3_i32, %arg0 : i32
    %c0_i32 = arith.constant 0 : i32
    %c0_i32_0 = arith.constant 0 : i32
    %c0_i32_1 = arith.constant 0 : i32
    return %0, %c0_i32, %c0_i32_0 : i32, i32, i32
  }
}

</mosaic_0001>

<llo_original>
// kernel: my_lstm_forward.3
$region0: #{my_lstm_forward.3}
  #allocation0 [shape = 'u32[]', space=smem, size = 0x4, offset = 0x4, fixed_abs, tag = 'smem constant byte address 0x4 - core index']
  #allocation1 [shape = 'u32[144,128]{1,0:T(1,128)}', space=vmem, size = 0x12000, scoped, tag = 'internal scratch']
  #allocation2 [shape = 'f32[2,8,128]{2,1,0:T(8,128)}', space=vmem, size = 0x2000, scoped, tag = 'scratch operand']
  #allocation3 [shape = 'f32[2,8,128]{2,1,0:T(8,128)}', space=vmem, size = 0x2000, scoped, tag = 'scratch operand']
  %s0 = inlined_call_operand.vmem [shape: bf16[8,8,512], index: 0, kind: input, shape index: {}]
  %s1 = inlined_call_operand.vmem [shape: bf16[8,8,512], index: 1, kind: input, shape index: {}]
  %s2 = inlined_call_operand.vmem [shape: bf16[8,8,128], index: 2, kind: input, shape index: {}, may-alias: {2,3}]
  %s3 = inlined_call_operand.vmem [shape: bf16[8,8,128], index: 3, kind: input, shape index: {}, may-alias: {2,3}]
  %s4 = inlined_call_operand.vmem [shape: f32[8,128], index: 4, kind: input, shape index: {}]
  %s5 = inlined_call_operand.vmem [shape: bf16[128,512], index: 5, kind: input, shape index: {}]
  %s6 = inlined_call_operand.vmem [shape: bf16[128,512], index: 6, kind: input, shape index: {}]
  %s7 = inlined_call_operand.vmem [shape: f32[8,512], index: 7, kind: input, shape index: {}]
  %s8 = inlined_call_operand.vmem [shape: f32[8,512], index: 8, kind: input, shape index: {}]
  %s9 = inlined_call_operand.vmem [shape: f32[8,8,128], index: 9, kind: output, shape index: {0}]
  %s10 = inlined_call_operand.vmem [shape: f32[8,8,128], index: 10, kind: output, shape index: {1}]
  %11 = xla_tuple %s9, %s10
  %s12 = sld [smem:[#allocation0]]
  $region81: #{my_lstm_forward.3} parent=0
    _
  %s14 = ssub.s32 1, %s12
  %s15 = scalar_select 0, %s14, %s12
  loop: start=0, step=1, limit=6
  $region2: #{my_lstm_forward.3} parent=0 // loop_pre_header
    _
  $region3: #{my_lstm_forward.3} parent=0 // loop_header
    %s17 = sphi 0, %s21
    %p18 = scmp.ge.s32.totalorder %s17, 6
    %s27 = sphi 0, %s29
    %s30 = sphi 0, %s27
    %s31 = sphi 0, %s30
    %s47 = sphi 0, %s31
    %s55 = sphi 0, %s57
    %s58 = sphi 0, %s55
    %s59 = sphi 0, %s58
    %s75 = sphi 0, %s59
    %s81 = sphi 0, %s83
    %s84 = sphi 0, %s81
    %s85 = sphi 0, %s84
    %s101 = sphi 0, %s85
    %s109 = sphi 0, %s111
    %s112 = sphi 0, %s109
    %s113 = sphi 0, %s112
    %s129 = sphi 0, %s113
    %s133 = sphi 0, %s133
    %s135 = sphi 0, %s133
    %s136 = sphi 0, %s135
    %s150 = sphi 0, %s136
    %s154 = sphi 0, %s154
    %s156 = sphi 0, %s154
    %s157 = sphi 0, %s156
    %s171 = sphi 0, %s157
    %s175 = sphi 0, %s175
    %s177 = sphi 0, %s175
    %s178 = sphi 0, %s177
    %s192 = sphi 0, %s178
    %s196 = sphi 0, %s196
    %s198 = sphi 0, %s196
    %s199 = sphi 0, %s198
    %s213 = sphi 0, %s199
    %s217 = sphi 0, %s217
    %s219 = sphi 0, %s217
    %s220 = sphi 0, %s219
    %s234 = sphi 0, %s220
    %s240 = sphi 0, %s242
    %s243 = sphi 0, %s240
    %s244 = sphi 0, %s243
    %s260 = sphi 0, %s244
    %s268 = sphi 0, %s270
    %s271 = sphi 0, %s268
    %s272 = sphi 0, %s271
    %s288 = sphi 0, %s272
  $region4: #{my_lstm_forward.3} parent=0 // loop_header_branch
    %20 = sbr.rel (%p18) target = $region8
  $region5: #{my_lstm_forward.3} parent=0 // loop_body
    %s22 = ssub.s32 %s17, 1
    %s23 = ssub.s32 %s17, 2
    %s24 = sadd.s32 %s17, 1
    %s25 = ssub.s32 %s17, %s24
    %p26 = scmp.eq.s32.totalorder %s25, 0
    %s28 = sadd.s32 %s27, 1
    %s29 = scalar_select %p26, %s27, %s28
    %p32 = pneg %p26
    %p33 = scmp.eq.s32.totalorder %s17, 3
    %p34 = por %p32, %p33
    %p35 = scmp.ne.s32.totalorder %s27, %s30
    %p36 = scmp.eq.s32.totalorder %s17, 0
    %p37 = por %p35, %p36
    %p38 = scmp.ne.s32.totalorder %s27, %s30
    %p39 = scmp.eq.s32.totalorder %s22, 3
    %p40 = por %p38, %p39
    %p41 = scmp.ne.s32.totalorder %s30, %s31
    %p42 = scmp.eq.s32.totalorder %s22, 0
    %p43 = por %p41, %p42
    %p44 = scmp.ne.s32.totalorder %s30, %s31
    %p45 = scmp.eq.s32.totalorder %s23, 3
    %p46 = por %p44, %p45
    %p48 = scmp.ne.s32.totalorder %s31, %s47
    %p49 = scmp.eq.s32.totalorder %s23, 0
    %p50 = por %p48, %p49
    %s51 = ssub.s32 3, %s17
    %s52 = ssub.s32 3, %s24
    %s53 = ssub.s32 %s51, %s52
    %p54 = scmp.eq.s32.totalorder %s53, 0
    %s56 = sadd.s32 %s55, 1
    %s57 = scalar_select %p54, %s55, %s56
    %p60 = pneg %p54
    %p61 = scmp.eq.s32.totalorder %s17, 3
    %p62 = por %p60, %p61
    %p63 = scmp.ne.s32.totalorder %s55, %s58
    %p64 = scmp.eq.s32.totalorder %s17, 0
    %p65 = por %p63, %p64
    %p66 = scmp.ne.s32.totalorder %s55, %s58
    %p67 = scmp.eq.s32.totalorder %s22, 3
    %p68 = por %p66, %p67
    %p69 = scmp.ne.s32.totalorder %s58, %s59
    %p70 = scmp.eq.s32.totalorder %s22, 0
    %p71 = por %p69, %p70
    %p72 = scmp.ne.s32.totalorder %s58, %s59
    %p73 = scmp.eq.s32.totalorder %s23, 3
    %p74 = por %p72, %p73
    %p76 = scmp.ne.s32.totalorder %s59, %s75
    %p77 = scmp.eq.s32.totalorder %s23, 0
    %p78 = por %p76, %p77
    %s79 = ssub.s32 %s17, %s24
    %p80 = scmp.eq.s32.totalorder %s79, 0
    %s82 = sadd.s32 %s81, 1
    %s83 = scalar_select %p80, %s81, %s82
    %p86 = pneg %p80
    %p87 = scmp.eq.s32.totalorder %s17, 3
    %p88 = por %p86, %p87
    %p89 = scmp.ne.s32.totalorder %s81, %s84
    %p90 = scmp.eq.s32.totalorder %s17, 0
    %p91 = por %p89, %p90
    %p92 = scmp.ne.s32.totalorder %s81, %s84
    %p93 = scmp.eq.s32.totalorder %s22, 3
    %p94 = por %p92, %p93
    %p95 = scmp.ne.s32.totalorder %s84, %s85
    %p96 = scmp.eq.s32.totalorder %s22, 0
    %p97 = por %p95, %p96
    %p98 = scmp.ne.s32.totalorder %s84, %s85
    %p99 = scmp.eq.s32.totalorder %s23, 3
    %p100 = por %p98, %p99
    %p102 = scmp.ne.s32.totalorder %s85, %s101
    %p103 = scmp.eq.s32.totalorder %s23, 0
    %p104 = por %p102, %p103
    %s105 = ssub.s32 3, %s17
    %s106 = ssub.s32 3, %s24
    %s107 = ssub.s32 %s105, %s106
    %p108 = scmp.eq.s32.totalorder %s107, 0
    %s110 = sadd.s32 %s109, 1
    %s111 = scalar_select %p108, %s109, %s110
    %p114 = pneg %p108
    %p115 = scmp.eq.s32.totalorder %s17, 3
    %p116 = por %p114, %p115
    %p117 = scmp.ne.s32.totalorder %s109, %s112
    %p118 = scmp.eq.s32.totalorder %s17, 0
    %p119 = por %p117, %p118
    %p120 = scmp.ne.s32.totalorder %s109, %s112
    %p121 = scmp.eq.s32.totalorder %s22, 3
    %p122 = por %p120, %p121
    %p123 = scmp.ne.s32.totalorder %s112, %s113
    %p124 = scmp.eq.s32.totalorder %s22, 0
    %p125 = por %p123, %p124
    %p126 = scmp.ne.s32.totalorder %s112, %s113
    %p127 = scmp.eq.s32.totalorder %s23, 3
    %p128 = por %p126, %p127
    %p130 = scmp.ne.s32.totalorder %s113, %s129
    %p131 = scmp.eq.s32.totalorder %s23, 0
    %p132 = por %p130, %p131
    %s134 = sadd.s32 %s133, 1
    %p137 = scmp.eq.s32.totalorder %s17, 3
    %p138 = scmp.ne.s32.totalorder %s133, %s135
    %p139 = scmp.eq.s32.totalorder %s17, 0
    %p140 = por %p138, %p139
    %p141 = scmp.ne.s32.totalorder %s133, %s135
    %p142 = scmp.eq.s32.totalorder %s22, 3
    %p143 = por %p141, %p142
    %p144 = scmp.ne.s32.totalorder %s135, %s136
    %p145 = scmp.eq.s32.totalorder %s22, 0
    %p146 = por %p144, %p145
    %p147 = scmp.ne.s32.totalorder %s135, %s136
    %p148 = scmp.eq.s32.totalorder %s23, 3
    %p149 = por %p147, %p148
    %p151 = scmp.ne.s32.totalorder %s136, %s150
    %p152 = scmp.eq.s32.totalorder %s23, 0
    %p153 = por %p151, %p152
    %s155 = sadd.s32 %s154, 1
    %p158 = scmp.eq.s32.totalorder %s17, 3
    %p159 = scmp.ne.s32.totalorder %s154, %s156
    %p160 = scmp.eq.s32.totalorder %s17, 0
    %p161 = por %p159, %p160
    %p162 = scmp.ne.s32.totalorder %s154, %s156
    %p163 = scmp.eq.s32.totalorder %s22, 3
    %p164 = por %p162, %p163
    %p165 = scmp.ne.s32.totalorder %s156, %s157
    %p166 = scmp.eq.s32.totalorder %s22, 0
    %p167 = por %p165, %p166
    %p168 = scmp.ne.s32.totalorder %s156, %s157
    %p169 = scmp.eq.s32.totalorder %s23, 3
    %p170 = por %p168, %p169
    %p172 = scmp.ne.s32.totalorder %s157, %s171
    %p173 = scmp.eq.s32.totalorder %s23, 0
    %p174 = por %p172, %p173
    %s176 = sadd.s32 %s175, 1
    %p179 = scmp.eq.s32.totalorder %s17, 3
    %p180 = scmp.ne.s32.totalorder %s175, %s177
    %p181 = scmp.eq.s32.totalorder %s17, 0
    %p182 = por %p180, %p181
    %p183 = scmp.ne.s32.totalorder %s175, %s177
    %p184 = scmp.eq.s32.totalorder %s22, 3
    %p185 = por %p183, %p184
    %p186 = scmp.ne.s32.totalorder %s177, %s178
    %p187 = scmp.eq.s32.totalorder %s22, 0
    %p188 = por %p186, %p187
    %p189 = scmp.ne.s32.totalorder %s177, %s178
    %p190 = scmp.eq.s32.totalorder %s23, 3
    %p191 = por %p189, %p190
    %p193 = scmp.ne.s32.totalorder %s178, %s192
    %p194 = scmp.eq.s32.totalorder %s23, 0
    %p195 = por %p193, %p194
    %s197 = sadd.s32 %s196, 1
    %p200 = scmp.eq.s32.totalorder %s17, 3
    %p201 = scmp.ne.s32.totalorder %s196, %s198
    %p202 = scmp.eq.s32.totalorder %s17, 0
    %p203 = por %p201, %p202
    %p204 = scmp.ne.s32.totalorder %s196, %s198
    %p205 = scmp.eq.s32.totalorder %s22, 3
    %p206 = por %p204, %p205
    %p207 = scmp.ne.s32.totalorder %s198, %s199
    %p208 = scmp.eq.s32.totalorder %s22, 0
    %p209 = por %p207, %p208
    %p210 = scmp.ne.s32.totalorder %s198, %s199
    %p211 = scmp.eq.s32.totalorder %s23, 3
    %p212 = por %p210, %p211
    %p214 = scmp.ne.s32.totalorder %s199, %s213
    %p215 = scmp.eq.s32.totalorder %s23, 0
    %p216 = por %p214, %p215
    %s218 = sadd.s32 %s217, 1
    %p221 = scmp.eq.s32.totalorder %s17, 3
    %p222 = scmp.ne.s32.totalorder %s217, %s219
    %p223 = scmp.eq.s32.totalorder %s17, 0
    %p224 = por %p222, %p223
    %p225 = scmp.ne.s32.totalorder %s217, %s219
    %p226 = scmp.eq.s32.totalorder %s22, 3
    %p227 = por %p225, %p226
    %p228 = scmp.ne.s32.totalorder %s219, %s220
    %p229 = scmp.eq.s32.totalorder %s22, 0
    %p230 = por %p228, %p229
    %p231 = scmp.ne.s32.totalorder %s219, %s220
    %p232 = scmp.eq.s32.totalorder %s23, 3
    %p233 = por %p231, %p232
    %p235 = scmp.ne.s32.totalorder %s220, %s234
    %p236 = scmp.eq.s32.totalorder %s23, 0
    %p237 = por %p235, %p236
    %s238 = ssub.s32 %s17, %s24
    %p239 = scmp.eq.s32.totalorder %s238, 0
    %s241 = sadd.s32 %s240, 1
    %s242 = scalar_select %p239, %s240, %s241
    %p245 = pneg %p239
    %p246 = scmp.eq.s32.totalorder %s17, 3
    %p247 = por %p245, %p246
    %p248 = scmp.ne.s32.totalorder %s240, %s243
    %p249 = scmp.eq.s32.totalorder %s17, 0
    %p250 = por %p248, %p249
    %p251 = scmp.ne.s32.totalorder %s240, %s243
    %p252 = scmp.eq.s32.totalorder %s22, 3
    %p253 = por %p251, %p252
    %p254 = scmp.ne.s32.totalorder %s243, %s244
    %p255 = scmp.eq.s32.totalorder %s22, 0
    %p256 = por %p254, %p255
    %p257 = scmp.ne.s32.totalorder %s243, %s244
    %p258 = scmp.eq.s32.totalorder %s23, 3
    %p259 = por %p257, %p258
    %p261 = scmp.ne.s32.totalorder %s244, %s260
    %p262 = scmp.eq.s32.totalorder %s23, 0
    %p263 = por %p261, %p262
    %s264 = ssub.s32 3, %s17
    %s265 = ssub.s32 3, %s24
    %s266 = ssub.s32 %s264, %s265
    %p267 = scmp.eq.s32.totalorder %s266, 0
    %s269 = sadd.s32 %s268, 1
    %s270 = scalar_select %p267, %s268, %s269
    %p273 = pneg %p267
    %p274 = scmp.eq.s32.totalorder %s17, 3
    %p275 = por %p273, %p274
    %p276 = scmp.ne.s32.totalorder %s268, %s271
    %p277 = scmp.eq.s32.totalorder %s17, 0
    %p278 = por %p276, %p277
    %p279 = scmp.ne.s32.totalorder %s268, %s271
    %p280 = scmp.eq.s32.totalorder %s22, 3
    %p281 = por %p279, %p280
    %p282 = scmp.ne.s32.totalorder %s271, %s272
    %p283 = scmp.eq.s32.totalorder %s22, 0
    %p284 = por %p282, %p283
    %p285 = scmp.ne.s32.totalorder %s271, %s272
    %p286 = scmp.eq.s32.totalorder %s23, 3
    %p287 = por %p285, %p286
    %p289 = scmp.ne.s32.totalorder %s272, %s288
    %p290 = scmp.eq.s32.totalorder %s23, 0
    %p291 = por %p289, %p290
    %p292 = scmp.le.s32.totalorder 1, %s17
    %p293 = scmp.lt.s32.totalorder %s17, 5
    %p294 = pnand %p292, %p293
    %p295 = pneg %p294
    // Predicated region
    $region9: #{my_lstm_forward.3} parent=5 // pred_check
      _
    $region10: #{my_lstm_forward.3} parent=5 // pred_check_branch
      %297 = sbr.rel (%p294) target = $region12
    $region11: #{my_lstm_forward.3} parent=5 // pred_region
      %s298 = ssub.s32 %s17, 1
      // Predicated region
      $region13: #{my_lstm_forward.3} parent=11 // pred_check
        %p299 = pneg %p146
      $region14: #{my_lstm_forward.3} parent=11 // pred_check_branch
        %301 = sbr.rel (%p299) target = $region16
      $region15: #{my_lstm_forward.3} parent=11 // pred_region
        _
      $region16: #{my_lstm_forward.3} parent=11 // pred_fallthru
        _
      // Predicated region
      $region17: #{my_lstm_forward.3} parent=11 // pred_check
        %p302 = pneg %p167
      $region18: #{my_lstm_forward.3} parent=11 // pred_check_branch
        %304 = sbr.rel (%p302) target = $region20
      $region19: #{my_lstm_forward.3} parent=11 // pred_region
        _
      $region20: #{my_lstm_forward.3} parent=11 // pred_fallthru
        _
      // Predicated region
      $region21: #{my_lstm_forward.3} parent=11 // pred_check
        %p305 = pneg %p188
      $region22: #{my_lstm_forward.3} parent=11 // pred_check_branch
        %307 = sbr.rel (%p305) target = $region24
      $region23: #{my_lstm_forward.3} parent=11 // pred_region
        _
      $region24: #{my_lstm_forward.3} parent=11 // pred_fallthru
        _
      // Predicated region
      $region25: #{my_lstm_forward.3} parent=11 // pred_check
        %p308 = pneg %p209
      $region26: #{my_lstm_forward.3} parent=11 // pred_check_branch
        %310 = sbr.rel (%p308) target = $region28
      $region27: #{my_lstm_forward.3} parent=11 // pred_region
        _
      $region28: #{my_lstm_forward.3} parent=11 // pred_fallthru
        _
      // Predicated region
      $region29: #{my_lstm_forward.3} parent=11 // pred_check
        %p311 = pneg %p230
      $region30: #{my_lstm_forward.3} parent=11 // pred_check_branch
        %313 = sbr.rel (%p311) target = $region32
      $region31: #{my_lstm_forward.3} parent=11 // pred_region
        _
      $region32: #{my_lstm_forward.3} parent=11 // pred_fallthru
        _
    $region12: #{my_lstm_forward.3} parent=5 // pred_fallthru
      _
    %p314 = scmp.lt.s32.totalorder %s17, 4
    // Predicated region
    $region33: #{my_lstm_forward.3} parent=5 // pred_check
      %p315 = pneg %p314
    $region34: #{my_lstm_forward.3} parent=5 // pred_check_branch
      %317 = sbr.rel (%p315) target = $region36
    $region35: #{my_lstm_forward.3} parent=5 // pred_region
      // Predicated region
      $region37: #{my_lstm_forward.3} parent=35 // pred_check
        %p318 = pneg %p37
      $region38: #{my_lstm_forward.3} parent=35 // pred_check_branch
        %320 = sbr.rel (%p318) target = $region40
      $region39: #{my_lstm_forward.3} parent=35 // pred_region
        %s321 = smul.u32 2, %s17
        %p322 = scmp.lt.s32.totalorder %s321, 7
        %s323 = scalar_select %p322, %s321, 7
        %s324 = smul.addr %s323, 4
        %s325 = smul.addr %s324, 4
        %s326 = scalar_lea.vmem %s0, %s325
        %s327 = smul.u32 2, %s17
      $region40: #{my_lstm_forward.3} parent=35 // pred_fallthru
        _
      // Predicated region
      $region41: #{my_lstm_forward.3} parent=35 // pred_check
        %p328 = pneg %p65
      $region42: #{my_lstm_forward.3} parent=35 // pred_check_branch
        %330 = sbr.rel (%p328) target = $region44
      $region43: #{my_lstm_forward.3} parent=35 // pred_region
        %s331 = ssub.s32 3, %s17
        %s332 = smul.u32 2, %s331
        %p333 = scmp.lt.s32.totalorder %s332, 7
        %s334 = scalar_select %p333, %s332, 7
        %s335 = smul.addr %s334, 4
        %s336 = smul.addr %s335, 4
        %s337 = scalar_lea.vmem %s1, %s336
        %s338 = ssub.s32 3, %s17
        %s339 = smul.u32 2, %s338
      $region44: #{my_lstm_forward.3} parent=35 // pred_fallthru
        _
      // Predicated region
      $region45: #{my_lstm_forward.3} parent=35 // pred_check
        %p340 = pneg %p91
      $region46: #{my_lstm_forward.3} parent=35 // pred_check_branch
        %342 = sbr.rel (%p340) target = $region48
      $region47: #{my_lstm_forward.3} parent=35 // pred_region
        %s343 = smul.u32 2, %s17
        %p344 = scmp.lt.s32.totalorder %s343, 7
        %s345 = scalar_select %p344, %s343, 7
        %s346 = smul.addr %s345, 4
        %s347 = scalar_lea.vmem %s2, %s346
        %s348 = smul.u32 2, %s17
      $region48: #{my_lstm_forward.3} parent=35 // pred_fallthru
        _
      // Predicated region
      $region49: #{my_lstm_forward.3} parent=35 // pred_check
        %p349 = pneg %p119
      $region50: #{my_lstm_forward.3} parent=35 // pred_check_branch
        %351 = sbr.rel (%p349) target = $region52
      $region51: #{my_lstm_forward.3} parent=35 // pred_region
        %s352 = ssub.s32 3, %s17
        %s353 = smul.u32 2, %s352
        %p354 = scmp.lt.s32.totalorder %s353, 7
        %s355 = scalar_select %p354, %s353, 7
        %s356 = smul.addr %s355, 4
        %s357 = scalar_lea.vmem %s3, %s356
        %s358 = ssub.s32 3, %s17
        %s359 = smul.u32 2, %s358
      $region52: #{my_lstm_forward.3} parent=35 // pred_fallthru
        _
    $region36: #{my_lstm_forward.3} parent=5 // pred_fallthru
      _
    %p360 = scmp.le.s32.totalorder 1, %s17
    %p361 = scmp.lt.s32.totalorder %s17, 5
    %p362 = pnand %p360, %p361
    %p363 = pneg %p362
    // Predicated region
    $region53: #{my_lstm_forward.3} parent=5 // pred_check
      _
    $region54: #{my_lstm_forward.3} parent=5 // pred_check_branch
      %365 = sbr.rel (%p362) target = $region56
    $region55: #{my_lstm_forward.3} parent=5 // pred_region
      %s366 = ssub.s32 %s17, 1
      %s367 = smul.u32 2, %s22
      %p368 = scmp.lt.s32.totalorder %s367, 7
      %s369 = scalar_select %p368, %s367, 7
      %s370 = smul.addr %s369, 4
      %s371 = smul.addr %s370, 4
      %s372 = scalar_lea.vmem %s0, %s371
      %p373 = pneg %p43
      %p374 = pneg %p40
      %s375 = ssub.s32 3, %s22
      %s376 = smul.u32 2, %s375
      %p377 = scmp.lt.s32.totalorder %s376, 7
      %s378 = scalar_select %p377, %s376, 7
      %s379 = smul.addr %s378, 4
      %s380 = smul.addr %s379, 4
      %s381 = scalar_lea.vmem %s1, %s380
      %p382 = pneg %p71
      %p383 = pneg %p68
      %s384 = smul.u32 2, %s22
      %p385 = scmp.lt.s32.totalorder %s384, 7
      %s386 = scalar_select %p385, %s384, 7
      %s387 = smul.addr %s386, 4
      %s388 = scalar_lea.vmem %s2, %s387
      %p389 = pneg %p97
      %p390 = pneg %p94
      %s391 = ssub.s32 3, %s22
      %s392 = smul.u32 2, %s391
      %p393 = scmp.lt.s32.totalorder %s392, 7
      %s394 = scalar_select %p393, %s392, 7
      %s395 = smul.addr %s394, 4
      %s396 = scalar_lea.vmem %s3, %s395
      %p397 = pneg %p125
      %p398 = pneg %p122
      %p399 = pneg %p146
      %p400 = pneg %p143
      %p401 = pneg %p167
      %p402 = pneg %p164
      %p403 = pneg %p188
      %p404 = pneg %p185
      %p405 = pneg %p209
      %p406 = pneg %p206
      %p407 = pneg %p230
      %p408 = pneg %p227
      %p409 = pneg %p256
      %p410 = pneg %p253
      %s411 = smul.u32 2, %s22
      %p412 = scmp.lt.s32.totalorder %s411, 7
      %s413 = scalar_select %p412, %s411, 7
      %s414 = smul.addr %s413, 8
      %s415 = scalar_lea.vmem %s9, %s414
      %p416 = pneg %p284
      %p417 = pneg %p281
      %s418 = ssub.s32 3, %s22
      %s419 = smul.u32 2, %s418
      %p420 = scmp.lt.s32.totalorder %s419, 7
      %s421 = scalar_select %p420, %s419, 7
      %s422 = smul.addr %s421, 8
      %s423 = scalar_lea.vmem %s10, %s422
      %s424 = smul.u32 2, %s22
      %p425 = scmp.lt.s32.totalorder %s424, 7
      %s426 = scalar_select %p425, %s424, 7
      %s427 = smul.addr %s426, 4
      %s428 = smul.addr %s427, 4
      %s429 = scalar_lea.vmem %s0, %s428
      %s430 = smul.u32 2, %s22
      %s431 = ssub.s32 3, %s22
      %s432 = smul.u32 2, %s431
      %p433 = scmp.lt.s32.totalorder %s432, 7
      %s434 = scalar_select %p433, %s432, 7
      %s435 = smul.addr %s434, 4
      %s436 = smul.addr %s435, 4
      %s437 = scalar_lea.vmem %s1, %s436
      %s438 = ssub.s32 3, %s22
      %s439 = smul.u32 2, %s438
      %s440 = smul.u32 2, %s22
      %p441 = scmp.lt.s32.totalorder %s440, 7
      %s442 = scalar_select %p441, %s440, 7
      %s443 = smul.addr %s442, 4
      %s444 = scalar_lea.vmem %s2, %s443
      %s445 = smul.u32 2, %s22
      %s446 = ssub.s32 3, %s22
      %s447 = smul.u32 2, %s446
      %p448 = scmp.lt.s32.totalorder %s447, 7
      %s449 = scalar_select %p448, %s447, 7
      %s450 = smul.addr %s449, 4
      %s451 = scalar_lea.vmem %s3, %s450
      %s452 = ssub.s32 3, %s22
      %s453 = smul.u32 2, %s452
      %s454 = smul.u32 2, %s22
      %p455 = scmp.lt.s32.totalorder %s454, 7
      %s456 = scalar_select %p455, %s454, 7
      %s457 = smul.addr %s456, 8
      %s458 = scalar_lea.vmem %s9, %s457
      %s459 = smul.u32 2, %s22
      %s460 = ssub.s32 3, %s22
      %s461 = smul.u32 2, %s460
      %p462 = scmp.lt.s32.totalorder %s461, 7
      %s463 = scalar_select %p462, %s461, 7
      %s464 = smul.addr %s463, 8
      %s465 = scalar_lea.vmem %s10, %s464
      %s466 = ssub.s32 3, %s22
      %s467 = smul.u32 2, %s466
      %p469 = scmp.eq.s32.totalorder %s22, 0
      // Predicated region
      $region57: #{my_lstm_forward.3} parent=55 // pred_check
        %p470 = pneg %p469
      $region58: #{my_lstm_forward.3} parent=55 // pred_check_branch
        %472 = sbr.rel (%p470) target = $region60
      $region59: #{my_lstm_forward.3} parent=55 // pred_region
        %v473 = vld [vmem:[%s4] sm:$0xff]
        %474 = vst [vmem:[#allocation2] sm:$0xff] %v473
        %s475 = scalar_lea.vmem [#allocation2], 8
        %476 = vst [vmem:[%s475] sm:$0xff] %v473
        %477 = vst [vmem:[#allocation3] sm:$0xff] 0.0
        %478 = vst [vmem:[#allocation3 + $0x8] sm:$0xff] 0.0
      $region60: #{my_lstm_forward.3} parent=55 // pred_fallthru
        _
      %v479 = vld [vmem:[#allocation2] sm:$0xff]
      %v480 = vld [vmem:[#allocation3] sm:$0xff]
      %s481 = scalar_lea.vmem [#allocation2], 8
      %v482 = vld [vmem:[%s481] sm:$0xff]
      %s483 = scalar_lea.vmem [#allocation3], 8
      %v484 = vld [vmem:[%s483] sm:$0xff]
      %v485 = vld [vmem:[%s429] sm:$0xff]
      %v486 = vld [vmem:[%s429 + $0x8] sm:$0xff]
      %v487 = vld [vmem:[%s444] sm:$0xf]
      %v488 = vunpack.c.l.bf16 %v485
      %v489 = vunpack.c.h.bf16 %v485
      %v490 = vunpack.c.l.bf16 %v486
      %v491 = vunpack.c.h.bf16 %v486
      %v492 = vld [vmem:[%s7] sm:$0xff]
      %v493 = vld [vmem:[%s7 + $0x8] sm:$0xff]
      %v494 = vld [vmem:[%s7 + $0x10] sm:$0xff]
      %v495 = vld [vmem:[%s7 + $0x18] sm:$0xff]
      %v496 = vadd.f32 %v488, %v492
      %v497 = vadd.f32 %v489, %v493
      %v498 = vadd.f32 %v490, %v494
      %v499 = vadd.f32 %v491, %v495
      %v500 = vpack.c.bf16 %v479, %v479
      %v501 = vld [vmem:[%s5] sm:$0xff]
      %v502 = vld [vmem:[%s5 + $0x8] sm:$0xff]
      %v503 = vld [vmem:[%s5 + $0x10] sm:$0xff]
      %v504 = vld [vmem:[%s5 + $0x18] sm:$0xff]
      %v505 = vld [vmem:[%s5 + $0x20] sm:$0xff]
      %v506 = vld [vmem:[%s5 + $0x28] sm:$0xff]
      %v507 = vld [vmem:[%s5 + $0x30] sm:$0xff]
      %v508 = vld [vmem:[%s5 + $0x38] sm:$0xff]
      %v509 = vld [vmem:[%s5 + $0x40] sm:$0xff]
      %v510 = vld [vmem:[%s5 + $0x48] sm:$0xff]
      %v511 = vld [vmem:[%s5 + $0x50] sm:$0xff]
      %v512 = vld [vmem:[%s5 + $0x58] sm:$0xff]
      %v513 = vld [vmem:[%s5 + $0x60] sm:$0xff]
      %v514 = vld [vmem:[%s5 + $0x68] sm:$0xff]
      %v515 = vld [vmem:[%s5 + $0x70] sm:$0xff]
      %v516 = vld [vmem:[%s5 + $0x78] sm:$0xff]
      %v517 = vld [vmem:[%s5 + $0x80] sm:$0xff]
      %v518 = vld [vmem:[%s5 + $0x88] sm:$0xff]
      %v519 = vld [vmem:[%s5 + $0x90] sm:$0xff]
      %v520 = vld [vmem:[%s5 + $0x98] sm:$0xff]
      %v521 = vld [vmem:[%s5 + $0xa0] sm:$0xff]
      %v522 = vld [vmem:[%s5 + $0xa8] sm:$0xff]
      %v523 = vld [vmem:[%s5 + $0xb0] sm:$0xff]
      %v524 = vld [vmem:[%s5 + $0xb8] sm:$0xff]
      %v525 = vld [vmem:[%s5 + $0xc0] sm:$0xff]
      %v526 = vld [vmem:[%s5 + $0xc8] sm:$0xff]
      %v527 = vld [vmem:[%s5 + $0xd0] sm:$0xff]
      %v528 = vld [vmem:[%s5 + $0xd8] sm:$0xff]
      %v529 = vld [vmem:[%s5 + $0xe0] sm:$0xff]
      %v530 = vld [vmem:[%s5 + $0xe8] sm:$0xff]
      %v531 = vld [vmem:[%s5 + $0xf0] sm:$0xff]
      %v532 = vld [vmem:[%s5 + $0xf8] sm:$0xff]
      %v565 = vunpack.c.l.b16 %v501
      %v566 = vunpack.c.h.b16 %v501
      %v567 = vunpack.c.l.b16 %v502
      %v568 = vunpack.c.h.b16 %v502
      %v569 = vunpack.c.l.b16 %v503
      %v570 = vunpack.c.h.b16 %v503
      %v571 = vunpack.c.l.b16 %v504
      %v572 = vunpack.c.h.b16 %v504
      %v573 = vunpack.c.l.b16 %v505
      %v574 = vunpack.c.h.b16 %v505
      %v575 = vunpack.c.l.b16 %v506
      %v576 = vunpack.c.h.b16 %v506
      %v577 = vunpack.c.l.b16 %v507
      %v578 = vunpack.c.h.b16 %v507
      %v579 = vunpack.c.l.b16 %v508
      %v580 = vunpack.c.h.b16 %v508
      %v581 = vunpack.c.l.b16 %v509
      %v582 = vunpack.c.h.b16 %v509
      %v583 = vunpack.c.l.b16 %v510
      %v584 = vunpack.c.h.b16 %v510
      %v585 = vunpack.c.l.b16 %v511
      %v586 = vunpack.c.h.b16 %v511
      %v587 = vunpack.c.l.b16 %v512
      %v588 = vunpack.c.h.b16 %v512
      %v589 = vunpack.c.l.b16 %v513
      %v590 = vunpack.c.h.b16 %v513
      %v591 = vunpack.c.l.b16 %v514
      %v592 = vunpack.c.h.b16 %v514
      %v593 = vunpack.c.l.b16 %v515
      %v594 = vunpack.c.h.b16 %v515
      %v595 = vunpack.c.l.b16 %v516
      %v596 = vunpack.c.h.b16 %v516
      %v597 = vunpack.c.l.b16 %v517
      %v598 = vunpack.c.h.b16 %v517
      %v599 = vunpack.c.l.b16 %v518
      %v600 = vunpack.c.h.b16 %v518
      %v601 = vunpack.c.l.b16 %v519
      %v602 = vunpack.c.h.b16 %v519
      %v603 = vunpack.c.l.b16 %v520
      %v604 = vunpack.c.h.b16 %v520
      %v605 = vunpack.c.l.b16 %v521
      %v606 = vunpack.c.h.b16 %v521
      %v607 = vunpack.c.l.b16 %v522
      %v608 = vunpack.c.h.b16 %v522
      %v609 = vunpack.c.l.b16 %v523
      %v610 = vunpack.c.h.b16 %v523
      %v611 = vunpack.c.l.b16 %v524
      %v612 = vunpack.c.h.b16 %v524
      %v613 = vunpack.c.l.b16 %v525
      %v614 = vunpack.c.h.b16 %v525
      %v615 = vunpack.c.l.b16 %v526
      %v616 = vunpack.c.h.b16 %v526
      %v617 = vunpack.c.l.b16 %v527
      %v618 = vunpack.c.h.b16 %v527
      %v619 = vunpack.c.l.b16 %v528
      %v620 = vunpack.c.h.b16 %v528
      %v621 = vunpack.c.l.b16 %v529
      %v622 = vunpack.c.h.b16 %v529
      %v623 = vunpack.c.l.b16 %v530
      %v624 = vunpack.c.h.b16 %v530
      %v625 = vunpack.c.l.b16 %v531
      %v626 = vunpack.c.h.b16 %v531
      %v627 = vunpack.c.l.b16 %v532
      %v628 = vunpack.c.h.b16 %v532
      %v629 = vpack.c.b16 %v569, %v565
      %v630 = vpack.c.b16 %v570, %v566
      %v631 = vpack.c.b16 %v571, %v567
      %v632 = vpack.c.b16 %v572, %v568
      %v633 = vpack.c.b16 %v577, %v573
      %v634 = vpack.c.b16 %v578, %v574
      %v635 = vpack.c.b16 %v579, %v575
      %v636 = vpack.c.b16 %v580, %v576
      %v637 = vpack.c.b16 %v585, %v581
      %v638 = vpack.c.b16 %v586, %v582
      %v639 = vpack.c.b16 %v587, %v583
      %v640 = vpack.c.b16 %v588, %v584
      %v641 = vpack.c.b16 %v593, %v589
      %v642 = vpack.c.b16 %v594, %v590
      %v643 = vpack.c.b16 %v595, %v591
      %v644 = vpack.c.b16 %v596, %v592
      %v645 = vpack.c.b16 %v601, %v597
      %v646 = vpack.c.b16 %v602, %v598
      %v647 = vpack.c.b16 %v603, %v599
      %v648 = vpack.c.b16 %v604, %v600
      %v649 = vpack.c.b16 %v609, %v605
      %v650 = vpack.c.b16 %v610, %v606
      %v651 = vpack.c.b16 %v611, %v607
      %v652 = vpack.c.b16 %v612, %v608
      %v653 = vpack.c.b16 %v617, %v613
      %v654 = vpack.c.b16 %v618, %v614
      %v655 = vpack.c.b16 %v619, %v615
      %v656 = vpack.c.b16 %v620, %v616
      %v657 = vpack.c.b16 %v625, %v621
      %v658 = vpack.c.b16 %v626, %v622
      %v659 = vpack.c.b16 %v627, %v623
      %v660 = vpack.c.b16 %v628, %v624
      %693 = vmatprep.subr.bf16.mxu0 %v630
      %694 = vmatpush1.bf16.msra.mxu0 %v629
      %695 = vmatprep.subr.bf16.mxu0 %v634
      %696 = vmatpush1.bf16.msra.mxu0 %v633
      %697 = vmatprep.subr.bf16.mxu0 %v638
      %698 = vmatpush1.bf16.msra.mxu0 %v637
      %699 = vmatprep.subr.bf16.mxu0 %v642
      %700 = vmatpush1.bf16.msra.mxu0 %v641
      %701 = vmatprep.subr.bf16.mxu0 %v646
      %702 = vmatpush1.bf16.msra.mxu0 %v645
      %703 = vmatprep.subr.bf16.mxu0 %v650
      %704 = vmatpush1.bf16.msra.mxu0 %v649
      %705 = vmatprep.subr.bf16.mxu0 %v654
      %706 = vmatpush1.bf16.msra.mxu0 %v653
      %707 = vmatprep.subr.bf16.mxu0 %v658
      %708 = vmatpush1.bf16.msra.mxu0 %v657
      %709 = vmatprep.subr.bf16.mxu0 0
      %710 = vmatpush1.bf16.msra.mxu0 0
      %711 = vmatprep.subr.bf16.mxu0 0
      %712 = vmatpush1.bf16.msra.mxu0 0
      %713 = vmatprep.subr.bf16.mxu0 0
      %714 = vmatpush1.bf16.msra.mxu0 0
      %715 = vmatprep.subr.bf16.mxu0 0
      %716 = vmatpush1.bf16.msra.mxu0 0
      %717 = vmatprep.subr.bf16.mxu0 0
      %718 = vmatpush1.bf16.msra.mxu0 0
      %719 = vmatprep.subr.bf16.mxu0 0
      %720 = vmatpush1.bf16.msra.mxu0 0
      %721 = vmatprep.subr.bf16.mxu0 0
      %722 = vmatpush1.bf16.msra.mxu0 0
      %723 = vmatprep.subr.bf16.mxu0 0
      %724 = vmatpush1.bf16.msra.mxu0 0
      %725 = vmatprep.mubr.bf16.mxu0 0
      %726 = vmatmul.mubr.bf16.gmra.mrb[0].mxu0 %v500
      %v727 = vpop.f32.mrb[0].mxu0
      %v728 = vadd.f32 0.0, %v727
      %v729 = vpop.f32.mrb[0].mxu0
      %v730 = vadd.f32 0.0, %v729
      %v731 = vpop.f32.mrb[0].mxu0
      %v732 = vpop.f32.mrb[0].mxu0
      %733 = vdwg.mxu0
      %734 = vmatprep.subr.bf16.mxu0 %v632
      %735 = vmatpush1.bf16.msra.mxu0 %v631
      %736 = vmatprep.subr.bf16.mxu0 %v636
      %737 = vmatpush1.bf16.msra.mxu0 %v635
      %738 = vmatprep.subr.bf16.mxu0 %v640
      %739 = vmatpush1.bf16.msra.mxu0 %v639
      %740 = vmatprep.subr.bf16.mxu0 %v644
      %741 = vmatpush1.bf16.msra.mxu0 %v643
      %742 = vmatprep.subr.bf16.mxu0 %v648
      %743 = vmatpush1.bf16.msra.mxu0 %v647
      %744 = vmatprep.subr.bf16.mxu0 %v652
      %745 = vmatpush1.bf16.msra.mxu0 %v651
      %746 = vmatprep.subr.bf16.mxu0 %v656
      %747 = vmatpush1.bf16.msra.mxu0 %v655
      %748 = vmatprep.subr.bf16.mxu0 %v660
      %749 = vmatpush1.bf16.msra.mxu0 %v659
      %750 = vmatprep.subr.bf16.mxu0 0
      %751 = vmatpush1.bf16.msra.mxu0 0
      %752 = vmatprep.subr.bf16.mxu0 0
      %753 = vmatpush1.bf16.msra.mxu0 0
      %754 = vmatprep.subr.bf16.mxu0 0
      %755 = vmatpush1.bf16.msra.mxu0 0
      %756 = vmatprep.subr.bf16.mxu0 0
      %757 = vmatpush1.bf16.msra.mxu0 0
      %758 = vmatprep.subr.bf16.mxu0 0
      %759 = vmatpush1.bf16.msra.mxu0 0
      %760 = vmatprep.subr.bf16.mxu0 0
      %761 = vmatpush1.bf16.msra.mxu0 0
      %762 = vmatprep.subr.bf16.mxu0 0
      %763 = vmatpush1.bf16.msra.mxu0 0
      %764 = vmatprep.subr.bf16.mxu0 0
      %765 = vmatpush1.bf16.msra.mxu0 0
      %766 = vmatprep.mubr.bf16.mxu0 0
      %767 = vmatmul.mubr.bf16.gmra.mrb[0].mxu0 %v500
      %v768 = vpop.f32.mrb[0].mxu0
      %v769 = vadd.f32 0.0, %v768
      %v770 = vpop.f32.mrb[0].mxu0
      %v771 = vadd.f32 0.0, %v770
      %v772 = vpop.f32.mrb[0].mxu0
      %v773 = vpop.f32.mrb[0].mxu0
      %774 = vdwg.mxu0
      %v775 = vadd.f32 %v496, %v728
      %v776 = vadd.f32 %v497, %v730
      %v777 = vadd.f32 %v498, %v769
      %v778 = vadd.f32 %v499, %v771
      %v779 = vxor.u32 %v775, 2147483648
      %v780 = vxor.u32 %v776, 2147483648
      %v781 = vxor.u32 %v777, 2147483648
      %v782 = vmul.f32 %v779, 1.442695
      %v783 = vpow.pop %v782
      %v784 = vmul.f32 %v780, 1.442695
      %v785 = vpow.pop %v784
      %v786 = vmul.f32 %v781, 1.442695
      %v787 = vpow.pop %v786
      %v788 = vadd.f32 %v783, 1.0
      %v789 = vadd.f32 %v785, 1.0
      %v790 = vadd.f32 %v787, 1.0
      %v791 = vrcp.pop %v788
      %v792 = vmul.f32 1.0, %v791
      %v793 = vrcp.pop %v789
      %v794 = vmul.f32 1.0, %v793
      %v795 = vrcp.pop %v790
      %v796 = vmul.f32 1.0, %v795
      %v797 = vtanh.pop %v778
      %v798 = vmul.f32 %v794, %v480
      %v799 = vmul.f32 %v792, %v797
      %v800 = vadd.f32 %v798, %v799
      %v801 = vtanh.pop %v800
      %v802 = vmul.f32 %v796, %v801
      %v803 = vunpack.c.l.bf16 %v487
      %v804 = vmul.f32 %v802, %v803
      %v805 = vmul.f32 %v800, %v803
      %806 = vst [vmem:[%s458] sm:$0xff] %v804
      %s807 = scalar_lea.vmem %s437, 16
      %v808 = vld [vmem:[%s807] sm:$0xff]
      %v809 = vld [vmem:[%s807 + $0x8] sm:$0xff]
      %s810 = scalar_lea.vmem %s451, 4
      %v811 = vld [vmem:[%s810] sm:$0xf]
      %v812 = vunpack.c.l.bf16 %v808
      %v813 = vunpack.c.h.bf16 %v808
      %v814 = vunpack.c.l.bf16 %v809
      %v815 = vunpack.c.h.bf16 %v809
      %v816 = vld [vmem:[%s8] sm:$0xff]
      %v817 = vld [vmem:[%s8 + $0x8] sm:$0xff]
      %v818 = vld [vmem:[%s8 + $0x10] sm:$0xff]
      %v819 = vld [vmem:[%s8 + $0x18] sm:$0xff]
      %v820 = vadd.f32 %v812, %v816
      %v821 = vadd.f32 %v813, %v817
      %v822 = vadd.f32 %v814, %v818
      %v823 = vadd.f32 %v815, %v819
      %v824 = vpack.c.bf16 %v482, %v482
      %v825 = vld [vmem:[%s6] sm:$0xff]
      %v826 = vld [vmem:[%s6 + $0x8] sm:$0xff]
      %v827 = vld [vmem:[%s6 + $0x10] sm:$0xff]
      %v828 = vld [vmem:[%s6 + $0x18] sm:$0xff]
      %v829 = vld [vmem:[%s6 + $0x20] sm:$0xff]
      %v830 = vld [vmem:[%s6 + $0x28] sm:$0xff]
      %v831 = vld [vmem:[%s6 + $0x30] sm:$0xff]
      %v832 = vld [vmem:[%s6 + $0x38] sm:$0xff]
      %v833 = vld [vmem:[%s6 + $0x40] sm:$0xff]
      %v834 = vld [vmem:[%s6 + $0x48] sm:$0xff]
      %v835 = vld [vmem:[%s6 + $0x50] sm:$0xff]
      %v836 = vld [vmem:[%s6 + $0x58] sm:$0xff]
      %v837 = vld [vmem:[%s6 + $0x60] sm:$0xff]
      %v838 = vld [vmem:[%s6 + $0x68] sm:$0xff]
      %v839 = vld [vmem:[%s6 + $0x70] sm:$0xff]
      %v840 = vld [vmem:[%s6 + $0x78] sm:$0xff]
      %v841 = vld [vmem:[%s6 + $0x80] sm:$0xff]
      %v842 = vld [vmem:[%s6 + $0x88] sm:$0xff]
      %v843 = vld [vmem:[%s6 + $0x90] sm:$0xff]
      %v844 = vld [vmem:[%s6 + $0x98] sm:$0xff]
      %v845 = vld [vmem:[%s6 + $0xa0] sm:$0xff]
      %v846 = vld [vmem:[%s6 + $0xa8] sm:$0xff]
      %v847 = vld [vmem:[%s6 + $0xb0] sm:$0xff]
      %v848 = vld [vmem:[%s6 + $0xb8] sm:$0xff]
      %v849 = vld [vmem:[%s6 + $0xc0] sm:$0xff]
      %v850 = vld [vmem:[%s6 + $0xc8] sm:$0xff]
      %v851 = vld [vmem:[%s6 + $0xd0] sm:$0xff]
      %v852 = vld [vmem:[%s6 + $0xd8] sm:$0xff]
      %v853 = vld [vmem:[%s6 + $0xe0] sm:$0xff]
      %v854 = vld [vmem:[%s6 + $0xe8] sm:$0xff]
      %v855 = vld [vmem:[%s6 + $0xf0] sm:$0xff]
      %v856 = vld [vmem:[%s6 + $0xf8] sm:$0xff]
      %v889 = vunpack.c.l.b16 %v825
      %v890 = vunpack.c.h.b16 %v825
      %v891 = vunpack.c.l.b16 %v826
      %v892 = vunpack.c.h.b16 %v826
      %v893 = vunpack.c.l.b16 %v827
      %v894 = vunpack.c.h.b16 %v827
      %v895 = vunpack.c.l.b16 %v828
      %v896 = vunpack.c.h.b16 %v828
      %v897 = vunpack.c.l.b16 %v829
      %v898 = vunpack.c.h.b16 %v829
      %v899 = vunpack.c.l.b16 %v830
      %v900 = vunpack.c.h.b16 %v830
      %v901 = vunpack.c.l.b16 %v831
      %v902 = vunpack.c.h.b16 %v831
      %v903 = vunpack.c.l.b16 %v832
      %v904 = vunpack.c.h.b16 %v832
      %v905 = vunpack.c.l.b16 %v833
      %v906 = vunpack.c.h.b16 %v833
      %v907 = vunpack.c.l.b16 %v834
      %v908 = vunpack.c.h.b16 %v834
      %v909 = vunpack.c.l.b16 %v835
      %v910 = vunpack.c.h.b16 %v835
      %v911 = vunpack.c.l.b16 %v836
      %v912 = vunpack.c.h.b16 %v836
      %v913 = vunpack.c.l.b16 %v837
      %v914 = vunpack.c.h.b16 %v837
      %v915 = vunpack.c.l.b16 %v838
      %v916 = vunpack.c.h.b16 %v838
      %v917 = vunpack.c.l.b16 %v839
      %v918 = vunpack.c.h.b16 %v839
      %v919 = vunpack.c.l.b16 %v840
      %v920 = vunpack.c.h.b16 %v840
      %v921 = vunpack.c.l.b16 %v841
      %v922 = vunpack.c.h.b16 %v841
      %v923 = vunpack.c.l.b16 %v842
      %v924 = vunpack.c.h.b16 %v842
      %v925 = vunpack.c.l.b16 %v843
      %v926 = vunpack.c.h.b16 %v843
      %v927 = vunpack.c.l.b16 %v844
      %v928 = vunpack.c.h.b16 %v844
      %v929 = vunpack.c.l.b16 %v845
      %v930 = vunpack.c.h.b16 %v845
      %v931 = vunpack.c.l.b16 %v846
      %v932 = vunpack.c.h.b16 %v846
      %v933 = vunpack.c.l.b16 %v847
      %v934 = vunpack.c.h.b16 %v847
      %v935 = vunpack.c.l.b16 %v848
      %v936 = vunpack.c.h.b16 %v848
      %v937 = vunpack.c.l.b16 %v849
      %v938 = vunpack.c.h.b16 %v849
      %v939 = vunpack.c.l.b16 %v850
      %v940 = vunpack.c.h.b16 %v850
      %v941 = vunpack.c.l.b16 %v851
      %v942 = vunpack.c.h.b16 %v851
      %v943 = vunpack.c.l.b16 %v852
      %v944 = vunpack.c.h.b16 %v852
      %v945 = vunpack.c.l.b16 %v853
      %v946 = vunpack.c.h.b16 %v853
      %v947 = vunpack.c.l.b16 %v854
      %v948 = vunpack.c.h.b16 %v854
      %v949 = vunpack.c.l.b16 %v855
      %v950 = vunpack.c.h.b16 %v855
      %v951 = vunpack.c.l.b16 %v856
      %v952 = vunpack.c.h.b16 %v856
      %v953 = vpack.c.b16 %v893, %v889
      %v954 = vpack.c.b16 %v894, %v890
      %v955 = vpack.c.b16 %v895, %v891
      %v956 = vpack.c.b16 %v896, %v892
      %v957 = vpack.c.b16 %v901, %v897
      %v958 = vpack.c.b16 %v902, %v898
      %v959 = vpack.c.b16 %v903, %v899
      %v960 = vpack.c.b16 %v904, %v900
      %v961 = vpack.c.b16 %v909, %v905
      %v962 = vpack.c.b16 %v910, %v906
      %v963 = vpack.c.b16 %v911, %v907
      %v964 = vpack.c.b16 %v912, %v908
      %v965 = vpack.c.b16 %v917, %v913
      %v966 = vpack.c.b16 %v918, %v914
      %v967 = vpack.c.b16 %v919, %v915
      %v968 = vpack.c.b16 %v920, %v916
      %v969 = vpack.c.b16 %v925, %v921
      %v970 = vpack.c.b16 %v926, %v922
      %v971 = vpack.c.b16 %v927, %v923
      %v972 = vpack.c.b16 %v928, %v924
      %v973 = vpack.c.b16 %v933, %v929
      %v974 = vpack.c.b16 %v934, %v930
      %v975 = vpack.c.b16 %v935, %v931
      %v976 = vpack.c.b16 %v936, %v932
      %v977 = vpack.c.b16 %v941, %v937
      %v978 = vpack.c.b16 %v942, %v938
      %v979 = vpack.c.b16 %v943, %v939
      %v980 = vpack.c.b16 %v944, %v940
      %v981 = vpack.c.b16 %v949, %v945
      %v982 = vpack.c.b16 %v950, %v946
      %v983 = vpack.c.b16 %v951, %v947
      %v984 = vpack.c.b16 %v952, %v948
      %1017 = vmatprep.subr.bf16.mxu0 %v954
      %1018 = vmatpush1.bf16.msra.mxu0 %v953
      %1019 = vmatprep.subr.bf16.mxu0 %v958
      %1020 = vmatpush1.bf16.msra.mxu0 %v957
      %1021 = vmatprep.subr.bf16.mxu0 %v962
      %1022 = vmatpush1.bf16.msra.mxu0 %v961
      %1023 = vmatprep.subr.bf16.mxu0 %v966
      %1024 = vmatpush1.bf16.msra.mxu0 %v965
      %1025 = vmatprep.subr.bf16.mxu0 %v970
      %1026 = vmatpush1.bf16.msra.mxu0 %v969
      %1027 = vmatprep.subr.bf16.mxu0 %v974
      %1028 = vmatpush1.bf16.msra.mxu0 %v973
      %1029 = vmatprep.subr.bf16.mxu0 %v978
      %1030 = vmatpush1.bf16.msra.mxu0 %v977
      %1031 = vmatprep.subr.bf16.mxu0 %v982
      %1032 = vmatpush1.bf16.msra.mxu0 %v981
      %1033 = vmatprep.subr.bf16.mxu0 0
      %1034 = vmatpush1.bf16.msra.mxu0 0
      %1035 = vmatprep.subr.bf16.mxu0 0
      %1036 = vmatpush1.bf16.msra.mxu0 0
      %1037 = vmatprep.subr.bf16.mxu0 0
      %1038 = vmatpush1.bf16.msra.mxu0 0
      %1039 = vmatprep.subr.bf16.mxu0 0
      %1040 = vmatpush1.bf16.msra.mxu0 0
      %1041 = vmatprep.subr.bf16.mxu0 0
      %1042 = vmatpush1.bf16.msra.mxu0 0
      %1043 = vmatprep.subr.bf16.mxu0 0
      %1044 = vmatpush1.bf16.msra.mxu0 0
      %1045 = vmatprep.subr.bf16.mxu0 0
      %1046 = vmatpush1.bf16.msra.mxu0 0
      %1047 = vmatprep.subr.bf16.mxu0 0
      %1048 = vmatpush1.bf16.msra.mxu0 0
      %1049 = vmatprep.mubr.bf16.mxu0 0
      %1050 = vmatmul.mubr.bf16.gmra.mrb[0].mxu0 %v824
      %v1051 = vpop.f32.mrb[0].mxu0
      %v1052 = vadd.f32 0.0, %v1051
      %v1053 = vpop.f32.mrb[0].mxu0
      %v1054 = vadd.f32 0.0, %v1053
      %v1055 = vpop.f32.mrb[0].mxu0
      %v1056 = vpop.f32.mrb[0].mxu0
      %1057 = vdwg.mxu0
      %1058 = vmatprep.subr.bf16.mxu0 %v956
      %1059 = vmatpush1.bf16.msra.mxu0 %v955
      %1060 = vmatprep.subr.bf16.mxu0 %v960
      %1061 = vmatpush1.bf16.msra.mxu0 %v959
      %1062 = vmatprep.subr.bf16.mxu0 %v964
      %1063 = vmatpush1.bf16.msra.mxu0 %v963
      %1064 = vmatprep.subr.bf16.mxu0 %v968
      %1065 = vmatpush1.bf16.msra.mxu0 %v967
      %1066 = vmatprep.subr.bf16.mxu0 %v972
      %1067 = vmatpush1.bf16.msra.mxu0 %v971
      %1068 = vmatprep.subr.bf16.mxu0 %v976
      %1069 = vmatpush1.bf16.msra.mxu0 %v975
      %1070 = vmatprep.subr.bf16.mxu0 %v980
      %1071 = vmatpush1.bf16.msra.mxu0 %v979
      %1072 = vmatprep.subr.bf16.mxu0 %v984
      %1073 = vmatpush1.bf16.msra.mxu0 %v983
      %1074 = vmatprep.subr.bf16.mxu0 0
      %1075 = vmatpush1.bf16.msra.mxu0 0
      %1076 = vmatprep.subr.bf16.mxu0 0
      %1077 = vmatpush1.bf16.msra.mxu0 0
      %1078 = vmatprep.subr.bf16.mxu0 0
      %1079 = vmatpush1.bf16.msra.mxu0 0
      %1080 = vmatprep.subr.bf16.mxu0 0
      %1081 = vmatpush1.bf16.msra.mxu0 0
      %1082 = vmatprep.subr.bf16.mxu0 0
      %1083 = vmatpush1.bf16.msra.mxu0 0
      %1084 = vmatprep.subr.bf16.mxu0 0
      %1085 = vmatpush1.bf16.msra.mxu0 0
      %1086 = vmatprep.subr.bf16.mxu0 0
      %1087 = vmatpush1.bf16.msra.mxu0 0
      %1088 = vmatprep.subr.bf16.mxu0 0
      %1089 = vmatpush1.bf16.msra.mxu0 0
      %1090 = vmatprep.mubr.bf16.mxu0 0
      %1091 = vmatmul.mubr.bf16.gmra.mrb[0].mxu0 %v824
      %v1092 = vpop.f32.mrb[0].mxu0
      %v1093 = vadd.f32 0.0, %v1092
      %v1094 = vpop.f32.mrb[0].mxu0
      %v1095 = vadd.f32 0.0, %v1094
      %v1096 = vpop.f32.mrb[0].mxu0
      %v1097 = vpop.f32.mrb[0].mxu0
      %1098 = vdwg.mxu0
      %v1099 = vadd.f32 %v820, %v1052
      %v1100 = vadd.f32 %v821, %v1054
      %v1101 = vadd.f32 %v822, %v1093
      %v1102 = vadd.f32 %v823, %v1095
      %v1103 = vxor.u32 %v1099, 2147483648
      %v1104 = vxor.u32 %v1100, 2147483648
      %v1105 = vxor.u32 %v1101, 2147483648
      %v1106 = vmul.f32 %v1103, 1.442695
      %v1107 = vpow.pop %v1106
      %v1108 = vmul.f32 %v1104, 1.442695
      %v1109 = vpow.pop %v1108
      %v1110 = vmul.f32 %v1105, 1.442695
      %v1111 = vpow.pop %v1110
      %v1112 = vadd.f32 %v1107, 1.0
      %v1113 = vadd.f32 %v1109, 1.0
      %v1114 = vadd.f32 %v1111, 1.0
      %v1115 = vrcp.pop %v1112
      %v1116 = vmul.f32 1.0, %v1115
      %v1117 = vrcp.pop %v1113
      %v1118 = vmul.f32 1.0, %v1117
      %v1119 = vrcp.pop %v1114
      %v1120 = vmul.f32 1.0, %v1119
      %v1121 = vtanh.pop %v1102
      %v1122 = vmul.f32 %v1118, %v484
      %v1123 = vmul.f32 %v1116, %v1121
      %v1124 = vadd.f32 %v1122, %v1123
      %v1125 = vtanh.pop %v1124
      %v1126 = vmul.f32 %v1120, %v1125
      %v1127 = vunpack.c.l.bf16 %v811
      %v1128 = vmul.f32 %v1126, %v1127
      %v1129 = vmul.f32 %v1124, %v1127
      %s1130 = scalar_lea.vmem %s465, 8
      %1131 = vst [vmem:[%s1130] sm:$0xff] %v1128
      %s1132 = scalar_lea.vmem %s429, 16
      %v1133 = vld [vmem:[%s1132] sm:$0xff]
      %v1134 = vld [vmem:[%s1132 + $0x8] sm:$0xff]
      %s1135 = scalar_lea.vmem %s444, 4
      %v1136 = vld [vmem:[%s1135] sm:$0xf]
      %v1137 = vunpack.c.l.bf16 %v1133
      %v1138 = vunpack.c.h.bf16 %v1133
      %v1139 = vunpack.c.l.bf16 %v1134
      %v1140 = vunpack.c.h.bf16 %v1134
      %v1141 = vld [vmem:[%s7] sm:$0xff]
      %v1142 = vld [vmem:[%s7 + $0x8] sm:$0xff]
      %v1143 = vld [vmem:[%s7 + $0x10] sm:$0xff]
      %v1144 = vld [vmem:[%s7 + $0x18] sm:$0xff]
      %v1145 = vadd.f32 %v1137, %v1141
      %v1146 = vadd.f32 %v1138, %v1142
      %v1147 = vadd.f32 %v1139, %v1143
      %v1148 = vadd.f32 %v1140, %v1144
      %v1149 = vpack.c.bf16 %v804, %v804
      %v1150 = vld [vmem:[%s5] sm:$0xff]
      %v1151 = vld [vmem:[%s5 + $0x8] sm:$0xff]
      %v1152 = vld [vmem:[%s5 + $0x10] sm:$0xff]
      %v1153 = vld [vmem:[%s5 + $0x18] sm:$0xff]
      %v1154 = vld [vmem:[%s5 + $0x20] sm:$0xff]
      %v1155 = vld [vmem:[%s5 + $0x28] sm:$0xff]
      %v1156 = vld [vmem:[%s5 + $0x30] sm:$0xff]
      %v1157 = vld [vmem:[%s5 + $0x38] sm:$0xff]
      %v1158 = vld [vmem:[%s5 + $0x40] sm:$0xff]
      %v1159 = vld [vmem:[%s5 + $0x48] sm:$0xff]
      %v1160 = vld [vmem:[%s5 + $0x50] sm:$0xff]
      %v1161 = vld [vmem:[%s5 + $0x58] sm:$0xff]
      %v1162 = vld [vmem:[%s5 + $0x60] sm:$0xff]
      %v1163 = vld [vmem:[%s5 + $0x68] sm:$0xff]
      %v1164 = vld [vmem:[%s5 + $0x70] sm:$0xff]
      %v1165 = vld [vmem:[%s5 + $0x78] sm:$0xff]
      %v1166 = vld [vmem:[%s5 + $0x80] sm:$0xff]
      %v1167 = vld [vmem:[%s5 + $0x88] sm:$0xff]
      %v1168 = vld [vmem:[%s5 + $0x90] sm:$0xff]
      %v1169 = vld [vmem:[%s5 + $0x98] sm:$0xff]
      %v1170 = vld [vmem:[%s5 + $0xa0] sm:$0xff]
      %v1171 = vld [vmem:[%s5 + $0xa8] sm:$0xff]
      %v1172 = vld [vmem:[%s5 + $0xb0] sm:$0xff]
      %v1173 = vld [vmem:[%s5 + $0xb8] sm:$0xff]
      %v1174 = vld [vmem:[%s5 + $0xc0] sm:$0xff]
      %v1175 = vld [vmem:[%s5 + $0xc8] sm:$0xff]
      %v1176 = vld [vmem:[%s5 + $0xd0] sm:$0xff]
      %v1177 = vld [vmem:[%s5 + $0xd8] sm:$0xff]
      %v1178 = vld [vmem:[%s5 + $0xe0] sm:$0xff]
      %v1179 = vld [vmem:[%s5 + $0xe8] sm:$0xff]
      %v1180 = vld [vmem:[%s5 + $0xf0] sm:$0xff]
      %v1181 = vld [vmem:[%s5 + $0xf8] sm:$0xff]
      %v1214 = vunpack.c.l.b16 %v1150
      %v1215 = vunpack.c.h.b16 %v1150
      %v1216 = vunpack.c.l.b16 %v1151
      %v1217 = vunpack.c.h.b16 %v1151
      %v1218 = vunpack.c.l.b16 %v1152
      %v1219 = vunpack.c.h.b16 %v1152
      %v1220 = vunpack.c.l.b16 %v1153
      %v1221 = vunpack.c.h.b16 %v1153
      %v1222 = vunpack.c.l.b16 %v1154
      %v1223 = vunpack.c.h.b16 %v1154
      %v1224 = vunpack.c.l.b16 %v1155
      %v1225 = vunpack.c.h.b16 %v1155
      %v1226 = vunpack.c.l.b16 %v1156
      %v1227 = vunpack.c.h.b16 %v1156
      %v1228 = vunpack.c.l.b16 %v1157
      %v1229 = vunpack.c.h.b16 %v1157
      %v1230 = vunpack.c.l.b16 %v1158
      %v1231 = vunpack.c.h.b16 %v1158
      %v1232 = vunpack.c.l.b16 %v1159
      %v1233 = vunpack.c.h.b16 %v1159
      %v1234 = vunpack.c.l.b16 %v1160
      %v1235 = vunpack.c.h.b16 %v1160
      %v1236 = vunpack.c.l.b16 %v1161
      %v1237 = vunpack.c.h.b16 %v1161
      %v1238 = vunpack.c.l.b16 %v1162
      %v1239 = vunpack.c.h.b16 %v1162
      %v1240 = vunpack.c.l.b16 %v1163
      %v1241 = vunpack.c.h.b16 %v1163
      %v1242 = vunpack.c.l.b16 %v1164
      %v1243 = vunpack.c.h.b16 %v1164
      %v1244 = vunpack.c.l.b16 %v1165
      %v1245 = vunpack.c.h.b16 %v1165
      %v1246 = vunpack.c.l.b16 %v1166
      %v1247 = vunpack.c.h.b16 %v1166
      %v1248 = vunpack.c.l.b16 %v1167
      %v1249 = vunpack.c.h.b16 %v1167
      %v1250 = vunpack.c.l.b16 %v1168
      %v1251 = vunpack.c.h.b16 %v1168
      %v1252 = vunpack.c.l.b16 %v1169
      %v1253 = vunpack.c.h.b16 %v1169
      %v1254 = vunpack.c.l.b16 %v1170
      %v1255 = vunpack.c.h.b16 %v1170
      %v1256 = vunpack.c.l.b16 %v1171
      %v1257 = vunpack.c.h.b16 %v1171
      %v1258 = vunpack.c.l.b16 %v1172
      %v1259 = vunpack.c.h.b16 %v1172
      %v1260 = vunpack.c.l.b16 %v1173
      %v1261 = vunpack.c.h.b16 %v1173
      %v1262 = vunpack.c.l.b16 %v1174
      %v1263 = vunpack.c.h.b16 %v1174
      %v1264 = vunpack.c.l.b16 %v1175
      %v1265 = vunpack.c.h.b16 %v1175
      %v1266 = vunpack.c.l.b16 %v1176
      %v1267 = vunpack.c.h.b16 %v1176
      %v1268 = vunpack.c.l.b16 %v1177
      %v1269 = vunpack.c.h.b16 %v1177
      %v1270 = vunpack.c.l.b16 %v1178
      %v1271 = vunpack.c.h.b16 %v1178
      %v1272 = vunpack.c.l.b16 %v1179
      %v1273 = vunpack.c.h.b16 %v1179
      %v1274 = vunpack.c.l.b16 %v1180
      %v1275 = vunpack.c.h.b16 %v1180
      %v1276 = vunpack.c.l.b16 %v1181
      %v1277 = vunpack.c.h.b16 %v1181
      %v1278 = vpack.c.b16 %v1218, %v1214
      %v1279 = vpack.c.b16 %v1219, %v1215
      %v1280 = vpack.c.b16 %v1220, %v1216
      %v1281 = vpack.c.b16 %v1221, %v1217
      %v1282 = vpack.c.b16 %v1226, %v1222
      %v1283 = vpack.c.b16 %v1227, %v1223
      %v1284 = vpack.c.b16 %v1228, %v1224
      %v1285 = vpack.c.b16 %v1229, %v1225
      %v1286 = vpack.c.b16 %v1234, %v1230
      %v1287 = vpack.c.b16 %v1235, %v1231
      %v1288 = vpack.c.b16 %v1236, %v1232
      %v1289 = vpack.c.b16 %v1237, %v1233
      %v1290 = vpack.c.b16 %v1242, %v1238
      %v1291 = vpack.c.b16 %v1243, %v1239
      %v1292 = vpack.c.b16 %v1244, %v1240
      %v1293 = vpack.c.b16 %v1245, %v1241
      %v1294 = vpack.c.b16 %v1250, %v1246
      %v1295 = vpack.c.b16 %v1251, %v1247
      %v1296 = vpack.c.b16 %v1252, %v1248
      %v1297 = vpack.c.b16 %v1253, %v1249
      %v1298 = vpack.c.b16 %v1258, %v1254
      %v1299 = vpack.c.b16 %v1259, %v1255
      %v1300 = vpack.c.b16 %v1260, %v1256
      %v1301 = vpack.c.b16 %v1261, %v1257
      %v1302 = vpack.c.b16 %v1266, %v1262
      %v1303 = vpack.c.b16 %v1267, %v1263
      %v1304 = vpack.c.b16 %v1268, %v1264
      %v1305 = vpack.c.b16 %v1269, %v1265
      %v1306 = vpack.c.b16 %v1274, %v1270
      %v1307 = vpack.c.b16 %v1275, %v1271
      %v1308 = vpack.c.b16 %v1276, %v1272
      %v1309 = vpack.c.b16 %v1277, %v1273
      %1342 = vmatprep.subr.bf16.mxu0 %v1279
      %1343 = vmatpush1.bf16.msra.mxu0 %v1278
      %1344 = vmatprep.subr.bf16.mxu0 %v1283
      %1345 = vmatpush1.bf16.msra.mxu0 %v1282
      %1346 = vmatprep.subr.bf16.mxu0 %v1287
      %1347 = vmatpush1.bf16.msra.mxu0 %v1286
      %1348 = vmatprep.subr.bf16.mxu0 %v1291
      %1349 = vmatpush1.bf16.msra.mxu0 %v1290
      %1350 = vmatprep.subr.bf16.mxu0 %v1295
      %1351 = vmatpush1.bf16.msra.mxu0 %v1294
      %1352 = vmatprep.subr.bf16.mxu0 %v1299
      %1353 = vmatpush1.bf16.msra.mxu0 %v1298
      %1354 = vmatprep.subr.bf16.mxu0 %v1303
      %1355 = vmatpush1.bf16.msra.mxu0 %v1302
      %1356 = vmatprep.subr.bf16.mxu0 %v1307
      %1357 = vmatpush1.bf16.msra.mxu0 %v1306
      %1358 = vmatprep.subr.bf16.mxu0 0
      %1359 = vmatpush1.bf16.msra.mxu0 0
      %1360 = vmatprep.subr.bf16.mxu0 0
      %1361 = vmatpush1.bf16.msra.mxu0 0
      %1362 = vmatprep.subr.bf16.mxu0 0
      %1363 = vmatpush1.bf16.msra.mxu0 0
      %1364 = vmatprep.subr.bf16.mxu0 0
      %1365 = vmatpush1.bf16.msra.mxu0 0
      %1366 = vmatprep.subr.bf16.mxu0 0
      %1367 = vmatpush1.bf16.msra.mxu0 0
      %1368 = vmatprep.subr.bf16.mxu0 0
      %1369 = vmatpush1.bf16.msra.mxu0 0
      %1370 = vmatprep.subr.bf16.mxu0 0
      %1371 = vmatpush1.bf16.msra.mxu0 0
      %1372 = vmatprep.subr.bf16.mxu0 0
      %1373 = vmatpush1.bf16.msra.mxu0 0
      %1374 = vmatprep.mubr.bf16.mxu0 0
      %1375 = vmatmul.mubr.bf16.gmra.mrb[0].mxu0 %v1149
      %v1376 = vpop.f32.mrb[0].mxu0
      %v1377 = vadd.f32 0.0, %v1376
      %v1378 = vpop.f32.mrb[0].mxu0
      %v1379 = vadd.f32 0.0, %v1378
      %v1380 = vpop.f32.mrb[0].mxu0
      %v1381 = vpop.f32.mrb[0].mxu0
      %1382 = vdwg.mxu0
      %1383 = vmatprep.subr.bf16.mxu0 %v1281
      %1384 = vmatpush1.bf16.msra.mxu0 %v1280
      %1385 = vmatprep.subr.bf16.mxu0 %v1285
      %1386 = vmatpush1.bf16.msra.mxu0 %v1284
      %1387 = vmatprep.subr.bf16.mxu0 %v1289
      %1388 = vmatpush1.bf16.msra.mxu0 %v1288
      %1389 = vmatprep.subr.bf16.mxu0 %v1293
      %1390 = vmatpush1.bf16.msra.mxu0 %v1292
      %1391 = vmatprep.subr.bf16.mxu0 %v1297
      %1392 = vmatpush1.bf16.msra.mxu0 %v1296
      %1393 = vmatprep.subr.bf16.mxu0 %v1301
      %1394 = vmatpush1.bf16.msra.mxu0 %v1300
      %1395 = vmatprep.subr.bf16.mxu0 %v1305
      %1396 = vmatpush1.bf16.msra.mxu0 %v1304
      %1397 = vmatprep.subr.bf16.mxu0 %v1309
      %1398 = vmatpush1.bf16.msra.mxu0 %v1308
      %1399 = vmatprep.subr.bf16.mxu0 0
      %1400 = vmatpush1.bf16.msra.mxu0 0
      %1401 = vmatprep.subr.bf16.mxu0 0
      %1402 = vmatpush1.bf16.msra.mxu0 0
      %1403 = vmatprep.subr.bf16.mxu0 0
      %1404 = vmatpush1.bf16.msra.mxu0 0
      %1405 = vmatprep.subr.bf16.mxu0 0
      %1406 = vmatpush1.bf16.msra.mxu0 0
      %1407 = vmatprep.subr.bf16.mxu0 0
      %1408 = vmatpush1.bf16.msra.mxu0 0
      %1409 = vmatprep.subr.bf16.mxu0 0
      %1410 = vmatpush1.bf16.msra.mxu0 0
      %1411 = vmatprep.subr.bf16.mxu0 0
      %1412 = vmatpush1.bf16.msra.mxu0 0
      %1413 = vmatprep.subr.bf16.mxu0 0
      %1414 = vmatpush1.bf16.msra.mxu0 0
      %1415 = vmatprep.mubr.bf16.mxu0 0
      %1416 = vmatmul.mubr.bf16.gmra.mrb[0].mxu0 %v1149
      %v1417 = vpop.f32.mrb[0].mxu0
      %v1418 = vadd.f32 0.0, %v1417
      %v1419 = vpop.f32.mrb[0].mxu0
      %v1420 = vadd.f32 0.0, %v1419
      %v1421 = vpop.f32.mrb[0].mxu0
      %v1422 = vpop.f32.mrb[0].mxu0
      %1423 = vdwg.mxu0
      %v1424 = vadd.f32 %v1145, %v1377
      %v1425 = vadd.f32 %v1146, %v1379
      %v1426 = vadd.f32 %v1147, %v1418
      %v1427 = vadd.f32 %v1148, %v1420
      %v1428 = vxor.u32 %v1424, 2147483648
      %v1429 = vxor.u32 %v1425, 2147483648
      %v1430 = vxor.u32 %v1426, 2147483648
      %v1431 = vmul.f32 %v1428, 1.442695
      %v1432 = vpow.pop %v1431
      %v1433 = vmul.f32 %v1429, 1.442695
      %v1434 = vpow.pop %v1433
      %v1435 = vmul.f32 %v1430, 1.442695
      %v1436 = vpow.pop %v1435
      %v1437 = vadd.f32 %v1432, 1.0
      %v1438 = vadd.f32 %v1434, 1.0
      %v1439 = vadd.f32 %v1436, 1.0
      %v1440 = vrcp.pop %v1437
      %v1441 = vmul.f32 1.0, %v1440
      %v1442 = vrcp.pop %v1438
      %v1443 = vmul.f32 1.0, %v1442
      %v1444 = vrcp.pop %v1439
      %v1445 = vmul.f32 1.0, %v1444
      %v1446 = vtanh.pop %v1427
      %v1447 = vmul.f32 %v1443, %v805
      %v1448 = vmul.f32 %v1441, %v1446
      %v1449 = vadd.f32 %v1447, %v1448
      %v1450 = vtanh.pop %v1449
      %v1451 = vmul.f32 %v1445, %v1450
      %v1452 = vunpack.c.l.bf16 %v1136
      %v1453 = vmul.f32 %v1451, %v1452
      %v1454 = vmul.f32 %v1449, %v1452
      %s1455 = scalar_lea.vmem %s458, 8
      %1456 = vst [vmem:[%s1455] sm:$0xff] %v1453
      %v1457 = vld [vmem:[%s437] sm:$0xff]
      %v1458 = vld [vmem:[%s437 + $0x8] sm:$0xff]
      %v1459 = vld [vmem:[%s451] sm:$0xf]
      %v1460 = vunpack.c.l.bf16 %v1457
      %v1461 = vunpack.c.h.bf16 %v1457
      %v1462 = vunpack.c.l.bf16 %v1458
      %v1463 = vunpack.c.h.bf16 %v1458
      %v1464 = vld [vmem:[%s8] sm:$0xff]
      %v1465 = vld [vmem:[%s8 + $0x8] sm:$0xff]
      %v1466 = vld [vmem:[%s8 + $0x10] sm:$0xff]
      %v1467 = vld [vmem:[%s8 + $0x18] sm:$0xff]
      %v1468 = vadd.f32 %v1460, %v1464
      %v1469 = vadd.f32 %v1461, %v1465
      %v1470 = vadd.f32 %v1462, %v1466
      %v1471 = vadd.f32 %v1463, %v1467
      %v1472 = vpack.c.bf16 %v1128, %v1128
      %v1473 = vld [vmem:[%s6] sm:$0xff]
      %v1474 = vld [vmem:[%s6 + $0x8] sm:$0xff]
      %v1475 = vld [vmem:[%s6 + $0x10] sm:$0xff]
      %v1476 = vld [vmem:[%s6 + $0x18] sm:$0xff]
      %v1477 = vld [vmem:[%s6 + $0x20] sm:$0xff]
      %v1478 = vld [vmem:[%s6 + $0x28] sm:$0xff]
      %v1479 = vld [vmem:[%s6 + $0x30] sm:$0xff]
      %v1480 = vld [vmem:[%s6 + $0x38] sm:$0xff]
      %v1481 = vld [vmem:[%s6 + $0x40] sm:$0xff]
      %v1482 = vld [vmem:[%s6 + $0x48] sm:$0xff]
      %v1483 = vld [vmem:[%s6 + $0x50] sm:$0xff]
      %v1484 = vld [vmem:[%s6 + $0x58] sm:$0xff]
      %v1485 = vld [vmem:[%s6 + $0x60] sm:$0xff]
      %v1486 = vld [vmem:[%s6 + $0x68] sm:$0xff]
      %v1487 = vld [vmem:[%s6 + $0x70] sm:$0xff]
      %v1488 = vld [vmem:[%s6 + $0x78] sm:$0xff]
      %v1489 = vld [vmem:[%s6 + $0x80] sm:$0xff]
      %v1490 = vld [vmem:[%s6 + $0x88] sm:$0xff]
      %v1491 = vld [vmem:[%s6 + $0x90] sm:$0xff]
      %v1492 = vld [vmem:[%s6 + $0x98] sm:$0xff]
      %v1493 = vld [vmem:[%s6 + $0xa0] sm:$0xff]
      %v1494 = vld [vmem:[%s6 + $0xa8] sm:$0xff]
      %v1495 = vld [vmem:[%s6 + $0xb0] sm:$0xff]
      %v1496 = vld [vmem:[%s6 + $0xb8] sm:$0xff]
      %v1497 = vld [vmem:[%s6 + $0xc0] sm:$0xff]
      %v1498 = vld [vmem:[%s6 + $0xc8] sm:$0xff]
      %v1499 = vld [vmem:[%s6 + $0xd0] sm:$0xff]
      %v1500 = vld [vmem:[%s6 + $0xd8] sm:$0xff]
      %v1501 = vld [vmem:[%s6 + $0xe0] sm:$0xff]
      %v1502 = vld [vmem:[%s6 + $0xe8] sm:$0xff]
      %v1503 = vld [vmem:[%s6 + $0xf0] sm:$0xff]
      %v1504 = vld [vmem:[%s6 + $0xf8] sm:$0xff]
      %v1537 = vunpack.c.l.b16 %v1473
      %v1538 = vunpack.c.h.b16 %v1473
      %v1539 = vunpack.c.l.b16 %v1474
      %v1540 = vunpack.c.h.b16 %v1474
      %v1541 = vunpack.c.l.b16 %v1475
      %v1542 = vunpack.c.h.b16 %v1475
      %v1543 = vunpack.c.l.b16 %v1476
      %v1544 = vunpack.c.h.b16 %v1476
      %v1545 = vunpack.c.l.b16 %v1477
      %v1546 = vunpack.c.h.b16 %v1477
      %v1547 = vunpack.c.l.b16 %v1478
      %v1548 = vunpack.c.h.b16 %v1478
      %v1549 = vunpack.c.l.b16 %v1479
      %v1550 = vunpack.c.h.b16 %v1479
      %v1551 = vunpack.c.l.b16 %v1480
      %v1552 = vunpack.c.h.b16 %v1480
      %v1553 = vunpack.c.l.b16 %v1481
      %v1554 = vunpack.c.h.b16 %v1481
      %v1555 = vunpack.c.l.b16 %v1482
      %v1556 = vunpack.c.h.b16 %v1482
      %v1557 = vunpack.c.l.b16 %v1483
      %v1558 = vunpack.c.h.b16 %v1483
      %v1559 = vunpack.c.l.b16 %v1484
      %v1560 = vunpack.c.h.b16 %v1484
      %v1561 = vunpack.c.l.b16 %v1485
      %v1562 = vunpack.c.h.b16 %v1485
      %v1563 = vunpack.c.l.b16 %v1486
      %v1564 = vunpack.c.h.b16 %v1486
      %v1565 = vunpack.c.l.b16 %v1487
      %v1566 = vunpack.c.h.b16 %v1487
      %v1567 = vunpack.c.l.b16 %v1488
      %v1568 = vunpack.c.h.b16 %v1488
      %v1569 = vunpack.c.l.b16 %v1489
      %v1570 = vunpack.c.h.b16 %v1489
      %v1571 = vunpack.c.l.b16 %v1490
      %v1572 = vunpack.c.h.b16 %v1490
      %v1573 = vunpack.c.l.b16 %v1491
      %v1574 = vunpack.c.h.b16 %v1491
      %v1575 = vunpack.c.l.b16 %v1492
      %v1576 = vunpack.c.h.b16 %v1492
      %v1577 = vunpack.c.l.b16 %v1493
      %v1578 = vunpack.c.h.b16 %v1493
      %v1579 = vunpack.c.l.b16 %v1494
      %v1580 = vunpack.c.h.b16 %v1494
      %v1581 = vunpack.c.l.b16 %v1495
      %v1582 = vunpack.c.h.b16 %v1495
      %v1583 = vunpack.c.l.b16 %v1496
      %v1584 = vunpack.c.h.b16 %v1496
      %v1585 = vunpack.c.l.b16 %v1497
      %v1586 = vunpack.c.h.b16 %v1497
      %v1587 = vunpack.c.l.b16 %v1498
      %v1588 = vunpack.c.h.b16 %v1498
      %v1589 = vunpack.c.l.b16 %v1499
      %v1590 = vunpack.c.h.b16 %v1499
      %v1591 = vunpack.c.l.b16 %v1500
      %v1592 = vunpack.c.h.b16 %v1500
      %v1593 = vunpack.c.l.b16 %v1501
      %v1594 = vunpack.c.h.b16 %v1501
      %v1595 = vunpack.c.l.b16 %v1502
      %v1596 = vunpack.c.h.b16 %v1502
      %v1597 = vunpack.c.l.b16 %v1503
      %v1598 = vunpack.c.h.b16 %v1503
      %v1599 = vunpack.c.l.b16 %v1504
      %v1600 = vunpack.c.h.b16 %v1504
      %v1601 = vpack.c.b16 %v1541, %v1537
      %v1602 = vpack.c.b16 %v1542, %v1538
      %v1603 = vpack.c.b16 %v1543, %v1539
      %v1604 = vpack.c.b16 %v1544, %v1540
      %v1605 = vpack.c.b16 %v1549, %v1545
      %v1606 = vpack.c.b16 %v1550, %v1546
      %v1607 = vpack.c.b16 %v1551, %v1547
      %v1608 = vpack.c.b16 %v1552, %v1548
      %v1609 = vpack.c.b16 %v1557, %v1553
      %v1610 = vpack.c.b16 %v1558, %v1554
      %v1611 = vpack.c.b16 %v1559, %v1555
      %v1612 = vpack.c.b16 %v1560, %v1556
      %v1613 = vpack.c.b16 %v1565, %v1561
      %v1614 = vpack.c.b16 %v1566, %v1562
      %v1615 = vpack.c.b16 %v1567, %v1563
      %v1616 = vpack.c.b16 %v1568, %v1564
      %v1617 = vpack.c.b16 %v1573, %v1569
      %v1618 = vpack.c.b16 %v1574, %v1570
      %v1619 = vpack.c.b16 %v1575, %v1571
      %v1620 = vpack.c.b16 %v1576, %v1572
      %v1621 = vpack.c.b16 %v1581, %v1577
      %v1622 = vpack.c.b16 %v1582, %v1578
      %v1623 = vpack.c.b16 %v1583, %v1579
      %v1624 = vpack.c.b16 %v1584, %v1580
      %v1625 = vpack.c.b16 %v1589, %v1585
      %v1626 = vpack.c.b16 %v1590, %v1586
      %v1627 = vpack.c.b16 %v1591, %v1587
      %v1628 = vpack.c.b16 %v1592, %v1588
      %v1629 = vpack.c.b16 %v1597, %v1593
      %v1630 = vpack.c.b16 %v1598, %v1594
      %v1631 = vpack.c.b16 %v1599, %v1595
      %v1632 = vpack.c.b16 %v1600, %v1596
      %1665 = vmatprep.subr.bf16.mxu0 %v1602
      %1666 = vmatpush1.bf16.msra.mxu0 %v1601
      %1667 = vmatprep.subr.bf16.mxu0 %v1606
      %1668 = vmatpush1.bf16.msra.mxu0 %v1605
      %1669 = vmatprep.subr.bf16.mxu0 %v1610
      %1670 = vmatpush1.bf16.msra.mxu0 %v1609
      %1671 = vmatprep.subr.bf16.mxu0 %v1614
      %1672 = vmatpush1.bf16.msra.mxu0 %v1613
      %1673 = vmatprep.subr.bf16.mxu0 %v1618
      %1674 = vmatpush1.bf16.msra.mxu0 %v1617
      %1675 = vmatprep.subr.bf16.mxu0 %v1622
      %1676 = vmatpush1.bf16.msra.mxu0 %v1621
      %1677 = vmatprep.subr.bf16.mxu0 %v1626
      %1678 = vmatpush1.bf16.msra.mxu0 %v1625
      %1679 = vmatprep.subr.bf16.mxu0 %v1630
      %1680 = vmatpush1.bf16.msra.mxu0 %v1629
      %1681 = vmatprep.subr.bf16.mxu0 0
      %1682 = vmatpush1.bf16.msra.mxu0 0
      %1683 = vmatprep.subr.bf16.mxu0 0
      %1684 = vmatpush1.bf16.msra.mxu0 0
      %1685 = vmatprep.subr.bf16.mxu0 0
      %1686 = vmatpush1.bf16.msra.mxu0 0
      %1687 = vmatprep.subr.bf16.mxu0 0
      %1688 = vmatpush1.bf16.msra.mxu0 0
      %1689 = vmatprep.subr.bf16.mxu0 0
      %1690 = vmatpush1.bf16.msra.mxu0 0
      %1691 = vmatprep.subr.bf16.mxu0 0
      %1692 = vmatpush1.bf16.msra.mxu0 0
      %1693 = vmatprep.subr.bf16.mxu0 0
      %1694 = vmatpush1.bf16.msra.mxu0 0
      %1695 = vmatprep.subr.bf16.mxu0 0
      %1696 = vmatpush1.bf16.msra.mxu0 0
      %1697 = vmatprep.mubr.bf16.mxu0 0
      %1698 = vmatmul.mubr.bf16.gmra.mrb[0].mxu0 %v1472
      %v1699 = vpop.f32.mrb[0].mxu0
      %v1700 = vadd.f32 0.0, %v1699
      %v1701 = vpop.f32.mrb[0].mxu0
      %v1702 = vadd.f32 0.0, %v1701
      %v1703 = vpop.f32.mrb[0].mxu0
      %v1704 = vpop.f32.mrb[0].mxu0
      %1705 = vdwg.mxu0
      %1706 = vmatprep.subr.bf16.mxu0 %v1604
      %1707 = vmatpush1.bf16.msra.mxu0 %v1603
      %1708 = vmatprep.subr.bf16.mxu0 %v1608
      %1709 = vmatpush1.bf16.msra.mxu0 %v1607
      %1710 = vmatprep.subr.bf16.mxu0 %v1612
      %1711 = vmatpush1.bf16.msra.mxu0 %v1611
      %1712 = vmatprep.subr.bf16.mxu0 %v1616
      %1713 = vmatpush1.bf16.msra.mxu0 %v1615
      %1714 = vmatprep.subr.bf16.mxu0 %v1620
      %1715 = vmatpush1.bf16.msra.mxu0 %v1619
      %1716 = vmatprep.subr.bf16.mxu0 %v1624
      %1717 = vmatpush1.bf16.msra.mxu0 %v1623
      %1718 = vmatprep.subr.bf16.mxu0 %v1628
      %1719 = vmatpush1.bf16.msra.mxu0 %v1627
      %1720 = vmatprep.subr.bf16.mxu0 %v1632
      %1721 = vmatpush1.bf16.msra.mxu0 %v1631
      %1722 = vmatprep.subr.bf16.mxu0 0
      %1723 = vmatpush1.bf16.msra.mxu0 0
      %1724 = vmatprep.subr.bf16.mxu0 0
      %1725 = vmatpush1.bf16.msra.mxu0 0
      %1726 = vmatprep.subr.bf16.mxu0 0
      %1727 = vmatpush1.bf16.msra.mxu0 0
      %1728 = vmatprep.subr.bf16.mxu0 0
      %1729 = vmatpush1.bf16.msra.mxu0 0
      %1730 = vmatprep.subr.bf16.mxu0 0
      %1731 = vmatpush1.bf16.msra.mxu0 0
      %1732 = vmatprep.subr.bf16.mxu0 0
      %1733 = vmatpush1.bf16.msra.mxu0 0
      %1734 = vmatprep.subr.bf16.mxu0 0
      %1735 = vmatpush1.bf16.msra.mxu0 0
      %1736 = vmatprep.subr.bf16.mxu0 0
      %1737 = vmatpush1.bf16.msra.mxu0 0
      %1738 = vmatprep.mubr.bf16.mxu0 0
      %1739 = vmatmul.mubr.bf16.gmra.mrb[0].mxu0 %v1472
      %v1740 = vpop.f32.mrb[0].mxu0
      %v1741 = vadd.f32 0.0, %v1740
      %v1742 = vpop.f32.mrb[0].mxu0
      %v1743 = vadd.f32 0.0, %v1742
      %v1744 = vpop.f32.mrb[0].mxu0
      %v1745 = vpop.f32.mrb[0].mxu0
      %1746 = vdwg.mxu0
      %v1747 = vadd.f32 %v1468, %v1700
      %v1748 = vadd.f32 %v1469, %v1702
      %v1749 = vadd.f32 %v1470, %v1741
      %v1750 = vadd.f32 %v1471, %v1743
      %v1751 = vxor.u32 %v1747, 2147483648
      %v1752 = vxor.u32 %v1748, 2147483648
      %v1753 = vxor.u32 %v1749, 2147483648
      %v1754 = vmul.f32 %v1751, 1.442695
      %v1755 = vpow.pop %v1754
      %v1756 = vmul.f32 %v1752, 1.442695
      %v1757 = vpow.pop %v1756
      %v1758 = vmul.f32 %v1753, 1.442695
      %v1759 = vpow.pop %v1758
      %v1760 = vadd.f32 %v1755, 1.0
      %v1761 = vadd.f32 %v1757, 1.0
      %v1762 = vadd.f32 %v1759, 1.0
      %v1763 = vrcp.pop %v1760
      %v1764 = vmul.f32 1.0, %v1763
      %v1765 = vrcp.pop %v1761
      %v1766 = vmul.f32 1.0, %v1765
      %v1767 = vrcp.pop %v1762
      %v1768 = vmul.f32 1.0, %v1767
      %v1769 = vtanh.pop %v1750
      %v1770 = vmul.f32 %v1766, %v1129
      %v1771 = vmul.f32 %v1764, %v1769
      %v1772 = vadd.f32 %v1770, %v1771
      %v1773 = vtanh.pop %v1772
      %v1774 = vmul.f32 %v1768, %v1773
      %v1775 = vunpack.c.l.bf16 %v1459
      %v1776 = vmul.f32 %v1774, %v1775
      %v1777 = vmul.f32 %v1772, %v1775
      %1778 = vst [vmem:[%s465] sm:$0xff] %v1776
      %1779 = vst [vmem:[#allocation2] sm:$0xff] %v1453
      %1780 = vst [vmem:[#allocation3] sm:$0xff] %v1454
      %1781 = vst [vmem:[%s481] sm:$0xff] %v1776
      %1782 = vst [vmem:[%s483] sm:$0xff] %v1777
      %s1783 = smul.u32 2, %s22
      %p1784 = scmp.lt.s32.totalorder %s1783, 7
      %s1785 = scalar_select %p1784, %s1783, 7
      %s1786 = smul.addr %s1785, 8
      %s1787 = scalar_lea.vmem %s9, %s1786
      %s1788 = ssub.s32 3, %s22
      %s1789 = smul.u32 2, %s1788
      %p1790 = scmp.lt.s32.totalorder %s1789, 7
      %s1791 = scalar_select %p1790, %s1789, 7
      %s1792 = smul.addr %s1791, 8
      %s1793 = scalar_lea.vmem %s10, %s1792
      // Predicated region
      $region61: #{my_lstm_forward.3} parent=55 // pred_check
        %p1794 = pneg %p253
      $region62: #{my_lstm_forward.3} parent=55 // pred_check_branch
        %1796 = sbr.rel (%p1794) target = $region64
      $region63: #{my_lstm_forward.3} parent=55 // pred_region
        %s1797 = smul.u32 2, %s22
      $region64: #{my_lstm_forward.3} parent=55 // pred_fallthru
        _
      // Predicated region
      $region65: #{my_lstm_forward.3} parent=55 // pred_check
        %p1798 = pneg %p281
      $region66: #{my_lstm_forward.3} parent=55 // pred_check_branch
        %1800 = sbr.rel (%p1798) target = $region68
      $region67: #{my_lstm_forward.3} parent=55 // pred_region
        %s1801 = ssub.s32 3, %s22
        %s1802 = smul.u32 2, %s1801
      $region68: #{my_lstm_forward.3} parent=55 // pred_fallthru
        _
    $region56: #{my_lstm_forward.3} parent=5 // pred_fallthru
      _
    %p1803 = scmp.le.s32.totalorder 2, %s17
    // Predicated region
    $region69: #{my_lstm_forward.3} parent=5 // pred_check
      %p1804 = pneg %p1803
    $region70: #{my_lstm_forward.3} parent=5 // pred_check_branch
      %1806 = sbr.rel (%p1804) target = $region72
    $region71: #{my_lstm_forward.3} parent=5 // pred_region
      %s1807 = ssub.s32 %s17, 2
      // Predicated region
      $region73: #{my_lstm_forward.3} parent=71 // pred_check
        %p1808 = pneg %p259
      $region74: #{my_lstm_forward.3} parent=71 // pred_check_branch
        %1810 = sbr.rel (%p1808) target = $region76
      $region75: #{my_lstm_forward.3} parent=71 // pred_region
        %s1811 = smul.u32 2, %s23
        %p1812 = scmp.lt.s32.totalorder %s1811, 7
        %s1813 = scalar_select %p1812, %s1811, 7
        %s1814 = smul.addr %s1813, 8
        %s1815 = scalar_lea.vmem %s9, %s1814
      $region76: #{my_lstm_forward.3} parent=71 // pred_fallthru
        _
      // Predicated region
      $region77: #{my_lstm_forward.3} parent=71 // pred_check
        %p1816 = pneg %p287
      $region78: #{my_lstm_forward.3} parent=71 // pred_check_branch
        %1818 = sbr.rel (%p1816) target = $region80
      $region79: #{my_lstm_forward.3} parent=71 // pred_region
        %s1819 = ssub.s32 3, %s23
        %s1820 = smul.u32 2, %s1819
        %p1821 = scmp.lt.s32.totalorder %s1820, 7
        %s1822 = scalar_select %p1821, %s1820, 7
        %s1823 = smul.addr %s1822, 8
        %s1824 = scalar_lea.vmem %s10, %s1823
      $region80: #{my_lstm_forward.3} parent=71 // pred_fallthru
        _
    $region72: #{my_lstm_forward.3} parent=5 // pred_fallthru
      _
  $region6: #{my_lstm_forward.3} parent=0 // loop_footer
    %s21 = sadd.s32 1, %s17
  $region7: #{my_lstm_forward.3} parent=0 // loop_footer_branch
    %16 = sbr.rel target = $region3
  $region8: #{my_lstm_forward.3} parent=0 // loop_exit
    _

// kernel: my_lstm_forward.2
$region0: #{my_lstm_forward.2}
  #allocation0 [shape = 'u32[]', space=smem, size = 0x4, offset = 0x4, fixed_abs, tag = 'smem constant byte address 0x4 - core index']
  #allocation1 [shape = 'u32[144,128]{1,0:T(1,128)}', space=vmem, size = 0x12000, scoped, tag = 'internal scratch']
  #allocation2 [shape = 'f32[2,8,128]{2,1,0:T(8,128)}', space=vmem, size = 0x2000, scoped, tag = 'scratch operand']
  #allocation3 [shape = 'f32[2,8,128]{2,1,0:T(8,128)}', space=vmem, size = 0x2000, scoped, tag = 'scratch operand']
  %s0 = inlined_call_operand.vmem [shape: bf16[8,8,512], index: 0, kind: input, shape index: {}]
  %s1 = inlined_call_operand.vmem [shape: bf16[8,8,512], index: 1, kind: input, shape index: {}]
  %s2 = inlined_call_operand.vmem [shape: bf16[8,8,128], index: 2, kind: input, shape index: {}, may-alias: {2,3}]
  %s3 = inlined_call_operand.vmem [shape: bf16[8,8,128], index: 3, kind: input, shape index: {}, may-alias: {2,3}]
  %s4 = inlined_call_operand.vmem [shape: f32[8,128], index: 4, kind: input, shape index: {}]
  %s5 = inlined_call_operand.vmem [shape: bf16[128,512], index: 5, kind: input, shape index: {}]
  %s6 = inlined_call_operand.vmem [shape: bf16[128,512], index: 6, kind: input, shape index: {}]
  %s7 = inlined_call_operand.vmem [shape: f32[8,512], index: 7, kind: input, shape index: {}]
  %s8 = inlined_call_operand.vmem [shape: f32[8,512], index: 8, kind: input, shape index: {}]
  %s9 = inlined_call_operand.vmem [shape: bf16[8,8,128], index: 9, kind: output, shape index: {0}]
  %s10 = inlined_call_operand.vmem [shape: bf16[8,8,128], index: 10, kind: output, shape index: {1}]
  %11 = xla_tuple %s9, %s10
  %s12 = sld [smem:[#allocation0]]
  $region81: #{my_lstm_forward.2} parent=0
    _
  %s14 = ssub.s32 1, %s12
  %s15 = scalar_select 0, %s14, %s12
  loop: start=0, step=1, limit=6
  $region2: #{my_lstm_forward.2} parent=0 // loop_pre_header
    _
  $region3: #{my_lstm_forward.2} parent=0 // loop_header
    %s17 = sphi 0, %s21
    %p18 = scmp.ge.s32.totalorder %s17, 6
    %s27 = sphi 0, %s29
    %s30 = sphi 0, %s27
    %s31 = sphi 0, %s30
    %s47 = sphi 0, %s31
    %s55 = sphi 0, %s57
    %s58 = sphi 0, %s55
    %s59 = sphi 0, %s58
    %s75 = sphi 0, %s59
    %s81 = sphi 0, %s83
    %s84 = sphi 0, %s81
    %s85 = sphi 0, %s84
    %s101 = sphi 0, %s85
    %s109 = sphi 0, %s111
    %s112 = sphi 0, %s109
    %s113 = sphi 0, %s112
    %s129 = sphi 0, %s113
    %s133 = sphi 0, %s133
    %s135 = sphi 0, %s133
    %s136 = sphi 0, %s135
    %s150 = sphi 0, %s136
    %s154 = sphi 0, %s154
    %s156 = sphi 0, %s154
    %s157 = sphi 0, %s156
    %s171 = sphi 0, %s157
    %s175 = sphi 0, %s175
    %s177 = sphi 0, %s175
    %s178 = sphi 0, %s177
    %s192 = sphi 0, %s178
    %s196 = sphi 0, %s196
    %s198 = sphi 0, %s196
    %s199 = sphi 0, %s198
    %s213 = sphi 0, %s199
    %s217 = sphi 0, %s217
    %s219 = sphi 0, %s217
    %s220 = sphi 0, %s219
    %s234 = sphi 0, %s220
    %s240 = sphi 0, %s242
    %s243 = sphi 0, %s240
    %s244 = sphi 0, %s243
    %s260 = sphi 0, %s244
    %s268 = sphi 0, %s270
    %s271 = sphi 0, %s268
    %s272 = sphi 0, %s271
    %s288 = sphi 0, %s272
  $region4: #{my_lstm_forward.2} parent=0 // loop_header_branch
    %20 = sbr.rel (%p18) target = $region8
  $region5: #{my_lstm_forward.2} parent=0 // loop_body
    %s22 = ssub.s32 %s17, 1
    %s23 = ssub.s32 %s17, 2
    %s24 = sadd.s32 %s17, 1
    %s25 = ssub.s32 %s17, %s24
    %p26 = scmp.eq.s32.totalorder %s25, 0
    %s28 = sadd.s32 %s27, 1
    %s29 = scalar_select %p26, %s27, %s28
    %p32 = pneg %p26
    %p33 = scmp.eq.s32.totalorder %s17, 3
    %p34 = por %p32, %p33
    %p35 = scmp.ne.s32.totalorder %s27, %s30
    %p36 = scmp.eq.s32.totalorder %s17, 0
    %p37 = por %p35, %p36
    %p38 = scmp.ne.s32.totalorder %s27, %s30
    %p39 = scmp.eq.s32.totalorder %s22, 3
    %p40 = por %p38, %p39
    %p41 = scmp.ne.s32.totalorder %s30, %s31
    %p42 = scmp.eq.s32.totalorder %s22, 0
    %p43 = por %p41, %p42
    %p44 = scmp.ne.s32.totalorder %s30, %s31
    %p45 = scmp.eq.s32.totalorder %s23, 3
    %p46 = por %p44, %p45
    %p48 = scmp.ne.s32.totalorder %s31, %s47
    %p49 = scmp.eq.s32.totalorder %s23, 0
    %p50 = por %p48, %p49
    %s51 = ssub.s32 3, %s17
    %s52 = ssub.s32 3, %s24
    %s53 = ssub.s32 %s51, %s52
    %p54 = scmp.eq.s32.totalorder %s53, 0
    %s56 = sadd.s32 %s55, 1
    %s57 = scalar_select %p54, %s55, %s56
    %p60 = pneg %p54
    %p61 = scmp.eq.s32.totalorder %s17, 3
    %p62 = por %p60, %p61
    %p63 = scmp.ne.s32.totalorder %s55, %s58
    %p64 = scmp.eq.s32.totalorder %s17, 0
    %p65 = por %p63, %p64
    %p66 = scmp.ne.s32.totalorder %s55, %s58
    %p67 = scmp.eq.s32.totalorder %s22, 3
    %p68 = por %p66, %p67
    %p69 = scmp.ne.s32.totalorder %s58, %s59
    %p70 = scmp.eq.s32.totalorder %s22, 0
    %p71 = por %p69, %p70
    %p72 = scmp.ne.s32.totalorder %s58, %s59
    %p73 = scmp.eq.s32.totalorder %s23, 3
    %p74 = por %p72, %p73
    %p76 = scmp.ne.s32.totalorder %s59, %s75
    %p77 = scmp.eq.s32.totalorder %s23, 0
    %p78 = por %p76, %p77
    %s79 = ssub.s32 %s17, %s24
    %p80 = scmp.eq.s32.totalorder %s79, 0
    %s82 = sadd.s32 %s81, 1
    %s83 = scalar_select %p80, %s81, %s82
    %p86 = pneg %p80
    %p87 = scmp.eq.s32.totalorder %s17, 3
    %p88 = por %p86, %p87
    %p89 = scmp.ne.s32.totalorder %s81, %s84
    %p90 = scmp.eq.s32.totalorder %s17, 0
    %p91 = por %p89, %p90
    %p92 = scmp.ne.s32.totalorder %s81, %s84
    %p93 = scmp.eq.s32.totalorder %s22, 3
    %p94 = por %p92, %p93
    %p95 = scmp.ne.s32.totalorder %s84, %s85
    %p96 = scmp.eq.s32.totalorder %s22, 0
    %p97 = por %p95, %p96
    %p98 = scmp.ne.s32.totalorder %s84, %s85
    %p99 = scmp.eq.s32.totalorder %s23, 3
    %p100 = por %p98, %p99
    %p102 = scmp.ne.s32.totalorder %s85, %s101
    %p103 = scmp.eq.s32.totalorder %s23, 0
    %p104 = por %p102, %p103
    %s105 = ssub.s32 3, %s17
    %s106 = ssub.s32 3, %s24
    %s107 = ssub.s32 %s105, %s106
    %p108 = scmp.eq.s32.totalorder %s107, 0
    %s110 = sadd.s32 %s109, 1
    %s111 = scalar_select %p108, %s109, %s110
    %p114 = pneg %p108
    %p115 = scmp.eq.s32.totalorder %s17, 3
    %p116 = por %p114, %p115
    %p117 = scmp.ne.s32.totalorder %s109, %s112
    %p118 = scmp.eq.s32.totalorder %s17, 0
    %p119 = por %p117, %p118
    %p120 = scmp.ne.s32.totalorder %s109, %s112
    %p121 = scmp.eq.s32.totalorder %s22, 3
    %p122 = por %p120, %p121
    %p123 = scmp.ne.s32.totalorder %s112, %s113
    %p124 = scmp.eq.s32.totalorder %s22, 0
    %p125 = por %p123, %p124
    %p126 = scmp.ne.s32.totalorder %s112, %s113
    %p127 = scmp.eq.s32.totalorder %s23, 3
    %p128 = por %p126, %p127
    %p130 = scmp.ne.s32.totalorder %s113, %s129
    %p131 = scmp.eq.s32.totalorder %s23, 0
    %p132 = por %p130, %p131
    %s134 = sadd.s32 %s133, 1
    %p137 = scmp.eq.s32.totalorder %s17, 3
    %p138 = scmp.ne.s32.totalorder %s133, %s135
    %p139 = scmp.eq.s32.totalorder %s17, 0
    %p140 = por %p138, %p139
    %p141 = scmp.ne.s32.totalorder %s133, %s135
    %p142 = scmp.eq.s32.totalorder %s22, 3
    %p143 = por %p141, %p142
    %p144 = scmp.ne.s32.totalorder %s135, %s136
    %p145 = scmp.eq.s32.totalorder %s22, 0
    %p146 = por %p144, %p145
    %p147 = scmp.ne.s32.totalorder %s135, %s136
    %p148 = scmp.eq.s32.totalorder %s23, 3
    %p149 = por %p147, %p148
    %p151 = scmp.ne.s32.totalorder %s136, %s150
    %p152 = scmp.eq.s32.totalorder %s23, 0
    %p153 = por %p151, %p152
    %s155 = sadd.s32 %s154, 1
    %p158 = scmp.eq.s32.totalorder %s17, 3
    %p159 = scmp.ne.s32.totalorder %s154, %s156
    %p160 = scmp.eq.s32.totalorder %s17, 0
    %p161 = por %p159, %p160
    %p162 = scmp.ne.s32.totalorder %s154, %s156
    %p163 = scmp.eq.s32.totalorder %s22, 3
    %p164 = por %p162, %p163
    %p165 = scmp.ne.s32.totalorder %s156, %s157
    %p166 = scmp.eq.s32.totalorder %s22, 0
    %p167 = por %p165, %p166
    %p168 = scmp.ne.s32.totalorder %s156, %s157
    %p169 = scmp.eq.s32.totalorder %s23, 3
    %p170 = por %p168, %p169
    %p172 = scmp.ne.s32.totalorder %s157, %s171
    %p173 = scmp.eq.s32.totalorder %s23, 0
    %p174 = por %p172, %p173
    %s176 = sadd.s32 %s175, 1
    %p179 = scmp.eq.s32.totalorder %s17, 3
    %p180 = scmp.ne.s32.totalorder %s175, %s177
    %p181 = scmp.eq.s32.totalorder %s17, 0
    %p182 = por %p180, %p181
    %p183 = scmp.ne.s32.totalorder %s175, %s177
    %p184 = scmp.eq.s32.totalorder %s22, 3
    %p185 = por %p183, %p184
    %p186 = scmp.ne.s32.totalorder %s177, %s178
    %p187 = scmp.eq.s32.totalorder %s22, 0
    %p188 = por %p186, %p187
    %p189 = scmp.ne.s32.totalorder %s177, %s178
    %p190 = scmp.eq.s32.totalorder %s23, 3
    %p191 = por %p189, %p190
    %p193 = scmp.ne.s32.totalorder %s178, %s192
    %p194 = scmp.eq.s32.totalorder %s23, 0
    %p195 = por %p193, %p194
    %s197 = sadd.s32 %s196, 1
    %p200 = scmp.eq.s32.totalorder %s17, 3
    %p201 = scmp.ne.s32.totalorder %s196, %s198
    %p202 = scmp.eq.s32.totalorder %s17, 0
    %p203 = por %p201, %p202
    %p204 = scmp.ne.s32.totalorder %s196, %s198
    %p205 = scmp.eq.s32.totalorder %s22, 3
    %p206 = por %p204, %p205
    %p207 = scmp.ne.s32.totalorder %s198, %s199
    %p208 = scmp.eq.s32.totalorder %s22, 0
    %p209 = por %p207, %p208
    %p210 = scmp.ne.s32.totalorder %s198, %s199
    %p211 = scmp.eq.s32.totalorder %s23, 3
    %p212 = por %p210, %p211
    %p214 = scmp.ne.s32.totalorder %s199, %s213
    %p215 = scmp.eq.s32.totalorder %s23, 0
    %p216 = por %p214, %p215
    %s218 = sadd.s32 %s217, 1
    %p221 = scmp.eq.s32.totalorder %s17, 3
    %p222 = scmp.ne.s32.totalorder %s217, %s219
    %p223 = scmp.eq.s32.totalorder %s17, 0
    %p224 = por %p222, %p223
    %p225 = scmp.ne.s32.totalorder %s217, %s219
    %p226 = scmp.eq.s32.totalorder %s22, 3
    %p227 = por %p225, %p226
    %p228 = scmp.ne.s32.totalorder %s219, %s220
    %p229 = scmp.eq.s32.totalorder %s22, 0
    %p230 = por %p228, %p229
    %p231 = scmp.ne.s32.totalorder %s219, %s220
    %p232 = scmp.eq.s32.totalorder %s23, 3
    %p233 = por %p231, %p232
    %p235 = scmp.ne.s32.totalorder %s220, %s234
    %p236 = scmp.eq.s32.totalorder %s23, 0
    %p237 = por %p235, %p236
    %s238 = ssub.s32 %s17, %s24
    %p239 = scmp.eq.s32.totalorder %s238, 0
    %s241 = sadd.s32 %s240, 1
    %s242 = scalar_select %p239, %s240, %s241
    %p245 = pneg %p239
    %p246 = scmp.eq.s32.totalorder %s17, 3
    %p247 = por %p245, %p246
    %p248 = scmp.ne.s32.totalorder %s240, %s243
    %p249 = scmp.eq.s32.totalorder %s17, 0
    %p250 = por %p248, %p249
    %p251 = scmp.ne.s32.totalorder %s240, %s243
    %p252 = scmp.eq.s32.totalorder %s22, 3
    %p253 = por %p251, %p252
    %p254 = scmp.ne.s32.totalorder %s243, %s244
    %p255 = scmp.eq.s32.totalorder %s22, 0
    %p256 = por %p254, %p255
    %p257 = scmp.ne.s32.totalorder %s243, %s244
    %p258 = scmp.eq.s32.totalorder %s23, 3
    %p259 = por %p257, %p258
    %p261 = scmp.ne.s32.totalorder %s244, %s260
    %p262 = scmp.eq.s32.totalorder %s23, 0
    %p263 = por %p261, %p262
    %s264 = ssub.s32 3, %s17
    %s265 = ssub.s32 3, %s24
    %s266 = ssub.s32 %s264, %s265
    %p267 = scmp.eq.s32.totalorder %s266, 0
    %s269 = sadd.s32 %s268, 1
    %s270 = scalar_select %p267, %s268, %s269
    %p273 = pneg %p267
    %p274 = scmp.eq.s32.totalorder %s17, 3
    %p275 = por %p273, %p274
    %p276 = scmp.ne.s32.totalorder %s268, %s271
    %p277 = scmp.eq.s32.totalorder %s17, 0
    %p278 = por %p276, %p277
    %p279 = scmp.ne.s32.totalorder %s268, %s271
    %p280 = scmp.eq.s32.totalorder %s22, 3
    %p281 = por %p279, %p280
    %p282 = scmp.ne.s32.totalorder %s271, %s272
    %p283 = scmp.eq.s32.totalorder %s22, 0
    %p284 = por %p282, %p283
    %p285 = scmp.ne.s32.totalorder %s271, %s272
    %p286 = scmp.eq.s32.totalorder %s23, 3
    %p287 = por %p285, %p286
    %p289 = scmp.ne.s32.totalorder %s272, %s288
    %p290 = scmp.eq.s32.totalorder %s23, 0
    %p291 = por %p289, %p290
    %p292 = scmp.le.s32.totalorder 1, %s17
    %p293 = scmp.lt.s32.totalorder %s17, 5
    %p294 = pnand %p292, %p293
    %p295 = pneg %p294
    // Predicated region
    $region9: #{my_lstm_forward.2} parent=5 // pred_check
      _
    $region10: #{my_lstm_forward.2} parent=5 // pred_check_branch
      %297 = sbr.rel (%p294) target = $region12
    $region11: #{my_lstm_forward.2} parent=5 // pred_region
      %s298 = ssub.s32 %s17, 1
      // Predicated region
      $region13: #{my_lstm_forward.2} parent=11 // pred_check
        %p299 = pneg %p146
      $region14: #{my_lstm_forward.2} parent=11 // pred_check_branch
        %301 = sbr.rel (%p299) target = $region16
      $region15: #{my_lstm_forward.2} parent=11 // pred_region
        _
      $region16: #{my_lstm_forward.2} parent=11 // pred_fallthru
        _
      // Predicated region
      $region17: #{my_lstm_forward.2} parent=11 // pred_check
        %p302 = pneg %p167
      $region18: #{my_lstm_forward.2} parent=11 // pred_check_branch
        %304 = sbr.rel (%p302) target = $region20
      $region19: #{my_lstm_forward.2} parent=11 // pred_region
        _
      $region20: #{my_lstm_forward.2} parent=11 // pred_fallthru
        _
      // Predicated region
      $region21: #{my_lstm_forward.2} parent=11 // pred_check
        %p305 = pneg %p188
      $region22: #{my_lstm_forward.2} parent=11 // pred_check_branch
        %307 = sbr.rel (%p305) target = $region24
      $region23: #{my_lstm_forward.2} parent=11 // pred_region
        _
      $region24: #{my_lstm_forward.2} parent=11 // pred_fallthru
        _
      // Predicated region
      $region25: #{my_lstm_forward.2} parent=11 // pred_check
        %p308 = pneg %p209
      $region26: #{my_lstm_forward.2} parent=11 // pred_check_branch
        %310 = sbr.rel (%p308) target = $region28
      $region27: #{my_lstm_forward.2} parent=11 // pred_region
        _
      $region28: #{my_lstm_forward.2} parent=11 // pred_fallthru
        _
      // Predicated region
      $region29: #{my_lstm_forward.2} parent=11 // pred_check
        %p311 = pneg %p230
      $region30: #{my_lstm_forward.2} parent=11 // pred_check_branch
        %313 = sbr.rel (%p311) target = $region32
      $region31: #{my_lstm_forward.2} parent=11 // pred_region
        _
      $region32: #{my_lstm_forward.2} parent=11 // pred_fallthru
        _
    $region12: #{my_lstm_forward.2} parent=5 // pred_fallthru
      _
    %p314 = scmp.lt.s32.totalorder %s17, 4
    // Predicated region
    $region33: #{my_lstm_forward.2} parent=5 // pred_check
      %p315 = pneg %p314
    $region34: #{my_lstm_forward.2} parent=5 // pred_check_branch
      %317 = sbr.rel (%p315) target = $region36
    $region35: #{my_lstm_forward.2} parent=5 // pred_region
      // Predicated region
      $region37: #{my_lstm_forward.2} parent=35 // pred_check
        %p318 = pneg %p37
      $region38: #{my_lstm_forward.2} parent=35 // pred_check_branch
        %320 = sbr.rel (%p318) target = $region40
      $region39: #{my_lstm_forward.2} parent=35 // pred_region
        %s321 = smul.u32 2, %s17
        %p322 = scmp.lt.s32.totalorder %s321, 7
        %s323 = scalar_select %p322, %s321, 7
        %s324 = smul.addr %s323, 4
        %s325 = smul.addr %s324, 4
        %s326 = scalar_lea.vmem %s0, %s325
        %s327 = smul.u32 2, %s17
      $region40: #{my_lstm_forward.2} parent=35 // pred_fallthru
        _
      // Predicated region
      $region41: #{my_lstm_forward.2} parent=35 // pred_check
        %p328 = pneg %p65
      $region42: #{my_lstm_forward.2} parent=35 // pred_check_branch
        %330 = sbr.rel (%p328) target = $region44
      $region43: #{my_lstm_forward.2} parent=35 // pred_region
        %s331 = ssub.s32 3, %s17
        %s332 = smul.u32 2, %s331
        %p333 = scmp.lt.s32.totalorder %s332, 7
        %s334 = scalar_select %p333, %s332, 7
        %s335 = smul.addr %s334, 4
        %s336 = smul.addr %s335, 4
        %s337 = scalar_lea.vmem %s1, %s336
        %s338 = ssub.s32 3, %s17
        %s339 = smul.u32 2, %s338
      $region44: #{my_lstm_forward.2} parent=35 // pred_fallthru
        _
      // Predicated region
      $region45: #{my_lstm_forward.2} parent=35 // pred_check
        %p340 = pneg %p91
      $region46: #{my_lstm_forward.2} parent=35 // pred_check_branch
        %342 = sbr.rel (%p340) target = $region48
      $region47: #{my_lstm_forward.2} parent=35 // pred_region
        %s343 = smul.u32 2, %s17
        %p344 = scmp.lt.s32.totalorder %s343, 7
        %s345 = scalar_select %p344, %s343, 7
        %s346 = smul.addr %s345, 4
        %s347 = scalar_lea.vmem %s2, %s346
        %s348 = smul.u32 2, %s17
      $region48: #{my_lstm_forward.2} parent=35 // pred_fallthru
        _
      // Predicated region
      $region49: #{my_lstm_forward.2} parent=35 // pred_check
        %p349 = pneg %p119
      $region50: #{my_lstm_forward.2} parent=35 // pred_check_branch
        %351 = sbr.rel (%p349) target = $region52
      $region51: #{my_lstm_forward.2} parent=35 // pred_region
        %s352 = ssub.s32 3, %s17
        %s353 = smul.u32 2, %s352
        %p354 = scmp.lt.s32.totalorder %s353, 7
        %s355 = scalar_select %p354, %s353, 7
        %s356 = smul.addr %s355, 4
        %s357 = scalar_lea.vmem %s3, %s356
        %s358 = ssub.s32 3, %s17
        %s359 = smul.u32 2, %s358
      $region52: #{my_lstm_forward.2} parent=35 // pred_fallthru
        _
    $region36: #{my_lstm_forward.2} parent=5 // pred_fallthru
      _
    %p360 = scmp.le.s32.totalorder 1, %s17
    %p361 = scmp.lt.s32.totalorder %s17, 5
    %p362 = pnand %p360, %p361
    %p363 = pneg %p362
    // Predicated region
    $region53: #{my_lstm_forward.2} parent=5 // pred_check
      _
    $region54: #{my_lstm_forward.2} parent=5 // pred_check_branch
      %365 = sbr.rel (%p362) target = $region56
    $region55: #{my_lstm_forward.2} parent=5 // pred_region
      %s366 = ssub.s32 %s17, 1
      %s367 = smul.u32 2, %s22
      %p368 = scmp.lt.s32.totalorder %s367, 7
      %s369 = scalar_select %p368, %s367, 7
      %s370 = smul.addr %s369, 4
      %s371 = smul.addr %s370, 4
      %s372 = scalar_lea.vmem %s0, %s371
      %p373 = pneg %p43
      %p374 = pneg %p40
      %s375 = ssub.s32 3, %s22
      %s376 = smul.u32 2, %s375
      %p377 = scmp.lt.s32.totalorder %s376, 7
      %s378 = scalar_select %p377, %s376, 7
      %s379 = smul.addr %s378, 4
      %s380 = smul.addr %s379, 4
      %s381 = scalar_lea.vmem %s1, %s380
      %p382 = pneg %p71
      %p383 = pneg %p68
      %s384 = smul.u32 2, %s22
      %p385 = scmp.lt.s32.totalorder %s384, 7
      %s386 = scalar_select %p385, %s384, 7
      %s387 = smul.addr %s386, 4
      %s388 = scalar_lea.vmem %s2, %s387
      %p389 = pneg %p97
      %p390 = pneg %p94
      %s391 = ssub.s32 3, %s22
      %s392 = smul.u32 2, %s391
      %p393 = scmp.lt.s32.totalorder %s392, 7
      %s394 = scalar_select %p393, %s392, 7
      %s395 = smul.addr %s394, 4
      %s396 = scalar_lea.vmem %s3, %s395
      %p397 = pneg %p125
      %p398 = pneg %p122
      %p399 = pneg %p146
      %p400 = pneg %p143
      %p401 = pneg %p167
      %p402 = pneg %p164
      %p403 = pneg %p188
      %p404 = pneg %p185
      %p405 = pneg %p209
      %p406 = pneg %p206
      %p407 = pneg %p230
      %p408 = pneg %p227
      %p409 = pneg %p256
      %p410 = pneg %p253
      %s411 = smul.u32 2, %s22
      %p412 = scmp.lt.s32.totalorder %s411, 7
      %s413 = scalar_select %p412, %s411, 7
      %s414 = smul.addr %s413, 4
      %s415 = scalar_lea.vmem %s9, %s414
      %p416 = pneg %p284
      %p417 = pneg %p281
      %s418 = ssub.s32 3, %s22
      %s419 = smul.u32 2, %s418
      %p420 = scmp.lt.s32.totalorder %s419, 7
      %s421 = scalar_select %p420, %s419, 7
      %s422 = smul.addr %s421, 4
      %s423 = scalar_lea.vmem %s10, %s422
      %s424 = smul.u32 2, %s22
      %p425 = scmp.lt.s32.totalorder %s424, 7
      %s426 = scalar_select %p425, %s424, 7
      %s427 = smul.addr %s426, 4
      %s428 = smul.addr %s427, 4
      %s429 = scalar_lea.vmem %s0, %s428
      %s430 = smul.u32 2, %s22
      %s431 = ssub.s32 3, %s22
      %s432 = smul.u32 2, %s431
      %p433 = scmp.lt.s32.totalorder %s432, 7
      %s434 = scalar_select %p433, %s432, 7
      %s435 = smul.addr %s434, 4
      %s436 = smul.addr %s435, 4
      %s437 = scalar_lea.vmem %s1, %s436
      %s438 = ssub.s32 3, %s22
      %s439 = smul.u32 2, %s438
      %s440 = smul.u32 2, %s22
      %p441 = scmp.lt.s32.totalorder %s440, 7
      %s442 = scalar_select %p441, %s440, 7
      %s443 = smul.addr %s442, 4
      %s444 = scalar_lea.vmem %s2, %s443
      %s445 = smul.u32 2, %s22
      %s446 = ssub.s32 3, %s22
      %s447 = smul.u32 2, %s446
      %p448 = scmp.lt.s32.totalorder %s447, 7
      %s449 = scalar_select %p448, %s447, 7
      %s450 = smul.addr %s449, 4
      %s451 = scalar_lea.vmem %s3, %s450
      %s452 = ssub.s32 3, %s22
      %s453 = smul.u32 2, %s452
      %s454 = smul.u32 2, %s22
      %p455 = scmp.lt.s32.totalorder %s454, 7
      %s456 = scalar_select %p455, %s454, 7
      %s457 = smul.addr %s456, 4
      %s458 = scalar_lea.vmem %s9, %s457
      %s459 = smul.u32 2, %s22
      %s460 = ssub.s32 3, %s22
      %s461 = smul.u32 2, %s460
      %p462 = scmp.lt.s32.totalorder %s461, 7
      %s463 = scalar_select %p462, %s461, 7
      %s464 = smul.addr %s463, 4
      %s465 = scalar_lea.vmem %s10, %s464
      %s466 = ssub.s32 3, %s22
      %s467 = smul.u32 2, %s466
      %p469 = scmp.eq.s32.totalorder %s22, 0
      // Predicated region
      $region57: #{my_lstm_forward.2} parent=55 // pred_check
        %p470 = pneg %p469
      $region58: #{my_lstm_forward.2} parent=55 // pred_check_branch
        %472 = sbr.rel (%p470) target = $region60
      $region59: #{my_lstm_forward.2} parent=55 // pred_region
        %v473 = vld [vmem:[%s4] sm:$0xff]
        %474 = vst [vmem:[#allocation2] sm:$0xff] %v473
        %s475 = scalar_lea.vmem [#allocation2], 8
        %476 = vst [vmem:[%s475] sm:$0xff] %v473
        %477 = vst [vmem:[#allocation3] sm:$0xff] 0.0
        %478 = vst [vmem:[#allocation3 + $0x8] sm:$0xff] 0.0
      $region60: #{my_lstm_forward.2} parent=55 // pred_fallthru
        _
      %v479 = vld [vmem:[#allocation2] sm:$0xff]
      %v480 = vld [vmem:[#allocation3] sm:$0xff]
      %s481 = scalar_lea.vmem [#allocation2], 8
      %v482 = vld [vmem:[%s481] sm:$0xff]
      %s483 = scalar_lea.vmem [#allocation3], 8
      %v484 = vld [vmem:[%s483] sm:$0xff]
      %v485 = vld [vmem:[%s429] sm:$0xff]
      %v486 = vld [vmem:[%s429 + $0x8] sm:$0xff]
      %v487 = vld [vmem:[%s444] sm:$0xf]
      %v488 = vunpack.c.l.bf16 %v485
      %v489 = vunpack.c.h.bf16 %v485
      %v490 = vunpack.c.l.bf16 %v486
      %v491 = vunpack.c.h.bf16 %v486
      %v492 = vld [vmem:[%s7] sm:$0xff]
      %v493 = vld [vmem:[%s7 + $0x8] sm:$0xff]
      %v494 = vld [vmem:[%s7 + $0x10] sm:$0xff]
      %v495 = vld [vmem:[%s7 + $0x18] sm:$0xff]
      %v496 = vadd.f32 %v488, %v492
      %v497 = vadd.f32 %v489, %v493
      %v498 = vadd.f32 %v490, %v494
      %v499 = vadd.f32 %v491, %v495
      %v500 = vpack.c.bf16 %v479, %v479
      %v501 = vld [vmem:[%s5] sm:$0xff]
      %v502 = vld [vmem:[%s5 + $0x8] sm:$0xff]
      %v503 = vld [vmem:[%s5 + $0x10] sm:$0xff]
      %v504 = vld [vmem:[%s5 + $0x18] sm:$0xff]
      %v505 = vld [vmem:[%s5 + $0x20] sm:$0xff]
      %v506 = vld [vmem:[%s5 + $0x28] sm:$0xff]
      %v507 = vld [vmem:[%s5 + $0x30] sm:$0xff]
      %v508 = vld [vmem:[%s5 + $0x38] sm:$0xff]
      %v509 = vld [vmem:[%s5 + $0x40] sm:$0xff]
      %v510 = vld [vmem:[%s5 + $0x48] sm:$0xff]
      %v511 = vld [vmem:[%s5 + $0x50] sm:$0xff]
      %v512 = vld [vmem:[%s5 + $0x58] sm:$0xff]
      %v513 = vld [vmem:[%s5 + $0x60] sm:$0xff]
      %v514 = vld [vmem:[%s5 + $0x68] sm:$0xff]
      %v515 = vld [vmem:[%s5 + $0x70] sm:$0xff]
      %v516 = vld [vmem:[%s5 + $0x78] sm:$0xff]
      %v517 = vld [vmem:[%s5 + $0x80] sm:$0xff]
      %v518 = vld [vmem:[%s5 + $0x88] sm:$0xff]
      %v519 = vld [vmem:[%s5 + $0x90] sm:$0xff]
      %v520 = vld [vmem:[%s5 + $0x98] sm:$0xff]
      %v521 = vld [vmem:[%s5 + $0xa0] sm:$0xff]
      %v522 = vld [vmem:[%s5 + $0xa8] sm:$0xff]
      %v523 = vld [vmem:[%s5 + $0xb0] sm:$0xff]
      %v524 = vld [vmem:[%s5 + $0xb8] sm:$0xff]
      %v525 = vld [vmem:[%s5 + $0xc0] sm:$0xff]
      %v526 = vld [vmem:[%s5 + $0xc8] sm:$0xff]
      %v527 = vld [vmem:[%s5 + $0xd0] sm:$0xff]
      %v528 = vld [vmem:[%s5 + $0xd8] sm:$0xff]
      %v529 = vld [vmem:[%s5 + $0xe0] sm:$0xff]
      %v530 = vld [vmem:[%s5 + $0xe8] sm:$0xff]
      %v531 = vld [vmem:[%s5 + $0xf0] sm:$0xff]
      %v532 = vld [vmem:[%s5 + $0xf8] sm:$0xff]
      %v565 = vunpack.c.l.b16 %v501
      %v566 = vunpack.c.h.b16 %v501
      %v567 = vunpack.c.l.b16 %v502
      %v568 = vunpack.c.h.b16 %v502
      %v569 = vunpack.c.l.b16 %v503
      %v570 = vunpack.c.h.b16 %v503
      %v571 = vunpack.c.l.b16 %v504
      %v572 = vunpack.c.h.b16 %v504
      %v573 = vunpack.c.l.b16 %v505
      %v574 = vunpack.c.h.b16 %v505
      %v575 = vunpack.c.l.b16 %v506
      %v576 = vunpack.c.h.b16 %v506
      %v577 = vunpack.c.l.b16 %v507
      %v578 = vunpack.c.h.b16 %v507
      %v579 = vunpack.c.l.b16 %v508
      %v580 = vunpack.c.h.b16 %v508
      %v581 = vunpack.c.l.b16 %v509
      %v582 = vunpack.c.h.b16 %v509
      %v583 = vunpack.c.l.b16 %v510
      %v584 = vunpack.c.h.b16 %v510
      %v585 = vunpack.c.l.b16 %v511
      %v586 = vunpack.c.h.b16 %v511
      %v587 = vunpack.c.l.b16 %v512
      %v588 = vunpack.c.h.b16 %v512
      %v589 = vunpack.c.l.b16 %v513
      %v590 = vunpack.c.h.b16 %v513
      %v591 = vunpack.c.l.b16 %v514
      %v592 = vunpack.c.h.b16 %v514
      %v593 = vunpack.c.l.b16 %v515
      %v594 = vunpack.c.h.b16 %v515
      %v595 = vunpack.c.l.b16 %v516
      %v596 = vunpack.c.h.b16 %v516
      %v597 = vunpack.c.l.b16 %v517
      %v598 = vunpack.c.h.b16 %v517
      %v599 = vunpack.c.l.b16 %v518
      %v600 = vunpack.c.h.b16 %v518
      %v601 = vunpack.c.l.b16 %v519
      %v602 = vunpack.c.h.b16 %v519
      %v603 = vunpack.c.l.b16 %v520
      %v604 = vunpack.c.h.b16 %v520
      %v605 = vunpack.c.l.b16 %v521
      %v606 = vunpack.c.h.b16 %v521
      %v607 = vunpack.c.l.b16 %v522
      %v608 = vunpack.c.h.b16 %v522
      %v609 = vunpack.c.l.b16 %v523
      %v610 = vunpack.c.h.b16 %v523
      %v611 = vunpack.c.l.b16 %v524
      %v612 = vunpack.c.h.b16 %v524
      %v613 = vunpack.c.l.b16 %v525
      %v614 = vunpack.c.h.b16 %v525
      %v615 = vunpack.c.l.b16 %v526
      %v616 = vunpack.c.h.b16 %v526
      %v617 = vunpack.c.l.b16 %v527
      %v618 = vunpack.c.h.b16 %v527
      %v619 = vunpack.c.l.b16 %v528
      %v620 = vunpack.c.h.b16 %v528
      %v621 = vunpack.c.l.b16 %v529
      %v622 = vunpack.c.h.b16 %v529
      %v623 = vunpack.c.l.b16 %v530
      %v624 = vunpack.c.h.b16 %v530
      %v625 = vunpack.c.l.b16 %v531
      %v626 = vunpack.c.h.b16 %v531
      %v627 = vunpack.c.l.b16 %v532
      %v628 = vunpack.c.h.b16 %v532
      %v629 = vpack.c.b16 %v569, %v565
      %v630 = vpack.c.b16 %v570, %v566
      %v631 = vpack.c.b16 %v571, %v567
      %v632 = vpack.c.b16 %v572, %v568
      %v633 = vpack.c.b16 %v577, %v573
      %v634 = vpack.c.b16 %v578, %v574
      %v635 = vpack.c.b16 %v579, %v575
      %v636 = vpack.c.b16 %v580, %v576
      %v637 = vpack.c.b16 %v585, %v581
      %v638 = vpack.c.b16 %v586, %v582
      %v639 = vpack.c.b16 %v587, %v583
      %v640 = vpack.c.b16 %v588, %v584
      %v641 = vpack.c.b16 %v593, %v589
      %v642 = vpack.c.b16 %v594, %v590
      %v643 = vpack.c.b16 %v595, %v591
      %v644 = vpack.c.b16 %v596, %v592
      %v645 = vpack.c.b16 %v601, %v597
      %v646 = vpack.c.b16 %v602, %v598
      %v647 = vpack.c.b16 %v603, %v599
      %v648 = vpack.c.b16 %v604, %v600
      %v649 = vpack.c.b16 %v609, %v605
      %v650 = vpack.c.b16 %v610, %v606
      %v651 = vpack.c.b16 %v611, %v607
      %v652 = vpack.c.b16 %v612, %v608
      %v653 = vpack.c.b16 %v617, %v613
      %v654 = vpack.c.b16 %v618, %v614
      %v655 = vpack.c.b16 %v619, %v615
      %v656 = vpack.c.b16 %v620, %v616
      %v657 = vpack.c.b16 %v625, %v621
      %v658 = vpack.c.b16 %v626, %v622
      %v659 = vpack.c.b16 %v627, %v623
      %v660 = vpack.c.b16 %v628, %v624
      %693 = vmatprep.subr.bf16.mxu0 %v630
      %694 = vmatpush1.bf16.msra.mxu0 %v629
      %695 = vmatprep.subr.bf16.mxu0 %v634
      %696 = vmatpush1.bf16.msra.mxu0 %v633
      %697 = vmatprep.subr.bf16.mxu0 %v638
      %698 = vmatpush1.bf16.msra.mxu0 %v637
      %699 = vmatprep.subr.bf16.mxu0 %v642
      %700 = vmatpush1.bf16.msra.mxu0 %v641
      %701 = vmatprep.subr.bf16.mxu0 %v646
      %702 = vmatpush1.bf16.msra.mxu0 %v645
      %703 = vmatprep.subr.bf16.mxu0 %v650
      %704 = vmatpush1.bf16.msra.mxu0 %v649
      %705 = vmatprep.subr.bf16.mxu0 %v654
      %706 = vmatpush1.bf16.msra.mxu0 %v653
      %707 = vmatprep.subr.bf16.mxu0 %v658
      %708 = vmatpush1.bf16.msra.mxu0 %v657
      %709 = vmatprep.subr.bf16.mxu0 0
      %710 = vmatpush1.bf16.msra.mxu0 0
      %711 = vmatprep.subr.bf16.mxu0 0
      %712 = vmatpush1.bf16.msra.mxu0 0
      %713 = vmatprep.subr.bf16.mxu0 0
      %714 = vmatpush1.bf16.msra.mxu0 0
      %715 = vmatprep.subr.bf16.mxu0 0
      %716 = vmatpush1.bf16.msra.mxu0 0
      %717 = vmatprep.subr.bf16.mxu0 0
      %718 = vmatpush1.bf16.msra.mxu0 0
      %719 = vmatprep.subr.bf16.mxu0 0
      %720 = vmatpush1.bf16.msra.mxu0 0
      %721 = vmatprep.subr.bf16.mxu0 0
      %722 = vmatpush1.bf16.msra.mxu0 0
      %723 = vmatprep.subr.bf16.mxu0 0
      %724 = vmatpush1.bf16.msra.mxu0 0
      %725 = vmatprep.mubr.bf16.mxu0 0
      %726 = vmatmul.mubr.bf16.gmra.mrb[0].mxu0 %v500
      %v727 = vpop.f32.mrb[0].mxu0
      %v728 = vadd.f32 0.0, %v727
      %v729 = vpop.f32.mrb[0].mxu0
      %v730 = vadd.f32 0.0, %v729
      %v731 = vpop.f32.mrb[0].mxu0
      %v732 = vpop.f32.mrb[0].mxu0
      %733 = vdwg.mxu0
      %734 = vmatprep.subr.bf16.mxu0 %v632
      %735 = vmatpush1.bf16.msra.mxu0 %v631
      %736 = vmatprep.subr.bf16.mxu0 %v636
      %737 = vmatpush1.bf16.msra.mxu0 %v635
      %738 = vmatprep.subr.bf16.mxu0 %v640
      %739 = vmatpush1.bf16.msra.mxu0 %v639
      %740 = vmatprep.subr.bf16.mxu0 %v644
      %741 = vmatpush1.bf16.msra.mxu0 %v643
      %742 = vmatprep.subr.bf16.mxu0 %v648
      %743 = vmatpush1.bf16.msra.mxu0 %v647
      %744 = vmatprep.subr.bf16.mxu0 %v652
      %745 = vmatpush1.bf16.msra.mxu0 %v651
      %746 = vmatprep.subr.bf16.mxu0 %v656
      %747 = vmatpush1.bf16.msra.mxu0 %v655
      %748 = vmatprep.subr.bf16.mxu0 %v660
      %749 = vmatpush1.bf16.msra.mxu0 %v659
      %750 = vmatprep.subr.bf16.mxu0 0
      %751 = vmatpush1.bf16.msra.mxu0 0
      %752 = vmatprep.subr.bf16.mxu0 0
      %753 = vmatpush1.bf16.msra.mxu0 0
      %754 = vmatprep.subr.bf16.mxu0 0
      %755 = vmatpush1.bf16.msra.mxu0 0
      %756 = vmatprep.subr.bf16.mxu0 0
      %757 = vmatpush1.bf16.msra.mxu0 0
      %758 = vmatprep.subr.bf16.mxu0 0
      %759 = vmatpush1.bf16.msra.mxu0 0
      %760 = vmatprep.subr.bf16.mxu0 0
      %761 = vmatpush1.bf16.msra.mxu0 0
      %762 = vmatprep.subr.bf16.mxu0 0
      %763 = vmatpush1.bf16.msra.mxu0 0
      %764 = vmatprep.subr.bf16.mxu0 0
      %765 = vmatpush1.bf16.msra.mxu0 0
      %766 = vmatprep.mubr.bf16.mxu0 0
      %767 = vmatmul.mubr.bf16.gmra.mrb[0].mxu0 %v500
      %v768 = vpop.f32.mrb[0].mxu0
      %v769 = vadd.f32 0.0, %v768
      %v770 = vpop.f32.mrb[0].mxu0
      %v771 = vadd.f32 0.0, %v770
      %v772 = vpop.f32.mrb[0].mxu0
      %v773 = vpop.f32.mrb[0].mxu0
      %774 = vdwg.mxu0
      %v775 = vadd.f32 %v496, %v728
      %v776 = vadd.f32 %v497, %v730
      %v777 = vadd.f32 %v498, %v769
      %v778 = vadd.f32 %v499, %v771
      %v779 = vxor.u32 %v775, 2147483648
      %v780 = vxor.u32 %v776, 2147483648
      %v781 = vxor.u32 %v777, 2147483648
      %v782 = vmul.f32 %v779, 1.442695
      %v783 = vpow.pop %v782
      %v784 = vmul.f32 %v780, 1.442695
      %v785 = vpow.pop %v784
      %v786 = vmul.f32 %v781, 1.442695
      %v787 = vpow.pop %v786
      %v788 = vadd.f32 %v783, 1.0
      %v789 = vadd.f32 %v785, 1.0
      %v790 = vadd.f32 %v787, 1.0
      %v791 = vrcp.pop %v788
      %v792 = vmul.f32 1.0, %v791
      %v793 = vrcp.pop %v789
      %v794 = vmul.f32 1.0, %v793
      %v795 = vrcp.pop %v790
      %v796 = vmul.f32 1.0, %v795
      %v797 = vtanh.pop %v778
      %v798 = vmul.f32 %v794, %v480
      %v799 = vmul.f32 %v792, %v797
      %v800 = vadd.f32 %v798, %v799
      %v801 = vtanh.pop %v800
      %v802 = vmul.f32 %v796, %v801
      %v803 = vunpack.c.l.bf16 %v487
      %v804 = vmul.f32 %v802, %v803
      %v805 = vmul.f32 %v800, %v803
      %v806 = vpack.c.bf16 %v804, %v804
      %807 = vst [vmem:[%s458] sm:$0xf] %v806
      %s808 = scalar_lea.vmem %s437, 16
      %v809 = vld [vmem:[%s808] sm:$0xff]
      %v810 = vld [vmem:[%s808 + $0x8] sm:$0xff]
      %s811 = scalar_lea.vmem %s451, 4
      %v812 = vld [vmem:[%s811] sm:$0xf]
      %v813 = vunpack.c.l.bf16 %v809
      %v814 = vunpack.c.h.bf16 %v809
      %v815 = vunpack.c.l.bf16 %v810
      %v816 = vunpack.c.h.bf16 %v810
      %v817 = vld [vmem:[%s8] sm:$0xff]
      %v818 = vld [vmem:[%s8 + $0x8] sm:$0xff]
      %v819 = vld [vmem:[%s8 + $0x10] sm:$0xff]
      %v820 = vld [vmem:[%s8 + $0x18] sm:$0xff]
      %v821 = vadd.f32 %v813, %v817
      %v822 = vadd.f32 %v814, %v818
      %v823 = vadd.f32 %v815, %v819
      %v824 = vadd.f32 %v816, %v820
      %v825 = vpack.c.bf16 %v482, %v482
      %v826 = vld [vmem:[%s6] sm:$0xff]
      %v827 = vld [vmem:[%s6 + $0x8] sm:$0xff]
      %v828 = vld [vmem:[%s6 + $0x10] sm:$0xff]
      %v829 = vld [vmem:[%s6 + $0x18] sm:$0xff]
      %v830 = vld [vmem:[%s6 + $0x20] sm:$0xff]
      %v831 = vld [vmem:[%s6 + $0x28] sm:$0xff]
      %v832 = vld [vmem:[%s6 + $0x30] sm:$0xff]
      %v833 = vld [vmem:[%s6 + $0x38] sm:$0xff]
      %v834 = vld [vmem:[%s6 + $0x40] sm:$0xff]
      %v835 = vld [vmem:[%s6 + $0x48] sm:$0xff]
      %v836 = vld [vmem:[%s6 + $0x50] sm:$0xff]
      %v837 = vld [vmem:[%s6 + $0x58] sm:$0xff]
      %v838 = vld [vmem:[%s6 + $0x60] sm:$0xff]
      %v839 = vld [vmem:[%s6 + $0x68] sm:$0xff]
      %v840 = vld [vmem:[%s6 + $0x70] sm:$0xff]
      %v841 = vld [vmem:[%s6 + $0x78] sm:$0xff]
      %v842 = vld [vmem:[%s6 + $0x80] sm:$0xff]
      %v843 = vld [vmem:[%s6 + $0x88] sm:$0xff]
      %v844 = vld [vmem:[%s6 + $0x90] sm:$0xff]
      %v845 = vld [vmem:[%s6 + $0x98] sm:$0xff]
      %v846 = vld [vmem:[%s6 + $0xa0] sm:$0xff]
      %v847 = vld [vmem:[%s6 + $0xa8] sm:$0xff]
      %v848 = vld [vmem:[%s6 + $0xb0] sm:$0xff]
      %v849 = vld [vmem:[%s6 + $0xb8] sm:$0xff]
      %v850 = vld [vmem:[%s6 + $0xc0] sm:$0xff]
      %v851 = vld [vmem:[%s6 + $0xc8] sm:$0xff]
      %v852 = vld [vmem:[%s6 + $0xd0] sm:$0xff]
      %v853 = vld [vmem:[%s6 + $0xd8] sm:$0xff]
      %v854 = vld [vmem:[%s6 + $0xe0] sm:$0xff]
      %v855 = vld [vmem:[%s6 + $0xe8] sm:$0xff]
      %v856 = vld [vmem:[%s6 + $0xf0] sm:$0xff]
      %v857 = vld [vmem:[%s6 + $0xf8] sm:$0xff]
      %v890 = vunpack.c.l.b16 %v826
      %v891 = vunpack.c.h.b16 %v826
      %v892 = vunpack.c.l.b16 %v827
      %v893 = vunpack.c.h.b16 %v827
      %v894 = vunpack.c.l.b16 %v828
      %v895 = vunpack.c.h.b16 %v828
      %v896 = vunpack.c.l.b16 %v829
      %v897 = vunpack.c.h.b16 %v829
      %v898 = vunpack.c.l.b16 %v830
      %v899 = vunpack.c.h.b16 %v830
      %v900 = vunpack.c.l.b16 %v831
      %v901 = vunpack.c.h.b16 %v831
      %v902 = vunpack.c.l.b16 %v832
      %v903 = vunpack.c.h.b16 %v832
      %v904 = vunpack.c.l.b16 %v833
      %v905 = vunpack.c.h.b16 %v833
      %v906 = vunpack.c.l.b16 %v834
      %v907 = vunpack.c.h.b16 %v834
      %v908 = vunpack.c.l.b16 %v835
      %v909 = vunpack.c.h.b16 %v835
      %v910 = vunpack.c.l.b16 %v836
      %v911 = vunpack.c.h.b16 %v836
      %v912 = vunpack.c.l.b16 %v837
      %v913 = vunpack.c.h.b16 %v837
      %v914 = vunpack.c.l.b16 %v838
      %v915 = vunpack.c.h.b16 %v838
      %v916 = vunpack.c.l.b16 %v839
      %v917 = vunpack.c.h.b16 %v839
      %v918 = vunpack.c.l.b16 %v840
      %v919 = vunpack.c.h.b16 %v840
      %v920 = vunpack.c.l.b16 %v841
      %v921 = vunpack.c.h.b16 %v841
      %v922 = vunpack.c.l.b16 %v842
      %v923 = vunpack.c.h.b16 %v842
      %v924 = vunpack.c.l.b16 %v843
      %v925 = vunpack.c.h.b16 %v843
      %v926 = vunpack.c.l.b16 %v844
      %v927 = vunpack.c.h.b16 %v844
      %v928 = vunpack.c.l.b16 %v845
      %v929 = vunpack.c.h.b16 %v845
      %v930 = vunpack.c.l.b16 %v846
      %v931 = vunpack.c.h.b16 %v846
      %v932 = vunpack.c.l.b16 %v847
      %v933 = vunpack.c.h.b16 %v847
      %v934 = vunpack.c.l.b16 %v848
      %v935 = vunpack.c.h.b16 %v848
      %v936 = vunpack.c.l.b16 %v849
      %v937 = vunpack.c.h.b16 %v849
      %v938 = vunpack.c.l.b16 %v850
      %v939 = vunpack.c.h.b16 %v850
      %v940 = vunpack.c.l.b16 %v851
      %v941 = vunpack.c.h.b16 %v851
      %v942 = vunpack.c.l.b16 %v852
      %v943 = vunpack.c.h.b16 %v852
      %v944 = vunpack.c.l.b16 %v853
      %v945 = vunpack.c.h.b16 %v853
      %v946 = vunpack.c.l.b16 %v854
      %v947 = vunpack.c.h.b16 %v854
      %v948 = vunpack.c.l.b16 %v855
      %v949 = vunpack.c.h.b16 %v855
      %v950 = vunpack.c.l.b16 %v856
      %v951 = vunpack.c.h.b16 %v856
      %v952 = vunpack.c.l.b16 %v857
      %v953 = vunpack.c.h.b16 %v857
      %v954 = vpack.c.b16 %v894, %v890
      %v955 = vpack.c.b16 %v895, %v891
      %v956 = vpack.c.b16 %v896, %v892
      %v957 = vpack.c.b16 %v897, %v893
      %v958 = vpack.c.b16 %v902, %v898
      %v959 = vpack.c.b16 %v903, %v899
      %v960 = vpack.c.b16 %v904, %v900
      %v961 = vpack.c.b16 %v905, %v901
      %v962 = vpack.c.b16 %v910, %v906
      %v963 = vpack.c.b16 %v911, %v907
      %v964 = vpack.c.b16 %v912, %v908
      %v965 = vpack.c.b16 %v913, %v909
      %v966 = vpack.c.b16 %v918, %v914
      %v967 = vpack.c.b16 %v919, %v915
      %v968 = vpack.c.b16 %v920, %v916
      %v969 = vpack.c.b16 %v921, %v917
      %v970 = vpack.c.b16 %v926, %v922
      %v971 = vpack.c.b16 %v927, %v923
      %v972 = vpack.c.b16 %v928, %v924
      %v973 = vpack.c.b16 %v929, %v925
      %v974 = vpack.c.b16 %v934, %v930
      %v975 = vpack.c.b16 %v935, %v931
      %v976 = vpack.c.b16 %v936, %v932
      %v977 = vpack.c.b16 %v937, %v933
      %v978 = vpack.c.b16 %v942, %v938
      %v979 = vpack.c.b16 %v943, %v939
      %v980 = vpack.c.b16 %v944, %v940
      %v981 = vpack.c.b16 %v945, %v941
      %v982 = vpack.c.b16 %v950, %v946
      %v983 = vpack.c.b16 %v951, %v947
      %v984 = vpack.c.b16 %v952, %v948
      %v985 = vpack.c.b16 %v953, %v949
      %1018 = vmatprep.subr.bf16.mxu0 %v955
      %1019 = vmatpush1.bf16.msra.mxu0 %v954
      %1020 = vmatprep.subr.bf16.mxu0 %v959
      %1021 = vmatpush1.bf16.msra.mxu0 %v958
      %1022 = vmatprep.subr.bf16.mxu0 %v963
      %1023 = vmatpush1.bf16.msra.mxu0 %v962
      %1024 = vmatprep.subr.bf16.mxu0 %v967
      %1025 = vmatpush1.bf16.msra.mxu0 %v966
      %1026 = vmatprep.subr.bf16.mxu0 %v971
      %1027 = vmatpush1.bf16.msra.mxu0 %v970
      %1028 = vmatprep.subr.bf16.mxu0 %v975
      %1029 = vmatpush1.bf16.msra.mxu0 %v974
      %1030 = vmatprep.subr.bf16.mxu0 %v979
      %1031 = vmatpush1.bf16.msra.mxu0 %v978
      %1032 = vmatprep.subr.bf16.mxu0 %v983
      %1033 = vmatpush1.bf16.msra.mxu0 %v982
      %1034 = vmatprep.subr.bf16.mxu0 0
      %1035 = vmatpush1.bf16.msra.mxu0 0
      %1036 = vmatprep.subr.bf16.mxu0 0
      %1037 = vmatpush1.bf16.msra.mxu0 0
      %1038 = vmatprep.subr.bf16.mxu0 0
      %1039 = vmatpush1.bf16.msra.mxu0 0
      %1040 = vmatprep.subr.bf16.mxu0 0
      %1041 = vmatpush1.bf16.msra.mxu0 0
      %1042 = vmatprep.subr.bf16.mxu0 0
      %1043 = vmatpush1.bf16.msra.mxu0 0
      %1044 = vmatprep.subr.bf16.mxu0 0
      %1045 = vmatpush1.bf16.msra.mxu0 0
      %1046 = vmatprep.subr.bf16.mxu0 0
      %1047 = vmatpush1.bf16.msra.mxu0 0
      %1048 = vmatprep.subr.bf16.mxu0 0
      %1049 = vmatpush1.bf16.msra.mxu0 0
      %1050 = vmatprep.mubr.bf16.mxu0 0
      %1051 = vmatmul.mubr.bf16.gmra.mrb[0].mxu0 %v825
      %v1052 = vpop.f32.mrb[0].mxu0
      %v1053 = vadd.f32 0.0, %v1052
      %v1054 = vpop.f32.mrb[0].mxu0
      %v1055 = vadd.f32 0.0, %v1054
      %v1056 = vpop.f32.mrb[0].mxu0
      %v1057 = vpop.f32.mrb[0].mxu0
      %1058 = vdwg.mxu0
      %1059 = vmatprep.subr.bf16.mxu0 %v957
      %1060 = vmatpush1.bf16.msra.mxu0 %v956
      %1061 = vmatprep.subr.bf16.mxu0 %v961
      %1062 = vmatpush1.bf16.msra.mxu0 %v960
      %1063 = vmatprep.subr.bf16.mxu0 %v965
      %1064 = vmatpush1.bf16.msra.mxu0 %v964
      %1065 = vmatprep.subr.bf16.mxu0 %v969
      %1066 = vmatpush1.bf16.msra.mxu0 %v968
      %1067 = vmatprep.subr.bf16.mxu0 %v973
      %1068 = vmatpush1.bf16.msra.mxu0 %v972
      %1069 = vmatprep.subr.bf16.mxu0 %v977
      %1070 = vmatpush1.bf16.msra.mxu0 %v976
      %1071 = vmatprep.subr.bf16.mxu0 %v981
      %1072 = vmatpush1.bf16.msra.mxu0 %v980
      %1073 = vmatprep.subr.bf16.mxu0 %v985
      %1074 = vmatpush1.bf16.msra.mxu0 %v984
      %1075 = vmatprep.subr.bf16.mxu0 0
      %1076 = vmatpush1.bf16.msra.mxu0 0
      %1077 = vmatprep.subr.bf16.mxu0 0
      %1078 = vmatpush1.bf16.msra.mxu0 0
      %1079 = vmatprep.subr.bf16.mxu0 0
      %1080 = vmatpush1.bf16.msra.mxu0 0
      %1081 = vmatprep.subr.bf16.mxu0 0
      %1082 = vmatpush1.bf16.msra.mxu0 0
      %1083 = vmatprep.subr.bf16.mxu0 0
      %1084 = vmatpush1.bf16.msra.mxu0 0
      %1085 = vmatprep.subr.bf16.mxu0 0
      %1086 = vmatpush1.bf16.msra.mxu0 0
      %1087 = vmatprep.subr.bf16.mxu0 0
      %1088 = vmatpush1.bf16.msra.mxu0 0
      %1089 = vmatprep.subr.bf16.mxu0 0
      %1090 = vmatpush1.bf16.msra.mxu0 0
      %1091 = vmatprep.mubr.bf16.mxu0 0
      %1092 = vmatmul.mubr.bf16.gmra.mrb[0].mxu0 %v825
      %v1093 = vpop.f32.mrb[0].mxu0
      %v1094 = vadd.f32 0.0, %v1093
      %v1095 = vpop.f32.mrb[0].mxu0
      %v1096 = vadd.f32 0.0, %v1095
      %v1097 = vpop.f32.mrb[0].mxu0
      %v1098 = vpop.f32.mrb[0].mxu0
      %1099 = vdwg.mxu0
      %v1100 = vadd.f32 %v821, %v1053
      %v1101 = vadd.f32 %v822, %v1055
      %v1102 = vadd.f32 %v823, %v1094
      %v1103 = vadd.f32 %v824, %v1096
      %v1104 = vxor.u32 %v1100, 2147483648
      %v1105 = vxor.u32 %v1101, 2147483648
      %v1106 = vxor.u32 %v1102, 2147483648
      %v1107 = vmul.f32 %v1104, 1.442695
      %v1108 = vpow.pop %v1107
      %v1109 = vmul.f32 %v1105, 1.442695
      %v1110 = vpow.pop %v1109
      %v1111 = vmul.f32 %v1106, 1.442695
      %v1112 = vpow.pop %v1111
      %v1113 = vadd.f32 %v1108, 1.0
      %v1114 = vadd.f32 %v1110, 1.0
      %v1115 = vadd.f32 %v1112, 1.0
      %v1116 = vrcp.pop %v1113
      %v1117 = vmul.f32 1.0, %v1116
      %v1118 = vrcp.pop %v1114
      %v1119 = vmul.f32 1.0, %v1118
      %v1120 = vrcp.pop %v1115
      %v1121 = vmul.f32 1.0, %v1120
      %v1122 = vtanh.pop %v1103
      %v1123 = vmul.f32 %v1119, %v484
      %v1124 = vmul.f32 %v1117, %v1122
      %v1125 = vadd.f32 %v1123, %v1124
      %v1126 = vtanh.pop %v1125
      %v1127 = vmul.f32 %v1121, %v1126
      %v1128 = vunpack.c.l.bf16 %v812
      %v1129 = vmul.f32 %v1127, %v1128
      %v1130 = vmul.f32 %v1125, %v1128
      %v1131 = vpack.c.bf16 %v1129, %v1129
      %s1132 = scalar_lea.vmem %s465, 4
      %1133 = vst [vmem:[%s1132] sm:$0xf] %v1131
      %s1134 = scalar_lea.vmem %s429, 16
      %v1135 = vld [vmem:[%s1134] sm:$0xff]
      %v1136 = vld [vmem:[%s1134 + $0x8] sm:$0xff]
      %s1137 = scalar_lea.vmem %s444, 4
      %v1138 = vld [vmem:[%s1137] sm:$0xf]
      %v1139 = vunpack.c.l.bf16 %v1135
      %v1140 = vunpack.c.h.bf16 %v1135
      %v1141 = vunpack.c.l.bf16 %v1136
      %v1142 = vunpack.c.h.bf16 %v1136
      %v1143 = vld [vmem:[%s7] sm:$0xff]
      %v1144 = vld [vmem:[%s7 + $0x8] sm:$0xff]
      %v1145 = vld [vmem:[%s7 + $0x10] sm:$0xff]
      %v1146 = vld [vmem:[%s7 + $0x18] sm:$0xff]
      %v1147 = vadd.f32 %v1139, %v1143
      %v1148 = vadd.f32 %v1140, %v1144
      %v1149 = vadd.f32 %v1141, %v1145
      %v1150 = vadd.f32 %v1142, %v1146
      %v1151 = vld [vmem:[%s5] sm:$0xff]
      %v1152 = vld [vmem:[%s5 + $0x8] sm:$0xff]
      %v1153 = vld [vmem:[%s5 + $0x10] sm:$0xff]
      %v1154 = vld [vmem:[%s5 + $0x18] sm:$0xff]
      %v1155 = vld [vmem:[%s5 + $0x20] sm:$0xff]
      %v1156 = vld [vmem:[%s5 + $0x28] sm:$0xff]
      %v1157 = vld [vmem:[%s5 + $0x30] sm:$0xff]
      %v1158 = vld [vmem:[%s5 + $0x38] sm:$0xff]
      %v1159 = vld [vmem:[%s5 + $0x40] sm:$0xff]
      %v1160 = vld [vmem:[%s5 + $0x48] sm:$0xff]
      %v1161 = vld [vmem:[%s5 + $0x50] sm:$0xff]
      %v1162 = vld [vmem:[%s5 + $0x58] sm:$0xff]
      %v1163 = vld [vmem:[%s5 + $0x60] sm:$0xff]
      %v1164 = vld [vmem:[%s5 + $0x68] sm:$0xff]
      %v1165 = vld [vmem:[%s5 + $0x70] sm:$0xff]
      %v1166 = vld [vmem:[%s5 + $0x78] sm:$0xff]
      %v1167 = vld [vmem:[%s5 + $0x80] sm:$0xff]
      %v1168 = vld [vmem:[%s5 + $0x88] sm:$0xff]
      %v1169 = vld [vmem:[%s5 + $0x90] sm:$0xff]
      %v1170 = vld [vmem:[%s5 + $0x98] sm:$0xff]
      %v1171 = vld [vmem:[%s5 + $0xa0] sm:$0xff]
      %v1172 = vld [vmem:[%s5 + $0xa8] sm:$0xff]
      %v1173 = vld [vmem:[%s5 + $0xb0] sm:$0xff]
      %v1174 = vld [vmem:[%s5 + $0xb8] sm:$0xff]
      %v1175 = vld [vmem:[%s5 + $0xc0] sm:$0xff]
      %v1176 = vld [vmem:[%s5 + $0xc8] sm:$0xff]
      %v1177 = vld [vmem:[%s5 + $0xd0] sm:$0xff]
      %v1178 = vld [vmem:[%s5 + $0xd8] sm:$0xff]
      %v1179 = vld [vmem:[%s5 + $0xe0] sm:$0xff]
      %v1180 = vld [vmem:[%s5 + $0xe8] sm:$0xff]
      %v1181 = vld [vmem:[%s5 + $0xf0] sm:$0xff]
      %v1182 = vld [vmem:[%s5 + $0xf8] sm:$0xff]
      %v1215 = vunpack.c.l.b16 %v1151
      %v1216 = vunpack.c.h.b16 %v1151
      %v1217 = vunpack.c.l.b16 %v1152
      %v1218 = vunpack.c.h.b16 %v1152
      %v1219 = vunpack.c.l.b16 %v1153
      %v1220 = vunpack.c.h.b16 %v1153
      %v1221 = vunpack.c.l.b16 %v1154
      %v1222 = vunpack.c.h.b16 %v1154
      %v1223 = vunpack.c.l.b16 %v1155
      %v1224 = vunpack.c.h.b16 %v1155
      %v1225 = vunpack.c.l.b16 %v1156
      %v1226 = vunpack.c.h.b16 %v1156
      %v1227 = vunpack.c.l.b16 %v1157
      %v1228 = vunpack.c.h.b16 %v1157
      %v1229 = vunpack.c.l.b16 %v1158
      %v1230 = vunpack.c.h.b16 %v1158
      %v1231 = vunpack.c.l.b16 %v1159
      %v1232 = vunpack.c.h.b16 %v1159
      %v1233 = vunpack.c.l.b16 %v1160
      %v1234 = vunpack.c.h.b16 %v1160
      %v1235 = vunpack.c.l.b16 %v1161
      %v1236 = vunpack.c.h.b16 %v1161
      %v1237 = vunpack.c.l.b16 %v1162
      %v1238 = vunpack.c.h.b16 %v1162
      %v1239 = vunpack.c.l.b16 %v1163
      %v1240 = vunpack.c.h.b16 %v1163
      %v1241 = vunpack.c.l.b16 %v1164
      %v1242 = vunpack.c.h.b16 %v1164
      %v1243 = vunpack.c.l.b16 %v1165
      %v1244 = vunpack.c.h.b16 %v1165
      %v1245 = vunpack.c.l.b16 %v1166
      %v1246 = vunpack.c.h.b16 %v1166
      %v1247 = vunpack.c.l.b16 %v1167
      %v1248 = vunpack.c.h.b16 %v1167
      %v1249 = vunpack.c.l.b16 %v1168
      %v1250 = vunpack.c.h.b16 %v1168
      %v1251 = vunpack.c.l.b16 %v1169
      %v1252 = vunpack.c.h.b16 %v1169
      %v1253 = vunpack.c.l.b16 %v1170
      %v1254 = vunpack.c.h.b16 %v1170
      %v1255 = vunpack.c.l.b16 %v1171
      %v1256 = vunpack.c.h.b16 %v1171
      %v1257 = vunpack.c.l.b16 %v1172
      %v1258 = vunpack.c.h.b16 %v1172
      %v1259 = vunpack.c.l.b16 %v1173
      %v1260 = vunpack.c.h.b16 %v1173
      %v1261 = vunpack.c.l.b16 %v1174
      %v1262 = vunpack.c.h.b16 %v1174
      %v1263 = vunpack.c.l.b16 %v1175
      %v1264 = vunpack.c.h.b16 %v1175
      %v1265 = vunpack.c.l.b16 %v1176
      %v1266 = vunpack.c.h.b16 %v1176
      %v1267 = vunpack.c.l.b16 %v1177
      %v1268 = vunpack.c.h.b16 %v1177
      %v1269 = vunpack.c.l.b16 %v1178
      %v1270 = vunpack.c.h.b16 %v1178
      %v1271 = vunpack.c.l.b16 %v1179
      %v1272 = vunpack.c.h.b16 %v1179
      %v1273 = vunpack.c.l.b16 %v1180
      %v1274 = vunpack.c.h.b16 %v1180
      %v1275 = vunpack.c.l.b16 %v1181
      %v1276 = vunpack.c.h.b16 %v1181
      %v1277 = vunpack.c.l.b16 %v1182
      %v1278 = vunpack.c.h.b16 %v1182
      %v1279 = vpack.c.b16 %v1219, %v1215
      %v1280 = vpack.c.b16 %v1220, %v1216
      %v1281 = vpack.c.b16 %v1221, %v1217
      %v1282 = vpack.c.b16 %v1222, %v1218
      %v1283 = vpack.c.b16 %v1227, %v1223
      %v1284 = vpack.c.b16 %v1228, %v1224
      %v1285 = vpack.c.b16 %v1229, %v1225
      %v1286 = vpack.c.b16 %v1230, %v1226
      %v1287 = vpack.c.b16 %v1235, %v1231
      %v1288 = vpack.c.b16 %v1236, %v1232
      %v1289 = vpack.c.b16 %v1237, %v1233
      %v1290 = vpack.c.b16 %v1238, %v1234
      %v1291 = vpack.c.b16 %v1243, %v1239
      %v1292 = vpack.c.b16 %v1244, %v1240
      %v1293 = vpack.c.b16 %v1245, %v1241
      %v1294 = vpack.c.b16 %v1246, %v1242
      %v1295 = vpack.c.b16 %v1251, %v1247
      %v1296 = vpack.c.b16 %v1252, %v1248
      %v1297 = vpack.c.b16 %v1253, %v1249
      %v1298 = vpack.c.b16 %v1254, %v1250
      %v1299 = vpack.c.b16 %v1259, %v1255
      %v1300 = vpack.c.b16 %v1260, %v1256
      %v1301 = vpack.c.b16 %v1261, %v1257
      %v1302 = vpack.c.b16 %v1262, %v1258
      %v1303 = vpack.c.b16 %v1267, %v1263
      %v1304 = vpack.c.b16 %v1268, %v1264
      %v1305 = vpack.c.b16 %v1269, %v1265
      %v1306 = vpack.c.b16 %v1270, %v1266
      %v1307 = vpack.c.b16 %v1275, %v1271
      %v1308 = vpack.c.b16 %v1276, %v1272
      %v1309 = vpack.c.b16 %v1277, %v1273
      %v1310 = vpack.c.b16 %v1278, %v1274
      %1343 = vmatprep.subr.bf16.mxu0 %v1280
      %1344 = vmatpush1.bf16.msra.mxu0 %v1279
      %1345 = vmatprep.subr.bf16.mxu0 %v1284
      %1346 = vmatpush1.bf16.msra.mxu0 %v1283
      %1347 = vmatprep.subr.bf16.mxu0 %v1288
      %1348 = vmatpush1.bf16.msra.mxu0 %v1287
      %1349 = vmatprep.subr.bf16.mxu0 %v1292
      %1350 = vmatpush1.bf16.msra.mxu0 %v1291
      %1351 = vmatprep.subr.bf16.mxu0 %v1296
      %1352 = vmatpush1.bf16.msra.mxu0 %v1295
      %1353 = vmatprep.subr.bf16.mxu0 %v1300
      %1354 = vmatpush1.bf16.msra.mxu0 %v1299
      %1355 = vmatprep.subr.bf16.mxu0 %v1304
      %1356 = vmatpush1.bf16.msra.mxu0 %v1303
      %1357 = vmatprep.subr.bf16.mxu0 %v1308
      %1358 = vmatpush1.bf16.msra.mxu0 %v1307
      %1359 = vmatprep.subr.bf16.mxu0 0
      %1360 = vmatpush1.bf16.msra.mxu0 0
      %1361 = vmatprep.subr.bf16.mxu0 0
      %1362 = vmatpush1.bf16.msra.mxu0 0
      %1363 = vmatprep.subr.bf16.mxu0 0
      %1364 = vmatpush1.bf16.msra.mxu0 0
      %1365 = vmatprep.subr.bf16.mxu0 0
      %1366 = vmatpush1.bf16.msra.mxu0 0
      %1367 = vmatprep.subr.bf16.mxu0 0
      %1368 = vmatpush1.bf16.msra.mxu0 0
      %1369 = vmatprep.subr.bf16.mxu0 0
      %1370 = vmatpush1.bf16.msra.mxu0 0
      %1371 = vmatprep.subr.bf16.mxu0 0
      %1372 = vmatpush1.bf16.msra.mxu0 0
      %1373 = vmatprep.subr.bf16.mxu0 0
      %1374 = vmatpush1.bf16.msra.mxu0 0
      %1375 = vmatprep.mubr.bf16.mxu0 0
      %1376 = vmatmul.mubr.bf16.gmra.mrb[0].mxu0 %v806
      %v1377 = vpop.f32.mrb[0].mxu0
      %v1378 = vadd.f32 0.0, %v1377
      %v1379 = vpop.f32.mrb[0].mxu0
      %v1380 = vadd.f32 0.0, %v1379
      %v1381 = vpop.f32.mrb[0].mxu0
      %v1382 = vpop.f32.mrb[0].mxu0
      %1383 = vdwg.mxu0
      %1384 = vmatprep.subr.bf16.mxu0 %v1282
      %1385 = vmatpush1.bf16.msra.mxu0 %v1281
      %1386 = vmatprep.subr.bf16.mxu0 %v1286
      %1387 = vmatpush1.bf16.msra.mxu0 %v1285
      %1388 = vmatprep.subr.bf16.mxu0 %v1290
      %1389 = vmatpush1.bf16.msra.mxu0 %v1289
      %1390 = vmatprep.subr.bf16.mxu0 %v1294
      %1391 = vmatpush1.bf16.msra.mxu0 %v1293
      %1392 = vmatprep.subr.bf16.mxu0 %v1298
      %1393 = vmatpush1.bf16.msra.mxu0 %v1297
      %1394 = vmatprep.subr.bf16.mxu0 %v1302
      %1395 = vmatpush1.bf16.msra.mxu0 %v1301
      %1396 = vmatprep.subr.bf16.mxu0 %v1306
      %1397 = vmatpush1.bf16.msra.mxu0 %v1305
      %1398 = vmatprep.subr.bf16.mxu0 %v1310
      %1399 = vmatpush1.bf16.msra.mxu0 %v1309
      %1400 = vmatprep.subr.bf16.mxu0 0
      %1401 = vmatpush1.bf16.msra.mxu0 0
      %1402 = vmatprep.subr.bf16.mxu0 0
      %1403 = vmatpush1.bf16.msra.mxu0 0
      %1404 = vmatprep.subr.bf16.mxu0 0
      %1405 = vmatpush1.bf16.msra.mxu0 0
      %1406 = vmatprep.subr.bf16.mxu0 0
      %1407 = vmatpush1.bf16.msra.mxu0 0
      %1408 = vmatprep.subr.bf16.mxu0 0
      %1409 = vmatpush1.bf16.msra.mxu0 0
      %1410 = vmatprep.subr.bf16.mxu0 0
      %1411 = vmatpush1.bf16.msra.mxu0 0
      %1412 = vmatprep.subr.bf16.mxu0 0
      %1413 = vmatpush1.bf16.msra.mxu0 0
      %1414 = vmatprep.subr.bf16.mxu0 0
      %1415 = vmatpush1.bf16.msra.mxu0 0
      %1416 = vmatprep.mubr.bf16.mxu0 0
      %1417 = vmatmul.mubr.bf16.gmra.mrb[0].mxu0 %v806
      %v1418 = vpop.f32.mrb[0].mxu0
      %v1419 = vadd.f32 0.0, %v1418
      %v1420 = vpop.f32.mrb[0].mxu0
      %v1421 = vadd.f32 0.0, %v1420
      %v1422 = vpop.f32.mrb[0].mxu0
      %v1423 = vpop.f32.mrb[0].mxu0
      %1424 = vdwg.mxu0
      %v1425 = vadd.f32 %v1147, %v1378
      %v1426 = vadd.f32 %v1148, %v1380
      %v1427 = vadd.f32 %v1149, %v1419
      %v1428 = vadd.f32 %v1150, %v1421
      %v1429 = vxor.u32 %v1425, 2147483648
      %v1430 = vxor.u32 %v1426, 2147483648
      %v1431 = vxor.u32 %v1427, 2147483648
      %v1432 = vmul.f32 %v1429, 1.442695
      %v1433 = vpow.pop %v1432
      %v1434 = vmul.f32 %v1430, 1.442695
      %v1435 = vpow.pop %v1434
      %v1436 = vmul.f32 %v1431, 1.442695
      %v1437 = vpow.pop %v1436
      %v1438 = vadd.f32 %v1433, 1.0
      %v1439 = vadd.f32 %v1435, 1.0
      %v1440 = vadd.f32 %v1437, 1.0
      %v1441 = vrcp.pop %v1438
      %v1442 = vmul.f32 1.0, %v1441
      %v1443 = vrcp.pop %v1439
      %v1444 = vmul.f32 1.0, %v1443
      %v1445 = vrcp.pop %v1440
      %v1446 = vmul.f32 1.0, %v1445
      %v1447 = vtanh.pop %v1428
      %v1448 = vmul.f32 %v1444, %v805
      %v1449 = vmul.f32 %v1442, %v1447
      %v1450 = vadd.f32 %v1448, %v1449
      %v1451 = vtanh.pop %v1450
      %v1452 = vmul.f32 %v1446, %v1451
      %v1453 = vunpack.c.l.bf16 %v1138
      %v1454 = vmul.f32 %v1452, %v1453
      %v1455 = vmul.f32 %v1450, %v1453
      %v1456 = vpack.c.bf16 %v1454, %v1454
      %s1457 = scalar_lea.vmem %s458, 4
      %1458 = vst [vmem:[%s1457] sm:$0xf] %v1456
      %v1459 = vld [vmem:[%s437] sm:$0xff]
      %v1460 = vld [vmem:[%s437 + $0x8] sm:$0xff]
      %v1461 = vld [vmem:[%s451] sm:$0xf]
      %v1462 = vunpack.c.l.bf16 %v1459
      %v1463 = vunpack.c.h.bf16 %v1459
      %v1464 = vunpack.c.l.bf16 %v1460
      %v1465 = vunpack.c.h.bf16 %v1460
      %v1466 = vld [vmem:[%s8] sm:$0xff]
      %v1467 = vld [vmem:[%s8 + $0x8] sm:$0xff]
      %v1468 = vld [vmem:[%s8 + $0x10] sm:$0xff]
      %v1469 = vld [vmem:[%s8 + $0x18] sm:$0xff]
      %v1470 = vadd.f32 %v1462, %v1466
      %v1471 = vadd.f32 %v1463, %v1467
      %v1472 = vadd.f32 %v1464, %v1468
      %v1473 = vadd.f32 %v1465, %v1469
      %v1474 = vld [vmem:[%s6] sm:$0xff]
      %v1475 = vld [vmem:[%s6 + $0x8] sm:$0xff]
      %v1476 = vld [vmem:[%s6 + $0x10] sm:$0xff]
      %v1477 = vld [vmem:[%s6 + $0x18] sm:$0xff]
      %v1478 = vld [vmem:[%s6 + $0x20] sm:$0xff]
      %v1479 = vld [vmem:[%s6 + $0x28] sm:$0xff]
      %v1480 = vld [vmem:[%s6 + $0x30] sm:$0xff]
      %v1481 = vld [vmem:[%s6 + $0x38] sm:$0xff]
      %v1482 = vld [vmem:[%s6 + $0x40] sm:$0xff]
      %v1483 = vld [vmem:[%s6 + $0x48] sm:$0xff]
      %v1484 = vld [vmem:[%s6 + $0x50] sm:$0xff]
      %v1485 = vld [vmem:[%s6 + $0x58] sm:$0xff]
      %v1486 = vld [vmem:[%s6 + $0x60] sm:$0xff]
      %v1487 = vld [vmem:[%s6 + $0x68] sm:$0xff]
      %v1488 = vld [vmem:[%s6 + $0x70] sm:$0xff]
      %v1489 = vld [vmem:[%s6 + $0x78] sm:$0xff]
      %v1490 = vld [vmem:[%s6 + $0x80] sm:$0xff]
      %v1491 = vld [vmem:[%s6 + $0x88] sm:$0xff]
      %v1492 = vld [vmem:[%s6 + $0x90] sm:$0xff]
      %v1493 = vld [vmem:[%s6 + $0x98] sm:$0xff]
      %v1494 = vld [vmem:[%s6 + $0xa0] sm:$0xff]
      %v1495 = vld [vmem:[%s6 + $0xa8] sm:$0xff]
      %v1496 = vld [vmem:[%s6 + $0xb0] sm:$0xff]
      %v1497 = vld [vmem:[%s6 + $0xb8] sm:$0xff]
      %v1498 = vld [vmem:[%s6 + $0xc0] sm:$0xff]
      %v1499 = vld [vmem:[%s6 + $0xc8] sm:$0xff]
      %v1500 = vld [vmem:[%s6 + $0xd0] sm:$0xff]
      %v1501 = vld [vmem:[%s6 + $0xd8] sm:$0xff]
      %v1502 = vld [vmem:[%s6 + $0xe0] sm:$0xff]
      %v1503 = vld [vmem:[%s6 + $0xe8] sm:$0xff]
      %v1504 = vld [vmem:[%s6 + $0xf0] sm:$0xff]
      %v1505 = vld [vmem:[%s6 + $0xf8] sm:$0xff]
      %v1538 = vunpack.c.l.b16 %v1474
      %v1539 = vunpack.c.h.b16 %v1474
      %v1540 = vunpack.c.l.b16 %v1475
      %v1541 = vunpack.c.h.b16 %v1475
      %v1542 = vunpack.c.l.b16 %v1476
      %v1543 = vunpack.c.h.b16 %v1476
      %v1544 = vunpack.c.l.b16 %v1477
      %v1545 = vunpack.c.h.b16 %v1477
      %v1546 = vunpack.c.l.b16 %v1478
      %v1547 = vunpack.c.h.b16 %v1478
      %v1548 = vunpack.c.l.b16 %v1479
      %v1549 = vunpack.c.h.b16 %v1479
      %v1550 = vunpack.c.l.b16 %v1480
      %v1551 = vunpack.c.h.b16 %v1480
      %v1552 = vunpack.c.l.b16 %v1481
      %v1553 = vunpack.c.h.b16 %v1481
      %v1554 = vunpack.c.l.b16 %v1482
      %v1555 = vunpack.c.h.b16 %v1482
      %v1556 = vunpack.c.l.b16 %v1483
      %v1557 = vunpack.c.h.b16 %v1483
      %v1558 = vunpack.c.l.b16 %v1484
      %v1559 = vunpack.c.h.b16 %v1484
      %v1560 = vunpack.c.l.b16 %v1485
      %v1561 = vunpack.c.h.b16 %v1485
      %v1562 = vunpack.c.l.b16 %v1486
      %v1563 = vunpack.c.h.b16 %v1486
      %v1564 = vunpack.c.l.b16 %v1487
      %v1565 = vunpack.c.h.b16 %v1487
      %v1566 = vunpack.c.l.b16 %v1488
      %v1567 = vunpack.c.h.b16 %v1488
      %v1568 = vunpack.c.l.b16 %v1489
      %v1569 = vunpack.c.h.b16 %v1489
      %v1570 = vunpack.c.l.b16 %v1490
      %v1571 = vunpack.c.h.b16 %v1490
      %v1572 = vunpack.c.l.b16 %v1491
      %v1573 = vunpack.c.h.b16 %v1491
      %v1574 = vunpack.c.l.b16 %v1492
      %v1575 = vunpack.c.h.b16 %v1492
      %v1576 = vunpack.c.l.b16 %v1493
      %v1577 = vunpack.c.h.b16 %v1493
      %v1578 = vunpack.c.l.b16 %v1494
      %v1579 = vunpack.c.h.b16 %v1494
      %v1580 = vunpack.c.l.b16 %v1495
      %v1581 = vunpack.c.h.b16 %v1495
      %v1582 = vunpack.c.l.b16 %v1496
      %v1583 = vunpack.c.h.b16 %v1496
      %v1584 = vunpack.c.l.b16 %v1497
      %v1585 = vunpack.c.h.b16 %v1497
      %v1586 = vunpack.c.l.b16 %v1498
      %v1587 = vunpack.c.h.b16 %v1498
      %v1588 = vunpack.c.l.b16 %v1499
      %v1589 = vunpack.c.h.b16 %v1499
      %v1590 = vunpack.c.l.b16 %v1500
      %v1591 = vunpack.c.h.b16 %v1500
      %v1592 = vunpack.c.l.b16 %v1501
      %v1593 = vunpack.c.h.b16 %v1501
      %v1594 = vunpack.c.l.b16 %v1502
      %v1595 = vunpack.c.h.b16 %v1502
      %v1596 = vunpack.c.l.b16 %v1503
      %v1597 = vunpack.c.h.b16 %v1503
      %v1598 = vunpack.c.l.b16 %v1504
      %v1599 = vunpack.c.h.b16 %v1504
      %v1600 = vunpack.c.l.b16 %v1505
      %v1601 = vunpack.c.h.b16 %v1505
      %v1602 = vpack.c.b16 %v1542, %v1538
      %v1603 = vpack.c.b16 %v1543, %v1539
      %v1604 = vpack.c.b16 %v1544, %v1540
      %v1605 = vpack.c.b16 %v1545, %v1541
      %v1606 = vpack.c.b16 %v1550, %v1546
      %v1607 = vpack.c.b16 %v1551, %v1547
      %v1608 = vpack.c.b16 %v1552, %v1548
      %v1609 = vpack.c.b16 %v1553, %v1549
      %v1610 = vpack.c.b16 %v1558, %v1554
      %v1611 = vpack.c.b16 %v1559, %v1555
      %v1612 = vpack.c.b16 %v1560, %v1556
      %v1613 = vpack.c.b16 %v1561, %v1557
      %v1614 = vpack.c.b16 %v1566, %v1562
      %v1615 = vpack.c.b16 %v1567, %v1563
      %v1616 = vpack.c.b16 %v1568, %v1564
      %v1617 = vpack.c.b16 %v1569, %v1565
      %v1618 = vpack.c.b16 %v1574, %v1570
      %v1619 = vpack.c.b16 %v1575, %v1571
      %v1620 = vpack.c.b16 %v1576, %v1572
      %v1621 = vpack.c.b16 %v1577, %v1573
      %v1622 = vpack.c.b16 %v1582, %v1578
      %v1623 = vpack.c.b16 %v1583, %v1579
      %v1624 = vpack.c.b16 %v1584, %v1580
      %v1625 = vpack.c.b16 %v1585, %v1581
      %v1626 = vpack.c.b16 %v1590, %v1586
      %v1627 = vpack.c.b16 %v1591, %v1587
      %v1628 = vpack.c.b16 %v1592, %v1588
      %v1629 = vpack.c.b16 %v1593, %v1589
      %v1630 = vpack.c.b16 %v1598, %v1594
      %v1631 = vpack.c.b16 %v1599, %v1595
      %v1632 = vpack.c.b16 %v1600, %v1596
      %v1633 = vpack.c.b16 %v1601, %v1597
      %1666 = vmatprep.subr.bf16.mxu0 %v1603
      %1667 = vmatpush1.bf16.msra.mxu0 %v1602
      %1668 = vmatprep.subr.bf16.mxu0 %v1607
      %1669 = vmatpush1.bf16.msra.mxu0 %v1606
      %1670 = vmatprep.subr.bf16.mxu0 %v1611
      %1671 = vmatpush1.bf16.msra.mxu0 %v1610
      %1672 = vmatprep.subr.bf16.mxu0 %v1615
      %1673 = vmatpush1.bf16.msra.mxu0 %v1614
      %1674 = vmatprep.subr.bf16.mxu0 %v1619
      %1675 = vmatpush1.bf16.msra.mxu0 %v1618
      %1676 = vmatprep.subr.bf16.mxu0 %v1623
      %1677 = vmatpush1.bf16.msra.mxu0 %v1622
      %1678 = vmatprep.subr.bf16.mxu0 %v1627
      %1679 = vmatpush1.bf16.msra.mxu0 %v1626
      %1680 = vmatprep.subr.bf16.mxu0 %v1631
      %1681 = vmatpush1.bf16.msra.mxu0 %v1630
      %1682 = vmatprep.subr.bf16.mxu0 0
      %1683 = vmatpush1.bf16.msra.mxu0 0
      %1684 = vmatprep.subr.bf16.mxu0 0
      %1685 = vmatpush1.bf16.msra.mxu0 0
      %1686 = vmatprep.subr.bf16.mxu0 0
      %1687 = vmatpush1.bf16.msra.mxu0 0
      %1688 = vmatprep.subr.bf16.mxu0 0
      %1689 = vmatpush1.bf16.msra.mxu0 0
      %1690 = vmatprep.subr.bf16.mxu0 0
      %1691 = vmatpush1.bf16.msra.mxu0 0
      %1692 = vmatprep.subr.bf16.mxu0 0
      %1693 = vmatpush1.bf16.msra.mxu0 0
      %1694 = vmatprep.subr.bf16.mxu0 0
      %1695 = vmatpush1.bf16.msra.mxu0 0
      %1696 = vmatprep.subr.bf16.mxu0 0
      %1697 = vmatpush1.bf16.msra.mxu0 0
      %1698 = vmatprep.mubr.bf16.mxu0 0
      %1699 = vmatmul.mubr.bf16.gmra.mrb[0].mxu0 %v1131
      %v1700 = vpop.f32.mrb[0].mxu0
      %v1701 = vadd.f32 0.0, %v1700
      %v1702 = vpop.f32.mrb[0].mxu0
      %v1703 = vadd.f32 0.0, %v1702
      %v1704 = vpop.f32.mrb[0].mxu0
      %v1705 = vpop.f32.mrb[0].mxu0
      %1706 = vdwg.mxu0
      %1707 = vmatprep.subr.bf16.mxu0 %v1605
      %1708 = vmatpush1.bf16.msra.mxu0 %v1604
      %1709 = vmatprep.subr.bf16.mxu0 %v1609
      %1710 = vmatpush1.bf16.msra.mxu0 %v1608
      %1711 = vmatprep.subr.bf16.mxu0 %v1613
      %1712 = vmatpush1.bf16.msra.mxu0 %v1612
      %1713 = vmatprep.subr.bf16.mxu0 %v1617
      %1714 = vmatpush1.bf16.msra.mxu0 %v1616
      %1715 = vmatprep.subr.bf16.mxu0 %v1621
      %1716 = vmatpush1.bf16.msra.mxu0 %v1620
      %1717 = vmatprep.subr.bf16.mxu0 %v1625
      %1718 = vmatpush1.bf16.msra.mxu0 %v1624
      %1719 = vmatprep.subr.bf16.mxu0 %v1629
      %1720 = vmatpush1.bf16.msra.mxu0 %v1628
      %1721 = vmatprep.subr.bf16.mxu0 %v1633
      %1722 = vmatpush1.bf16.msra.mxu0 %v1632
      %1723 = vmatprep.subr.bf16.mxu0 0
      %1724 = vmatpush1.bf16.msra.mxu0 0
      %1725 = vmatprep.subr.bf16.mxu0 0
      %1726 = vmatpush1.bf16.msra.mxu0 0
      %1727 = vmatprep.subr.bf16.mxu0 0
      %1728 = vmatpush1.bf16.msra.mxu0 0
      %1729 = vmatprep.subr.bf16.mxu0 0
      %1730 = vmatpush1.bf16.msra.mxu0 0
      %1731 = vmatprep.subr.bf16.mxu0 0
      %1732 = vmatpush1.bf16.msra.mxu0 0
      %1733 = vmatprep.subr.bf16.mxu0 0
      %1734 = vmatpush1.bf16.msra.mxu0 0
      %1735 = vmatprep.subr.bf16.mxu0 0
      %1736 = vmatpush1.bf16.msra.mxu0 0
      %1737 = vmatprep.subr.bf16.mxu0 0
      %1738 = vmatpush1.bf16.msra.mxu0 0
      %1739 = vmatprep.mubr.bf16.mxu0 0
      %1740 = vmatmul.mubr.bf16.gmra.mrb[0].mxu0 %v1131
      %v1741 = vpop.f32.mrb[0].mxu0
      %v1742 = vadd.f32 0.0, %v1741
      %v1743 = vpop.f32.mrb[0].mxu0
      %v1744 = vadd.f32 0.0, %v1743
      %v1745 = vpop.f32.mrb[0].mxu0
      %v1746 = vpop.f32.mrb[0].mxu0
      %1747 = vdwg.mxu0
      %v1748 = vadd.f32 %v1470, %v1701
      %v1749 = vadd.f32 %v1471, %v1703
      %v1750 = vadd.f32 %v1472, %v1742
      %v1751 = vadd.f32 %v1473, %v1744
      %v1752 = vxor.u32 %v1748, 2147483648
      %v1753 = vxor.u32 %v1749, 2147483648
      %v1754 = vxor.u32 %v1750, 2147483648
      %v1755 = vmul.f32 %v1752, 1.442695
      %v1756 = vpow.pop %v1755
      %v1757 = vmul.f32 %v1753, 1.442695
      %v1758 = vpow.pop %v1757
      %v1759 = vmul.f32 %v1754, 1.442695
      %v1760 = vpow.pop %v1759
      %v1761 = vadd.f32 %v1756, 1.0
      %v1762 = vadd.f32 %v1758, 1.0
      %v1763 = vadd.f32 %v1760, 1.0
      %v1764 = vrcp.pop %v1761
      %v1765 = vmul.f32 1.0, %v1764
      %v1766 = vrcp.pop %v1762
      %v1767 = vmul.f32 1.0, %v1766
      %v1768 = vrcp.pop %v1763
      %v1769 = vmul.f32 1.0, %v1768
      %v1770 = vtanh.pop %v1751
      %v1771 = vmul.f32 %v1767, %v1130
      %v1772 = vmul.f32 %v1765, %v1770
      %v1773 = vadd.f32 %v1771, %v1772
      %v1774 = vtanh.pop %v1773
      %v1775 = vmul.f32 %v1769, %v1774
      %v1776 = vunpack.c.l.bf16 %v1461
      %v1777 = vmul.f32 %v1775, %v1776
      %v1778 = vmul.f32 %v1773, %v1776
      %v1779 = vpack.c.bf16 %v1777, %v1777
      %1780 = vst [vmem:[%s465] sm:$0xf] %v1779
      %1781 = vst [vmem:[#allocation2] sm:$0xff] %v1454
      %1782 = vst [vmem:[#allocation3] sm:$0xff] %v1455
      %1783 = vst [vmem:[%s481] sm:$0xff] %v1777
      %1784 = vst [vmem:[%s483] sm:$0xff] %v1778
      %s1785 = smul.u32 2, %s22
      %p1786 = scmp.lt.s32.totalorder %s1785, 7
      %s1787 = scalar_select %p1786, %s1785, 7
      %s1788 = smul.addr %s1787, 4
      %s1789 = scalar_lea.vmem %s9, %s1788
      %s1790 = ssub.s32 3, %s22
      %s1791 = smul.u32 2, %s1790
      %p1792 = scmp.lt.s32.totalorder %s1791, 7
      %s1793 = scalar_select %p1792, %s1791, 7
      %s1794 = smul.addr %s1793, 4
      %s1795 = scalar_lea.vmem %s10, %s1794
      // Predicated region
      $region61: #{my_lstm_forward.2} parent=55 // pred_check
        %p1796 = pneg %p253
      $region62: #{my_lstm_forward.2} parent=55 // pred_check_branch
        %1798 = sbr.rel (%p1796) target = $region64
      $region63: #{my_lstm_forward.2} parent=55 // pred_region
        %s1799 = smul.u32 2, %s22
      $region64: #{my_lstm_forward.2} parent=55 // pred_fallthru
        _
      // Predicated region
      $region65: #{my_lstm_forward.2} parent=55 // pred_check
        %p1800 = pneg %p281
      $region66: #{my_lstm_forward.2} parent=55 // pred_check_branch
        %1802 = sbr.rel (%p1800) target = $region68
      $region67: #{my_lstm_forward.2} parent=55 // pred_region
        %s1803 = ssub.s32 3, %s22
        %s1804 = smul.u32 2, %s1803
      $region68: #{my_lstm_forward.2} parent=55 // pred_fallthru
        _
    $region56: #{my_lstm_forward.2} parent=5 // pred_fallthru
      _
    %p1805 = scmp.le.s32.totalorder 2, %s17
    // Predicated region
    $region69: #{my_lstm_forward.2} parent=5 // pred_check
      %p1806 = pneg %p1805
    $region70: #{my_lstm_forward.2} parent=5 // pred_check_branch
      %1808 = sbr.rel (%p1806) target = $region72
    $region71: #{my_lstm_forward.2} parent=5 // pred_region
      %s1809 = ssub.s32 %s17, 2
      // Predicated region
      $region73: #{my_lstm_forward.2} parent=71 // pred_check
        %p1810 = pneg %p259
      $region74: #{my_lstm_forward.2} parent=71 // pred_check_branch
        %1812 = sbr.rel (%p1810) target = $region76
      $region75: #{my_lstm_forward.2} parent=71 // pred_region
        %s1813 = smul.u32 2, %s23
        %p1814 = scmp.lt.s32.totalorder %s1813, 7
        %s1815 = scalar_select %p1814, %s1813, 7
        %s1816 = smul.addr %s1815, 4
        %s1817 = scalar_lea.vmem %s9, %s1816
      $region76: #{my_lstm_forward.2} parent=71 // pred_fallthru
        _
      // Predicated region
      $region77: #{my_lstm_forward.2} parent=71 // pred_check
        %p1818 = pneg %p287
      $region78: #{my_lstm_forward.2} parent=71 // pred_check_branch
        %1820 = sbr.rel (%p1818) target = $region80
      $region79: #{my_lstm_forward.2} parent=71 // pred_region
        %s1821 = ssub.s32 3, %s23
        %s1822 = smul.u32 2, %s1821
        %p1823 = scmp.lt.s32.totalorder %s1822, 7
        %s1824 = scalar_select %p1823, %s1822, 7
        %s1825 = smul.addr %s1824, 4
        %s1826 = scalar_lea.vmem %s10, %s1825
      $region80: #{my_lstm_forward.2} parent=71 // pred_fallthru
        _
    $region72: #{my_lstm_forward.2} parent=5 // pred_fallthru
      _
  $region6: #{my_lstm_forward.2} parent=0 // loop_footer
    %s21 = sadd.s32 1, %s17
  $region7: #{my_lstm_forward.2} parent=0 // loop_footer_branch
    %16 = sbr.rel target = $region3
  $region8: #{my_lstm_forward.2} parent=0 // loop_exit
    _

</llo_original>
